<compile_context>
chip_gen: v6e
topology: v6e:2x2x1
jax: 0.10.0
libtpu: 0.0.40
codegen_flags: <defaults>
</compile_context>

<pallas_src>
import functools

import jax
import jax.numpy as jnp
from jax import lax
from jax.experimental import pallas as pl
from jax.experimental.pallas import tpu as pltpu

HIDDEN = 50          # hidden_sz in the PyTorch module
EMB = 10             # emb_dim
NUM_CLASSES = 2
VOCAB = 100          # synthetic vocab (real module uses DistilBERT vocab)
PAD_IDX = 0

H_PAD = 128          # lane-aligned hidden size
G_PAD = 3 * H_PAD    # padded gate axis: r | z | n, one full vreg each
VOCAB_PAD = 128      # lane-aligned vocab for the in-kernel one-hot gather
OUT_PAD = 128        # lane-dense output slab (real logits live in cols 0:2)
SUBLANE = 8


# ---------------------------------------------------------------------------
# Pallas kernel: fused embedding gather + input projections (prologue) and the
# bidirectional GRU recurrence + linear head, all in VMEM / vregs.
# ---------------------------------------------------------------------------
def bigru_head_kernel(ids_ref,                 # (T*B, 1) int32 token ids (batch-padded)
                      tab_f_ref, tab_b_ref,    # (VOCAB_PAD, 3*H_PAD) emb@Wih + biases
                      whh_ref,                 # (2*H_PAD, 6*H_PAD) block-diag Whh_f/Whh_b
                      bhn_f_ref, bhn_b_ref,    # (B, H_PAD) hidden bias of the n-gate
                      lw_ref, lb_ref,          # (2*H_PAD, OUT_PAD), (B, OUT_PAD)
                      out_ref,                 # (B, OUT_PAD)
                      gi_f_ref, gi_b_ref,      # scratch (T*B, 3*H_PAD) each
                      *, seq_len, batch):
    # ---- prologue: embedding lookup + input projection as one-hot MXU matmuls ----
    ids = ids_ref[...]                                                   # (T*B, 1)
    iota = lax.broadcasted_iota(jnp.int32, (seq_len * batch, VOCAB_PAD), 1)
    onehot = (iota == ids).astype(jnp.float32)                           # (T*B, 128)
    gi_f_ref[...] = jnp.dot(onehot, tab_f_ref[...],
                            preferred_element_type=jnp.float32)
    gi_b_ref[...] = jnp.dot(onehot, tab_b_ref[...],
                            preferred_element_type=jnp.float32)

    bhn_f = bhn_f_ref[...]                                               # (B, H_PAD)
    bhn_b = bhn_b_ref[...]

    # hidden state carried in vregs, lane-packed [h_fwd | h_bwd]
    h = jnp.zeros((batch, 2 * H_PAD), jnp.float32)

    for t in range(seq_len):     # fully unrolled: seq_len is a trace-time constant
        gi_f = gi_f_ref[t * batch:(t + 1) * batch, :]                    # (B, 3*H_PAD)
        gi_b = gi_b_ref[(seq_len - 1 - t) * batch:(seq_len - t) * batch, :]

        # single MXU op covering both directions' recurrent projections
        gh = jnp.dot(h, whh_ref[...], preferred_element_type=jnp.float32)  # (B, 6*H_PAD)

        # ---- forward direction (gates live in exact 128-lane vregs) ----
        rz_f = jax.nn.sigmoid(gi_f[:, :2 * H_PAD] + gh[:, :2 * H_PAD])
        n_f = jnp.tanh(gi_f[:, 2 * H_PAD:]
                       + rz_f[:, :H_PAD] * (gh[:, 2 * H_PAD:3 * H_PAD] + bhn_f))
        z_f = rz_f[:, H_PAD:]
        h_f = (1.0 - z_f) * n_f + z_f * h[:, :H_PAD]

        # ---- backward direction ----
        rz_b = jax.nn.sigmoid(gi_b[:, :2 * H_PAD] + gh[:, 3 * H_PAD:5 * H_PAD])
        n_b = jnp.tanh(gi_b[:, 2 * H_PAD:]
                       + rz_b[:, :H_PAD] * (gh[:, 5 * H_PAD:] + bhn_b))
        z_b = rz_b[:, H_PAD:]
        h_b = (1.0 - z_b) * n_b + z_b * h[:, H_PAD:]

        # vreg-aligned lane concat (128-lane blocks) -> pure register placement
        h = jnp.concatenate([h_f, h_b], axis=1)

    # head: out = cat([h_bwd, h_fwd]) @ lw + lb, done without a lane shuffle
    out_ref[...] = (jnp.dot(h, lw_ref[...], preferred_element_type=jnp.float32)
                    + lb_ref[...])


# ---------------------------------------------------------------------------
# Parameter preparation: padding / packing / bias folding (weight-only, cheap).
# ---------------------------------------------------------------------------
def _pad_gate_cols(w, h=HIDDEN, h_pad=H_PAD):
    """(..., 3h) -> (..., 3*h_pad); gate g goes to cols [g*h_pad : g*h_pad + h]."""
    out = jnp.zeros(w.shape[:-1] + (3 * h_pad,), w.dtype)
    for g in range(3):
        out = out.at[..., g * h_pad:g * h_pad + h].set(w[..., g * h:(g + 1) * h])
    return out


def _prep_kernel_params(params):
    H, HP = HIDDEN, H_PAD

    # max_norm=1 renorm applied once per table row (value-identical to per-lookup renorm).
    emb = params["emb"]
    norms = jnp.sqrt(jnp.sum(emb * emb, axis=-1, keepdims=True))
    scale = jnp.where(norms > 1.0, 1.0 / (norms + 1e-7), 1.0)
    emb_rn = emb * scale
    emb_pad = jnp.zeros((VOCAB_PAD, EMB), jnp.float32).at[:VOCAB].set(emb_rn)

    def make_table(wih, bih, bhh):
        wih_p = _pad_gate_cols(wih)
        bih_p = _pad_gate_cols(bih)
        bhh_p = _pad_gate_cols(bhh)
        bhh_rz = bhh_p.at[:, 2 * HP:].set(0.0)     # n-gate hidden bias handled in-loop
        return emb_pad @ wih_p + bih_p + bhh_rz    # (VOCAB_PAD, 3*HP)

    def pad_whh(whh):
        w = _pad_gate_cols(whh)                    # (H, 3*HP)
        return jnp.zeros((HP, 3 * HP), jnp.float32).at[:H].set(w)

    tab_f = make_table(params["wih_f"], params["bih_f"], params["bhh_f"])
    tab_b = make_table(params["wih_b"], params["bih_b"], params["bhh_b"])

    whh_pack = jnp.zeros((2 * HP, 6 * HP), jnp.float32)
    whh_pack = whh_pack.at[:HP, :3 * HP].set(pad_whh(params["whh_f"]))
    whh_pack = whh_pack.at[HP:, 3 * HP:].set(pad_whh(params["whh_b"]))

    bhn_f = _pad_gate_cols(params["bhh_f"])[:, 2 * HP:]   # (1, HP)
    bhn_b = _pad_gate_cols(params["bhh_b"])[:, 2 * HP:]

    # head: PyTorch uses cat([h_bwd, h_fwd]) @ lw + lb; our carried h is [h_fwd | h_bwd].
    lw, lb = params["lw"], params["lb"]
    lw_pack = jnp.zeros((2 * HP, OUT_PAD), jnp.float32)
    lw_pack = lw_pack.at[:H, :NUM_CLASSES].set(lw[H:2 * H])     # forward part
    lw_pack = lw_pack.at[HP:HP + H, :NUM_CLASSES].set(lw[:H])   # backward part
    lb_pad = jnp.zeros((1, OUT_PAD), jnp.float32).at[:, :NUM_CLASSES].set(lb)

    return tab_f, tab_b, whh_pack, bhn_f, bhn_b, lw_pack, lb_pad


# ---------------------------------------------------------------------------
# Forward wrapper.
# ---------------------------------------------------------------------------
@jax.jit
def baseline_rnn_forward(ids, params):
    """ids: (seq_len, batch) int32 -> (batch, 2) float32 logits."""
    T, B = ids.shape
    b_pad = max(SUBLANE, ((B + SUBLANE - 1) // SUBLANE) * SUBLANE)

    tab_f, tab_b, whh_pack, bhn_f, bhn_b, lw_pack, lb_pad = _prep_kernel_params(params)

    ids_p = jnp.full((T, b_pad), PAD_IDX, jnp.int32).at[:, :B].set(ids)
    ids2d = ids_p.reshape(T * b_pad, 1)

    bhn_f = jnp.broadcast_to(bhn_f, (b_pad, H_PAD))
    bhn_b = jnp.broadcast_to(bhn_b, (b_pad, H_PAD))
    lb_b = jnp.broadcast_to(lb_pad, (b_pad, OUT_PAD))

    inputs = (ids2d, tab_f, tab_b, whh_pack, bhn_f, bhn_b, lw_pack, lb_b)
    kernel = functools.partial(bigru_head_kernel, seq_len=T, batch=b_pad)

    out = pl.pallas_call(
        kernel,
        out_shape=jax.ShapeDtypeStruct((b_pad, OUT_PAD), jnp.float32),
        in_specs=[pl.BlockSpec(memory_space=pltpu.MemorySpace.VMEM)] * len(inputs),
        out_specs=pl.BlockSpec(memory_space=pltpu.MemorySpace.VMEM),
        scratch_shapes=[
            pltpu.VMEM((T * b_pad, G_PAD), jnp.float32),   # hoisted GI, forward
            pltpu.VMEM((T * b_pad, G_PAD), jnp.float32),   # hoisted GI, backward
        ],
    )(*inputs)
    return out[:B, :NUM_CLASSES]


# ---------------------------------------------------------------------------
# Pure-JAX reference (unpadded, lax.scan) for the correctness check.
# ---------------------------------------------------------------------------
def _gru_step(x_t, h, wih, whh, bih, bhh, H):
    gi = jnp.dot(x_t, wih, preferred_element_type=jnp.float32) + bih
    gh = jnp.dot(h, whh, preferred_element_type=jnp.float32) + bhh
    r = jax.nn.sigmoid(gi[:, 0:H] + gh[:, 0:H])
    z = jax.nn.sigmoid(gi[:, H:2 * H] + gh[:, H:2 * H])
    n = jnp.tanh(gi[:, 2 * H:3 * H] + r * gh[:, 2 * H:3 * H])
    return (1.0 - z) * n + z * h


def _embed(ids, emb_w):
    e = jnp.take(emb_w, ids, axis=0)                        # (T, B, E)
    norms = jnp.sqrt(jnp.sum(e * e, axis=-1, keepdims=True))
    scale = jnp.where(norms > 1.0, 1.0 / (norms + 1e-7), 1.0)
    return (e * scale).astype(jnp.float32)


def reference_forward(ids, params):
    x_emb = _embed(ids, params["emb"])
    B = x_emb.shape[1]

    def run_dir(seq, wih, whh, bih, bhh):
        def scan_fn(h, x_t):
            return _gru_step(x_t, h, wih, whh, bih, bhh, HIDDEN), None
        h_final, _ = lax.scan(scan_fn, jnp.zeros((B, HIDDEN), jnp.float32), seq)
        return h_final

    hf = run_dir(x_emb, params["wih_f"], params["whh_f"],
                 params["bih_f"], params["bhh_f"])
    hb = run_dir(x_emb[::-1], params["wih_b"], params["whh_b"],
                 params["bih_b"], params["bhh_b"])
    h_cat = jnp.concatenate([hb, hf], axis=1)               # hidden[-1] | hidden[-2]
    return h_cat @ params["lw"] + params["lb"]


# ---------------------------------------------------------------------------
# Deterministic parameter init (shapes per nn.Embedding / nn.GRU / nn.Linear).
# ---------------------------------------------------------------------------
def init_params(key):
    ks = jax.random.split(key, 12)
    k_gru = 1.0 / jnp.sqrt(HIDDEN)
    k_lin = 1.0 / jnp.sqrt(2 * HIDDEN)

    emb = jax.random.normal(ks[0], (VOCAB, EMB), jnp.float32)
    emb = emb.at[PAD_IDX].set(0.0)                          # padding_idx row = 0

    def u(k, shape, scale):
        return jax.random.uniform(k, shape, jnp.float32, -scale, scale)

    return {
        "emb": emb,
        # forward direction (stored pre-transposed: (in, 3H) / (H, 3H))
        "wih_f": u(ks[1], (EMB, 3 * HIDDEN), k_gru),
        "whh_f": u(ks[2], (HIDDEN, 3 * HIDDEN), k_gru),
        "bih_f": u(ks[3], (1, 3 * HIDDEN), k_gru),
        "bhh_f": u(ks[4], (1, 3 * HIDDEN), k_gru),
        # backward direction
        "wih_b": u(ks[5], (EMB, 3 * HIDDEN), k_gru),
        "whh_b": u(ks[6], (HIDDEN, 3 * HIDDEN), k_gru),
        "bih_b": u(ks[7], (1, 3 * HIDDEN), k_gru),
        "bhh_b": u(ks[8], (1, 3 * HIDDEN), k_gru),
        # linear head: (2H, 2) + (1, 2)
        "lw": u(ks[9], (2 * HIDDEN, NUM_CLASSES), k_lin),
        "lb": u(ks[10], (1, NUM_CLASSES), k_lin),
    }


if __name__ == "__main__":
    T, B = 8, 4
    key = jax.random.PRNGKey(0)
    k_ids, k_params = jax.random.split(key)

    params = init_params(k_params)
    ids = jax.random.randint(k_ids, (T, B), 0, VOCAB, dtype=jnp.int32)
    ids = ids.at[-2:, 1].set(PAD_IDX)    # a couple of padded positions

    out = jax.block_until_ready(baseline_rnn_forward(ids, params))
    ref = jax.block_until_ready(reference_forward(ids, params))

    assert out.shape == (B, NUM_CLASSES), out.shape
    assert jnp.allclose(out, ref, atol=1e-4, rtol=1e-4), (out, ref)

    print("KERNEL_OK")
</pallas_src>

<mosaic_0001>
module attributes {stable_mosaic.version = 11 : i64} {
  func.func @bigru_head_kernel(%arg0: memref<64x1xi32, #tpu.memory_space<vmem>>, %arg1: memref<128x384xf32, #tpu.memory_space<vmem>>, %arg2: memref<128x384xf32, #tpu.memory_space<vmem>>, %arg3: memref<256x768xf32, #tpu.memory_space<vmem>>, %arg4: memref<8x128xf32, #tpu.memory_space<vmem>>, %arg5: memref<8x128xf32, #tpu.memory_space<vmem>>, %arg6: memref<256x128xf32, #tpu.memory_space<vmem>>, %arg7: memref<8x128xf32, #tpu.memory_space<vmem>>, %arg8: memref<8x128xf32, #tpu.memory_space<vmem>>, %arg9: memref<64x384xf32, #tpu.memory_space<vmem>>, %arg10: memref<64x384xf32, #tpu.memory_space<vmem>>) attributes {dimension_semantics = [], scalar_prefetch = 0 : i64, scratch_operands = 2 : i64, tpu.core_type = #tpu.core_type<tc>} {
    %c0 = arith.constant 0 : index
    %c0_0 = arith.constant 0 : index
    %0 = vector.load %arg0[%c0, %c0_0] : memref<64x1xi32, #tpu.memory_space<vmem>>, vector<64x1xi32>
    %1 = tpu.iota {dimensions = array<i32: 1>} : vector<64x128xi32>
    %2 = vector.broadcast %0 : vector<64x1xi32> to vector<64x128xi32>
    %3 = arith.cmpi eq, %1, %2 : vector<64x128xi32>
    %4 = arith.extui %3 : vector<64x128xi1> to vector<64x128xi32>
    %5 = arith.sitofp %4 : vector<64x128xi32> to vector<64x128xf32>
    %c0_1 = arith.constant 0 : index
    %c0_2 = arith.constant 0 : index
    %6 = vector.load %arg1[%c0_1, %c0_2] : memref<128x384xf32, #tpu.memory_space<vmem>>, vector<128x384xf32>
    %cst = arith.constant dense<0.000000e+00> : vector<64x384xf32>
    %7 = tpu.matmul %5, %6, %cst {dimension_numbers = #tpu.dot_dimension_numbers<[1], [0], [0], [1], [0, 0, 1, 1], [], []>} : vector<64x128xf32>, vector<128x384xf32>, vector<64x384xf32> -> vector<64x384xf32>
    %c0_3 = arith.constant 0 : index
    %c0_4 = arith.constant 0 : index
    %8 = vector.load %arg9[%c0_3, %c0_4] : memref<64x384xf32, #tpu.memory_space<vmem>>, vector<64x384xf32>
    tpu.vector_store %arg9[%c0_3, %c0_4], %7 {strides = array<i32>} : memref<64x384xf32, #tpu.memory_space<vmem>>, vector<64x384xf32>,
    %c0_5 = arith.constant 0 : index
    %c0_6 = arith.constant 0 : index
    %9 = vector.load %arg2[%c0_5, %c0_6] : memref<128x384xf32, #tpu.memory_space<vmem>>, vector<128x384xf32>
    %cst_7 = arith.constant dense<0.000000e+00> : vector<64x384xf32>
    %10 = tpu.matmul %5, %9, %cst_7 {dimension_numbers = #tpu.dot_dimension_numbers<[1], [0], [0], [1], [0, 0, 1, 1], [], []>} : vector<64x128xf32>, vector<128x384xf32>, vector<64x384xf32> -> vector<64x384xf32>
    %c0_8 = arith.constant 0 : index
    %c0_9 = arith.constant 0 : index
    %11 = vector.load %arg10[%c0_8, %c0_9] : memref<64x384xf32, #tpu.memory_space<vmem>>, vector<64x384xf32>
    tpu.vector_store %arg10[%c0_8, %c0_9], %10 {strides = array<i32>} : memref<64x384xf32, #tpu.memory_space<vmem>>, vector<64x384xf32>,
    %c0_10 = arith.constant 0 : index
    %c0_11 = arith.constant 0 : index
    %12 = vector.load %arg4[%c0_10, %c0_11] : memref<8x128xf32, #tpu.memory_space<vmem>>, vector<8x128xf32>
    %c0_12 = arith.constant 0 : index
    %c0_13 = arith.constant 0 : index
    %13 = vector.load %arg5[%c0_12, %c0_13] : memref<8x128xf32, #tpu.memory_space<vmem>>, vector<8x128xf32>
    %cst_14 = arith.constant 0.000000e+00 : f32
    %14 = vector.broadcast %cst_14 : f32 to vector<8x256xf32>
    %c0_15 = arith.constant 0 : index
    %c0_16 = arith.constant 0 : index
    %15 = vector.load %arg9[%c0_15, %c0_16] : memref<64x384xf32, #tpu.memory_space<vmem>>, vector<8x384xf32>
    %c56 = arith.constant 56 : index
    %c0_17 = arith.constant 0 : index
    %16 = vector.load %arg10[%c56, %c0_17] : memref<64x384xf32, #tpu.memory_space<vmem>>, vector<8x384xf32>
    %c0_18 = arith.constant 0 : index
    %c0_19 = arith.constant 0 : index
    %17 = vector.load %arg3[%c0_18, %c0_19] : memref<256x768xf32, #tpu.memory_space<vmem>>, vector<256x768xf32>
    %cst_20 = arith.constant dense<0.000000e+00> : vector<8x768xf32>
    %18 = tpu.matmul %14, %17, %cst_20 {dimension_numbers = #tpu.dot_dimension_numbers<[1], [0], [0], [1], [0, 0, 1, 1], [], []>} : vector<8x256xf32>, vector<256x768xf32>, vector<8x768xf32> -> vector<8x768xf32>
    %19 = vector.extract_strided_slice %15 {offsets = [0, 0], sizes = [8, 256], strides = [1, 1]} : vector<8x384xf32> to vector<8x256xf32>
    %20 = vector.extract_strided_slice %18 {offsets = [0, 0], sizes = [8, 256], strides = [1, 1]} : vector<8x768xf32> to vector<8x256xf32>
    %21 = arith.addf %19, %20 : vector<8x256xf32>
    %22 = arith.negf %21 : vector<8x256xf32>
    %23 = math.exp %22 : vector<8x256xf32>
    %cst_21 = arith.constant 1.000000e+00 : f32
    %24 = vector.broadcast %cst_21 : f32 to vector<8x256xf32>
    %25 = arith.addf %24, %23 : vector<8x256xf32>
    %26 = arith.divf %24, %25 : vector<8x256xf32>
    %27 = vector.extract_strided_slice %15 {offsets = [0, 256], sizes = [8, 128], strides = [1, 1]} : vector<8x384xf32> to vector<8x128xf32>
    %28 = vector.extract_strided_slice %26 {offsets = [0, 0], sizes = [8, 128], strides = [1, 1]} : vector<8x256xf32> to vector<8x128xf32>
    %29 = vector.extract_strided_slice %18 {offsets = [0, 256], sizes = [8, 128], strides = [1, 1]} : vector<8x768xf32> to vector<8x128xf32>
    %30 = arith.addf %29, %12 : vector<8x128xf32>
    %31 = arith.mulf %28, %30 : vector<8x128xf32>
    %32 = arith.addf %27, %31 : vector<8x128xf32>
    %33 = math.tanh %32 : vector<8x128xf32>
    %34 = vector.extract_strided_slice %26 {offsets = [0, 128], sizes = [8, 128], strides = [1, 1]} : vector<8x256xf32> to vector<8x128xf32>
    %cst_22 = arith.constant 1.000000e+00 : f32
    %35 = vector.broadcast %cst_22 : f32 to vector<8x128xf32>
    %36 = arith.subf %35, %34 : vector<8x128xf32>
    %37 = arith.mulf %36, %33 : vector<8x128xf32>
    %38 = vector.extract_strided_slice %14 {offsets = [0, 0], sizes = [8, 128], strides = [1, 1]} : vector<8x256xf32> to vector<8x128xf32>
    %39 = arith.mulf %34, %38 : vector<8x128xf32>
    %40 = arith.addf %37, %39 : vector<8x128xf32>
    %41 = vector.extract_strided_slice %16 {offsets = [0, 0], sizes = [8, 256], strides = [1, 1]} : vector<8x384xf32> to vector<8x256xf32>
    %42 = vector.extract_strided_slice %18 {offsets = [0, 384], sizes = [8, 256], strides = [1, 1]} : vector<8x768xf32> to vector<8x256xf32>
    %43 = arith.addf %41, %42 : vector<8x256xf32>
    %44 = arith.negf %43 : vector<8x256xf32>
    %45 = math.exp %44 : vector<8x256xf32>
    %cst_23 = arith.constant 1.000000e+00 : f32
    %46 = vector.broadcast %cst_23 : f32 to vector<8x256xf32>
    %47 = arith.addf %46, %45 : vector<8x256xf32>
    %48 = arith.divf %46, %47 : vector<8x256xf32>
    %49 = vector.extract_strided_slice %16 {offsets = [0, 256], sizes = [8, 128], strides = [1, 1]} : vector<8x384xf32> to vector<8x128xf32>
    %50 = vector.extract_strided_slice %48 {offsets = [0, 0], sizes = [8, 128], strides = [1, 1]} : vector<8x256xf32> to vector<8x128xf32>
    %51 = vector.extract_strided_slice %18 {offsets = [0, 640], sizes = [8, 128], strides = [1, 1]} : vector<8x768xf32> to vector<8x128xf32>
    %52 = arith.addf %51, %13 : vector<8x128xf32>
    %53 = arith.mulf %50, %52 : vector<8x128xf32>
    %54 = arith.addf %49, %53 : vector<8x128xf32>
    %55 = math.tanh %54 : vector<8x128xf32>
    %56 = vector.extract_strided_slice %48 {offsets = [0, 128], sizes = [8, 128], strides = [1, 1]} : vector<8x256xf32> to vector<8x128xf32>
    %cst_24 = arith.constant 1.000000e+00 : f32
    %57 = vector.broadcast %cst_24 : f32 to vector<8x128xf32>
    %58 = arith.subf %57, %56 : vector<8x128xf32>
    %59 = arith.mulf %58, %55 : vector<8x128xf32>
    %60 = vector.extract_strided_slice %14 {offsets = [0, 128], sizes = [8, 128], strides = [1, 1]} : vector<8x256xf32> to vector<8x128xf32>
    %61 = arith.mulf %56, %60 : vector<8x128xf32>
    %62 = arith.addf %59, %61 : vector<8x128xf32>
    %63 = tpu.concatenate %40, %62 in 1 : vector<8x128xf32>, vector<8x128xf32> -> vector<8x256xf32>
    %c8 = arith.constant 8 : index
    %c0_25 = arith.constant 0 : index
    %64 = vector.load %arg9[%c8, %c0_25] : memref<64x384xf32, #tpu.memory_space<vmem>>, vector<8x384xf32>
    %c48 = arith.constant 48 : index
    %c0_26 = arith.constant 0 : index
    %65 = vector.load %arg10[%c48, %c0_26] : memref<64x384xf32, #tpu.memory_space<vmem>>, vector<8x384xf32>
    %c0_27 = arith.constant 0 : index
    %c0_28 = arith.constant 0 : index
    %66 = vector.load %arg3[%c0_27, %c0_28] : memref<256x768xf32, #tpu.memory_space<vmem>>, vector<256x768xf32>
    %cst_29 = arith.constant dense<0.000000e+00> : vector<8x768xf32>
    %67 = tpu.matmul %63, %66, %cst_29 {dimension_numbers = #tpu.dot_dimension_numbers<[1], [0], [0], [1], [0, 0, 1, 1], [], []>} : vector<8x256xf32>, vector<256x768xf32>, vector<8x768xf32> -> vector<8x768xf32>
    %68 = vector.extract_strided_slice %64 {offsets = [0, 0], sizes = [8, 256], strides = [1, 1]} : vector<8x384xf32> to vector<8x256xf32>
    %69 = vector.extract_strided_slice %67 {offsets = [0, 0], sizes = [8, 256], strides = [1, 1]} : vector<8x768xf32> to vector<8x256xf32>
    %70 = arith.addf %68, %69 : vector<8x256xf32>
    %71 = arith.negf %70 : vector<8x256xf32>
    %72 = math.exp %71 : vector<8x256xf32>
    %cst_30 = arith.constant 1.000000e+00 : f32
    %73 = vector.broadcast %cst_30 : f32 to vector<8x256xf32>
    %74 = arith.addf %73, %72 : vector<8x256xf32>
    %75 = arith.divf %73, %74 : vector<8x256xf32>
    %76 = vector.extract_strided_slice %64 {offsets = [0, 256], sizes = [8, 128], strides = [1, 1]} : vector<8x384xf32> to vector<8x128xf32>
    %77 = vector.extract_strided_slice %75 {offsets = [0, 0], sizes = [8, 128], strides = [1, 1]} : vector<8x256xf32> to vector<8x128xf32>
    %78 = vector.extract_strided_slice %67 {offsets = [0, 256], sizes = [8, 128], strides = [1, 1]} : vector<8x768xf32> to vector<8x128xf32>
    %79 = arith.addf %78, %12 : vector<8x128xf32>
    %80 = arith.mulf %77, %79 : vector<8x128xf32>
    %81 = arith.addf %76, %80 : vector<8x128xf32>
    %82 = math.tanh %81 : vector<8x128xf32>
    %83 = vector.extract_strided_slice %75 {offsets = [0, 128], sizes = [8, 128], strides = [1, 1]} : vector<8x256xf32> to vector<8x128xf32>
    %cst_31 = arith.constant 1.000000e+00 : f32
    %84 = vector.broadcast %cst_31 : f32 to vector<8x128xf32>
    %85 = arith.subf %84, %83 : vector<8x128xf32>
    %86 = arith.mulf %85, %82 : vector<8x128xf32>
    %87 = vector.extract_strided_slice %63 {offsets = [0, 0], sizes = [8, 128], strides = [1, 1]} : vector<8x256xf32> to vector<8x128xf32>
    %88 = arith.mulf %83, %87 : vector<8x128xf32>
    %89 = arith.addf %86, %88 : vector<8x128xf32>
    %90 = vector.extract_strided_slice %65 {offsets = [0, 0], sizes = [8, 256], strides = [1, 1]} : vector<8x384xf32> to vector<8x256xf32>
    %91 = vector.extract_strided_slice %67 {offsets = [0, 384], sizes = [8, 256], strides = [1, 1]} : vector<8x768xf32> to vector<8x256xf32>
    %92 = arith.addf %90, %91 : vector<8x256xf32>
    %93 = arith.negf %92 : vector<8x256xf32>
    %94 = math.exp %93 : vector<8x256xf32>
    %cst_32 = arith.constant 1.000000e+00 : f32
    %95 = vector.broadcast %cst_32 : f32 to vector<8x256xf32>
    %96 = arith.addf %95, %94 : vector<8x256xf32>
    %97 = arith.divf %95, %96 : vector<8x256xf32>
    %98 = vector.extract_strided_slice %65 {offsets = [0, 256], sizes = [8, 128], strides = [1, 1]} : vector<8x384xf32> to vector<8x128xf32>
    %99 = vector.extract_strided_slice %97 {offsets = [0, 0], sizes = [8, 128], strides = [1, 1]} : vector<8x256xf32> to vector<8x128xf32>
    %100 = vector.extract_strided_slice %67 {offsets = [0, 640], sizes = [8, 128], strides = [1, 1]} : vector<8x768xf32> to vector<8x128xf32>
    %101 = arith.addf %100, %13 : vector<8x128xf32>
    %102 = arith.mulf %99, %101 : vector<8x128xf32>
    %103 = arith.addf %98, %102 : vector<8x128xf32>
    %104 = math.tanh %103 : vector<8x128xf32>
    %105 = vector.extract_strided_slice %97 {offsets = [0, 128], sizes = [8, 128], strides = [1, 1]} : vector<8x256xf32> to vector<8x128xf32>
    %cst_33 = arith.constant 1.000000e+00 : f32
    %106 = vector.broadcast %cst_33 : f32 to vector<8x128xf32>
    %107 = arith.subf %106, %105 : vector<8x128xf32>
    %108 = arith.mulf %107, %104 : vector<8x128xf32>
    %109 = vector.extract_strided_slice %63 {offsets = [0, 128], sizes = [8, 128], strides = [1, 1]} : vector<8x256xf32> to vector<8x128xf32>
    %110 = arith.mulf %105, %109 : vector<8x128xf32>
    %111 = arith.addf %108, %110 : vector<8x128xf32>
    %112 = tpu.concatenate %89, %111 in 1 : vector<8x128xf32>, vector<8x128xf32> -> vector<8x256xf32>
    %c16 = arith.constant 16 : index
    %c0_34 = arith.constant 0 : index
    %113 = vector.load %arg9[%c16, %c0_34] : memref<64x384xf32, #tpu.memory_space<vmem>>, vector<8x384xf32>
    %c40 = arith.constant 40 : index
    %c0_35 = arith.constant 0 : index
    %114 = vector.load %arg10[%c40, %c0_35] : memref<64x384xf32, #tpu.memory_space<vmem>>, vector<8x384xf32>
    %c0_36 = arith.constant 0 : index
    %c0_37 = arith.constant 0 : index
    %115 = vector.load %arg3[%c0_36, %c0_37] : memref<256x768xf32, #tpu.memory_space<vmem>>, vector<256x768xf32>
    %cst_38 = arith.constant dense<0.000000e+00> : vector<8x768xf32>
    %116 = tpu.matmul %112, %115, %cst_38 {dimension_numbers = #tpu.dot_dimension_numbers<[1], [0], [0], [1], [0, 0, 1, 1], [], []>} : vector<8x256xf32>, vector<256x768xf32>, vector<8x768xf32> -> vector<8x768xf32>
    %117 = vector.extract_strided_slice %113 {offsets = [0, 0], sizes = [8, 256], strides = [1, 1]} : vector<8x384xf32> to vector<8x256xf32>
    %118 = vector.extract_strided_slice %116 {offsets = [0, 0], sizes = [8, 256], strides = [1, 1]} : vector<8x768xf32> to vector<8x256xf32>
    %119 = arith.addf %117, %118 : vector<8x256xf32>
    %120 = arith.negf %119 : vector<8x256xf32>
    %121 = math.exp %120 : vector<8x256xf32>
    %cst_39 = arith.constant 1.000000e+00 : f32
    %122 = vector.broadcast %cst_39 : f32 to vector<8x256xf32>
    %123 = arith.addf %122, %121 : vector<8x256xf32>
    %124 = arith.divf %122, %123 : vector<8x256xf32>
    %125 = vector.extract_strided_slice %113 {offsets = [0, 256], sizes = [8, 128], strides = [1, 1]} : vector<8x384xf32> to vector<8x128xf32>
    %126 = vector.extract_strided_slice %124 {offsets = [0, 0], sizes = [8, 128], strides = [1, 1]} : vector<8x256xf32> to vector<8x128xf32>
    %127 = vector.extract_strided_slice %116 {offsets = [0, 256], sizes = [8, 128], strides = [1, 1]} : vector<8x768xf32> to vector<8x128xf32>
    %128 = arith.addf %127, %12 : vector<8x128xf32>
    %129 = arith.mulf %126, %128 : vector<8x128xf32>
    %130 = arith.addf %125, %129 : vector<8x128xf32>
    %131 = math.tanh %130 : vector<8x128xf32>
    %132 = vector.extract_strided_slice %124 {offsets = [0, 128], sizes = [8, 128], strides = [1, 1]} : vector<8x256xf32> to vector<8x128xf32>
    %cst_40 = arith.constant 1.000000e+00 : f32
    %133 = vector.broadcast %cst_40 : f32 to vector<8x128xf32>
    %134 = arith.subf %133, %132 : vector<8x128xf32>
    %135 = arith.mulf %134, %131 : vector<8x128xf32>
    %136 = vector.extract_strided_slice %112 {offsets = [0, 0], sizes = [8, 128], strides = [1, 1]} : vector<8x256xf32> to vector<8x128xf32>
    %137 = arith.mulf %132, %136 : vector<8x128xf32>
    %138 = arith.addf %135, %137 : vector<8x128xf32>
    %139 = vector.extract_strided_slice %114 {offsets = [0, 0], sizes = [8, 256], strides = [1, 1]} : vector<8x384xf32> to vector<8x256xf32>
    %140 = vector.extract_strided_slice %116 {offsets = [0, 384], sizes = [8, 256], strides = [1, 1]} : vector<8x768xf32> to vector<8x256xf32>
    %141 = arith.addf %139, %140 : vector<8x256xf32>
    %142 = arith.negf %141 : vector<8x256xf32>
    %143 = math.exp %142 : vector<8x256xf32>
    %cst_41 = arith.constant 1.000000e+00 : f32
    %144 = vector.broadcast %cst_41 : f32 to vector<8x256xf32>
    %145 = arith.addf %144, %143 : vector<8x256xf32>
    %146 = arith.divf %144, %145 : vector<8x256xf32>
    %147 = vector.extract_strided_slice %114 {offsets = [0, 256], sizes = [8, 128], strides = [1, 1]} : vector<8x384xf32> to vector<8x128xf32>
    %148 = vector.extract_strided_slice %146 {offsets = [0, 0], sizes = [8, 128], strides = [1, 1]} : vector<8x256xf32> to vector<8x128xf32>
    %149 = vector.extract_strided_slice %116 {offsets = [0, 640], sizes = [8, 128], strides = [1, 1]} : vector<8x768xf32> to vector<8x128xf32>
    %150 = arith.addf %149, %13 : vector<8x128xf32>
    %151 = arith.mulf %148, %150 : vector<8x128xf32>
    %152 = arith.addf %147, %151 : vector<8x128xf32>
    %153 = math.tanh %152 : vector<8x128xf32>
    %154 = vector.extract_strided_slice %146 {offsets = [0, 128], sizes = [8, 128], strides = [1, 1]} : vector<8x256xf32> to vector<8x128xf32>
    %cst_42 = arith.constant 1.000000e+00 : f32
    %155 = vector.broadcast %cst_42 : f32 to vector<8x128xf32>
    %156 = arith.subf %155, %154 : vector<8x128xf32>
    %157 = arith.mulf %156, %153 : vector<8x128xf32>
    %158 = vector.extract_strided_slice %112 {offsets = [0, 128], sizes = [8, 128], strides = [1, 1]} : vector<8x256xf32> to vector<8x128xf32>
    %159 = arith.mulf %154, %158 : vector<8x128xf32>
    %160 = arith.addf %157, %159 : vector<8x128xf32>
    %161 = tpu.concatenate %138, %160 in 1 : vector<8x128xf32>, vector<8x128xf32> -> vector<8x256xf32>
    %c24 = arith.constant 24 : index
    %c0_43 = arith.constant 0 : index
    %162 = vector.load %arg9[%c24, %c0_43] : memref<64x384xf32, #tpu.memory_space<vmem>>, vector<8x384xf32>
    %c32 = arith.constant 32 : index
    %c0_44 = arith.constant 0 : index
    %163 = vector.load %arg10[%c32, %c0_44] : memref<64x384xf32, #tpu.memory_space<vmem>>, vector<8x384xf32>
    %c0_45 = arith.constant 0 : index
    %c0_46 = arith.constant 0 : index
    %164 = vector.load %arg3[%c0_45, %c0_46] : memref<256x768xf32, #tpu.memory_space<vmem>>, vector<256x768xf32>
    %cst_47 = arith.constant dense<0.000000e+00> : vector<8x768xf32>
    %165 = tpu.matmul %161, %164, %cst_47 {dimension_numbers = #tpu.dot_dimension_numbers<[1], [0], [0], [1], [0, 0, 1, 1], [], []>} : vector<8x256xf32>, vector<256x768xf32>, vector<8x768xf32> -> vector<8x768xf32>
    %166 = vector.extract_strided_slice %162 {offsets = [0, 0], sizes = [8, 256], strides = [1, 1]} : vector<8x384xf32> to vector<8x256xf32>
    %167 = vector.extract_strided_slice %165 {offsets = [0, 0], sizes = [8, 256], strides = [1, 1]} : vector<8x768xf32> to vector<8x256xf32>
    %168 = arith.addf %166, %167 : vector<8x256xf32>
    %169 = arith.negf %168 : vector<8x256xf32>
    %170 = math.exp %169 : vector<8x256xf32>
    %cst_48 = arith.constant 1.000000e+00 : f32
    %171 = vector.broadcast %cst_48 : f32 to vector<8x256xf32>
    %172 = arith.addf %171, %170 : vector<8x256xf32>
    %173 = arith.divf %171, %172 : vector<8x256xf32>
    %174 = vector.extract_strided_slice %162 {offsets = [0, 256], sizes = [8, 128], strides = [1, 1]} : vector<8x384xf32> to vector<8x128xf32>
    %175 = vector.extract_strided_slice %173 {offsets = [0, 0], sizes = [8, 128], strides = [1, 1]} : vector<8x256xf32> to vector<8x128xf32>
    %176 = vector.extract_strided_slice %165 {offsets = [0, 256], sizes = [8, 128], strides = [1, 1]} : vector<8x768xf32> to vector<8x128xf32>
    %177 = arith.addf %176, %12 : vector<8x128xf32>
    %178 = arith.mulf %175, %177 : vector<8x128xf32>
    %179 = arith.addf %174, %178 : vector<8x128xf32>
    %180 = math.tanh %179 : vector<8x128xf32>
    %181 = vector.extract_strided_slice %173 {offsets = [0, 128], sizes = [8, 128], strides = [1, 1]} : vector<8x256xf32> to vector<8x128xf32>
    %cst_49 = arith.constant 1.000000e+00 : f32
    %182 = vector.broadcast %cst_49 : f32 to vector<8x128xf32>
    %183 = arith.subf %182, %181 : vector<8x128xf32>
    %184 = arith.mulf %183, %180 : vector<8x128xf32>
    %185 = vector.extract_strided_slice %161 {offsets = [0, 0], sizes = [8, 128], strides = [1, 1]} : vector<8x256xf32> to vector<8x128xf32>
    %186 = arith.mulf %181, %185 : vector<8x128xf32>
    %187 = arith.addf %184, %186 : vector<8x128xf32>
    %188 = vector.extract_strided_slice %163 {offsets = [0, 0], sizes = [8, 256], strides = [1, 1]} : vector<8x384xf32> to vector<8x256xf32>
    %189 = vector.extract_strided_slice %165 {offsets = [0, 384], sizes = [8, 256], strides = [1, 1]} : vector<8x768xf32> to vector<8x256xf32>
    %190 = arith.addf %188, %189 : vector<8x256xf32>
    %191 = arith.negf %190 : vector<8x256xf32>
    %192 = math.exp %191 : vector<8x256xf32>
    %cst_50 = arith.constant 1.000000e+00 : f32
    %193 = vector.broadcast %cst_50 : f32 to vector<8x256xf32>
    %194 = arith.addf %193, %192 : vector<8x256xf32>
    %195 = arith.divf %193, %194 : vector<8x256xf32>
    %196 = vector.extract_strided_slice %163 {offsets = [0, 256], sizes = [8, 128], strides = [1, 1]} : vector<8x384xf32> to vector<8x128xf32>
    %197 = vector.extract_strided_slice %195 {offsets = [0, 0], sizes = [8, 128], strides = [1, 1]} : vector<8x256xf32> to vector<8x128xf32>
    %198 = vector.extract_strided_slice %165 {offsets = [0, 640], sizes = [8, 128], strides = [1, 1]} : vector<8x768xf32> to vector<8x128xf32>
    %199 = arith.addf %198, %13 : vector<8x128xf32>
    %200 = arith.mulf %197, %199 : vector<8x128xf32>
    %201 = arith.addf %196, %200 : vector<8x128xf32>
    %202 = math.tanh %201 : vector<8x128xf32>
    %203 = vector.extract_strided_slice %195 {offsets = [0, 128], sizes = [8, 128], strides = [1, 1]} : vector<8x256xf32> to vector<8x128xf32>
    %cst_51 = arith.constant 1.000000e+00 : f32
    %204 = vector.broadcast %cst_51 : f32 to vector<8x128xf32>
    %205 = arith.subf %204, %203 : vector<8x128xf32>
    %206 = arith.mulf %205, %202 : vector<8x128xf32>
    %207 = vector.extract_strided_slice %161 {offsets = [0, 128], sizes = [8, 128], strides = [1, 1]} : vector<8x256xf32> to vector<8x128xf32>
    %208 = arith.mulf %203, %207 : vector<8x128xf32>
    %209 = arith.addf %206, %208 : vector<8x128xf32>
    %210 = tpu.concatenate %187, %209 in 1 : vector<8x128xf32>, vector<8x128xf32> -> vector<8x256xf32>
    %c32_52 = arith.constant 32 : index
    %c0_53 = arith.constant 0 : index
    %211 = vector.load %arg9[%c32_52, %c0_53] : memref<64x384xf32, #tpu.memory_space<vmem>>, vector<8x384xf32>
    %c24_54 = arith.constant 24 : index
    %c0_55 = arith.constant 0 : index
    %212 = vector.load %arg10[%c24_54, %c0_55] : memref<64x384xf32, #tpu.memory_space<vmem>>, vector<8x384xf32>
    %c0_56 = arith.constant 0 : index
    %c0_57 = arith.constant 0 : index
    %213 = vector.load %arg3[%c0_56, %c0_57] : memref<256x768xf32, #tpu.memory_space<vmem>>, vector<256x768xf32>
    %cst_58 = arith.constant dense<0.000000e+00> : vector<8x768xf32>
    %214 = tpu.matmul %210, %213, %cst_58 {dimension_numbers = #tpu.dot_dimension_numbers<[1], [0], [0], [1], [0, 0, 1, 1], [], []>} : vector<8x256xf32>, vector<256x768xf32>, vector<8x768xf32> -> vector<8x768xf32>
    %215 = vector.extract_strided_slice %211 {offsets = [0, 0], sizes = [8, 256], strides = [1, 1]} : vector<8x384xf32> to vector<8x256xf32>
    %216 = vector.extract_strided_slice %214 {offsets = [0, 0], sizes = [8, 256], strides = [1, 1]} : vector<8x768xf32> to vector<8x256xf32>
    %217 = arith.addf %215, %216 : vector<8x256xf32>
    %218 = arith.negf %217 : vector<8x256xf32>
    %219 = math.exp %218 : vector<8x256xf32>
    %cst_59 = arith.constant 1.000000e+00 : f32
    %220 = vector.broadcast %cst_59 : f32 to vector<8x256xf32>
    %221 = arith.addf %220, %219 : vector<8x256xf32>
    %222 = arith.divf %220, %221 : vector<8x256xf32>
    %223 = vector.extract_strided_slice %211 {offsets = [0, 256], sizes = [8, 128], strides = [1, 1]} : vector<8x384xf32> to vector<8x128xf32>
    %224 = vector.extract_strided_slice %222 {offsets = [0, 0], sizes = [8, 128], strides = [1, 1]} : vector<8x256xf32> to vector<8x128xf32>
    %225 = vector.extract_strided_slice %214 {offsets = [0, 256], sizes = [8, 128], strides = [1, 1]} : vector<8x768xf32> to vector<8x128xf32>
    %226 = arith.addf %225, %12 : vector<8x128xf32>
    %227 = arith.mulf %224, %226 : vector<8x128xf32>
    %228 = arith.addf %223, %227 : vector<8x128xf32>
    %229 = math.tanh %228 : vector<8x128xf32>
    %230 = vector.extract_strided_slice %222 {offsets = [0, 128], sizes = [8, 128], strides = [1, 1]} : vector<8x256xf32> to vector<8x128xf32>
    %cst_60 = arith.constant 1.000000e+00 : f32
    %231 = vector.broadcast %cst_60 : f32 to vector<8x128xf32>
    %232 = arith.subf %231, %230 : vector<8x128xf32>
    %233 = arith.mulf %232, %229 : vector<8x128xf32>
    %234 = vector.extract_strided_slice %210 {offsets = [0, 0], sizes = [8, 128], strides = [1, 1]} : vector<8x256xf32> to vector<8x128xf32>
    %235 = arith.mulf %230, %234 : vector<8x128xf32>
    %236 = arith.addf %233, %235 : vector<8x128xf32>
    %237 = vector.extract_strided_slice %212 {offsets = [0, 0], sizes = [8, 256], strides = [1, 1]} : vector<8x384xf32> to vector<8x256xf32>
    %238 = vector.extract_strided_slice %214 {offsets = [0, 384], sizes = [8, 256], strides = [1, 1]} : vector<8x768xf32> to vector<8x256xf32>
    %239 = arith.addf %237, %238 : vector<8x256xf32>
    %240 = arith.negf %239 : vector<8x256xf32>
    %241 = math.exp %240 : vector<8x256xf32>
    %cst_61 = arith.constant 1.000000e+00 : f32
    %242 = vector.broadcast %cst_61 : f32 to vector<8x256xf32>
    %243 = arith.addf %242, %241 : vector<8x256xf32>
    %244 = arith.divf %242, %243 : vector<8x256xf32>
    %245 = vector.extract_strided_slice %212 {offsets = [0, 256], sizes = [8, 128], strides = [1, 1]} : vector<8x384xf32> to vector<8x128xf32>
    %246 = vector.extract_strided_slice %244 {offsets = [0, 0], sizes = [8, 128], strides = [1, 1]} : vector<8x256xf32> to vector<8x128xf32>
    %247 = vector.extract_strided_slice %214 {offsets = [0, 640], sizes = [8, 128], strides = [1, 1]} : vector<8x768xf32> to vector<8x128xf32>
    %248 = arith.addf %247, %13 : vector<8x128xf32>
    %249 = arith.mulf %246, %248 : vector<8x128xf32>
    %250 = arith.addf %245, %249 : vector<8x128xf32>
    %251 = math.tanh %250 : vector<8x128xf32>
    %252 = vector.extract_strided_slice %244 {offsets = [0, 128], sizes = [8, 128], strides = [1, 1]} : vector<8x256xf32> to vector<8x128xf32>
    %cst_62 = arith.constant 1.000000e+00 : f32
    %253 = vector.broadcast %cst_62 : f32 to vector<8x128xf32>
    %254 = arith.subf %253, %252 : vector<8x128xf32>
    %255 = arith.mulf %254, %251 : vector<8x128xf32>
    %256 = vector.extract_strided_slice %210 {offsets = [0, 128], sizes = [8, 128], strides = [1, 1]} : vector<8x256xf32> to vector<8x128xf32>
    %257 = arith.mulf %252, %256 : vector<8x128xf32>
    %258 = arith.addf %255, %257 : vector<8x128xf32>
    %259 = tpu.concatenate %236, %258 in 1 : vector<8x128xf32>, vector<8x128xf32> -> vector<8x256xf32>
    %c40_63 = arith.constant 40 : index
    %c0_64 = arith.constant 0 : index
    %260 = vector.load %arg9[%c40_63, %c0_64] : memref<64x384xf32, #tpu.memory_space<vmem>>, vector<8x384xf32>
    %c16_65 = arith.constant 16 : index
    %c0_66 = arith.constant 0 : index
    %261 = vector.load %arg10[%c16_65, %c0_66] : memref<64x384xf32, #tpu.memory_space<vmem>>, vector<8x384xf32>
    %c0_67 = arith.constant 0 : index
    %c0_68 = arith.constant 0 : index
    %262 = vector.load %arg3[%c0_67, %c0_68] : memref<256x768xf32, #tpu.memory_space<vmem>>, vector<256x768xf32>
    %cst_69 = arith.constant dense<0.000000e+00> : vector<8x768xf32>
    %263 = tpu.matmul %259, %262, %cst_69 {dimension_numbers = #tpu.dot_dimension_numbers<[1], [0], [0], [1], [0, 0, 1, 1], [], []>} : vector<8x256xf32>, vector<256x768xf32>, vector<8x768xf32> -> vector<8x768xf32>
    %264 = vector.extract_strided_slice %260 {offsets = [0, 0], sizes = [8, 256], strides = [1, 1]} : vector<8x384xf32> to vector<8x256xf32>
    %265 = vector.extract_strided_slice %263 {offsets = [0, 0], sizes = [8, 256], strides = [1, 1]} : vector<8x768xf32> to vector<8x256xf32>
    %266 = arith.addf %264, %265 : vector<8x256xf32>
    %267 = arith.negf %266 : vector<8x256xf32>
    %268 = math.exp %267 : vector<8x256xf32>
    %cst_70 = arith.constant 1.000000e+00 : f32
    %269 = vector.broadcast %cst_70 : f32 to vector<8x256xf32>
    %270 = arith.addf %269, %268 : vector<8x256xf32>
    %271 = arith.divf %269, %270 : vector<8x256xf32>
    %272 = vector.extract_strided_slice %260 {offsets = [0, 256], sizes = [8, 128], strides = [1, 1]} : vector<8x384xf32> to vector<8x128xf32>
    %273 = vector.extract_strided_slice %271 {offsets = [0, 0], sizes = [8, 128], strides = [1, 1]} : vector<8x256xf32> to vector<8x128xf32>
    %274 = vector.extract_strided_slice %263 {offsets = [0, 256], sizes = [8, 128], strides = [1, 1]} : vector<8x768xf32> to vector<8x128xf32>
    %275 = arith.addf %274, %12 : vector<8x128xf32>
    %276 = arith.mulf %273, %275 : vector<8x128xf32>
    %277 = arith.addf %272, %276 : vector<8x128xf32>
    %278 = math.tanh %277 : vector<8x128xf32>
    %279 = vector.extract_strided_slice %271 {offsets = [0, 128], sizes = [8, 128], strides = [1, 1]} : vector<8x256xf32> to vector<8x128xf32>
    %cst_71 = arith.constant 1.000000e+00 : f32
    %280 = vector.broadcast %cst_71 : f32 to vector<8x128xf32>
    %281 = arith.subf %280, %279 : vector<8x128xf32>
    %282 = arith.mulf %281, %278 : vector<8x128xf32>
    %283 = vector.extract_strided_slice %259 {offsets = [0, 0], sizes = [8, 128], strides = [1, 1]} : vector<8x256xf32> to vector<8x128xf32>
    %284 = arith.mulf %279, %283 : vector<8x128xf32>
    %285 = arith.addf %282, %284 : vector<8x128xf32>
    %286 = vector.extract_strided_slice %261 {offsets = [0, 0], sizes = [8, 256], strides = [1, 1]} : vector<8x384xf32> to vector<8x256xf32>
    %287 = vector.extract_strided_slice %263 {offsets = [0, 384], sizes = [8, 256], strides = [1, 1]} : vector<8x768xf32> to vector<8x256xf32>
    %288 = arith.addf %286, %287 : vector<8x256xf32>
    %289 = arith.negf %288 : vector<8x256xf32>
    %290 = math.exp %289 : vector<8x256xf32>
    %cst_72 = arith.constant 1.000000e+00 : f32
    %291 = vector.broadcast %cst_72 : f32 to vector<8x256xf32>
    %292 = arith.addf %291, %290 : vector<8x256xf32>
    %293 = arith.divf %291, %292 : vector<8x256xf32>
    %294 = vector.extract_strided_slice %261 {offsets = [0, 256], sizes = [8, 128], strides = [1, 1]} : vector<8x384xf32> to vector<8x128xf32>
    %295 = vector.extract_strided_slice %293 {offsets = [0, 0], sizes = [8, 128], strides = [1, 1]} : vector<8x256xf32> to vector<8x128xf32>
    %296 = vector.extract_strided_slice %263 {offsets = [0, 640], sizes = [8, 128], strides = [1, 1]} : vector<8x768xf32> to vector<8x128xf32>
    %297 = arith.addf %296, %13 : vector<8x128xf32>
    %298 = arith.mulf %295, %297 : vector<8x128xf32>
    %299 = arith.addf %294, %298 : vector<8x128xf32>
    %300 = math.tanh %299 : vector<8x128xf32>
    %301 = vector.extract_strided_slice %293 {offsets = [0, 128], sizes = [8, 128], strides = [1, 1]} : vector<8x256xf32> to vector<8x128xf32>
    %cst_73 = arith.constant 1.000000e+00 : f32
    %302 = vector.broadcast %cst_73 : f32 to vector<8x128xf32>
    %303 = arith.subf %302, %301 : vector<8x128xf32>
    %304 = arith.mulf %303, %300 : vector<8x128xf32>
    %305 = vector.extract_strided_slice %259 {offsets = [0, 128], sizes = [8, 128], strides = [1, 1]} : vector<8x256xf32> to vector<8x128xf32>
    %306 = arith.mulf %301, %305 : vector<8x128xf32>
    %307 = arith.addf %304, %306 : vector<8x128xf32>
    %308 = tpu.concatenate %285, %307 in 1 : vector<8x128xf32>, vector<8x128xf32> -> vector<8x256xf32>
    %c48_74 = arith.constant 48 : index
    %c0_75 = arith.constant 0 : index
    %309 = vector.load %arg9[%c48_74, %c0_75] : memref<64x384xf32, #tpu.memory_space<vmem>>, vector<8x384xf32>
    %c8_76 = arith.constant 8 : index
    %c0_77 = arith.constant 0 : index
    %310 = vector.load %arg10[%c8_76, %c0_77] : memref<64x384xf32, #tpu.memory_space<vmem>>, vector<8x384xf32>
    %c0_78 = arith.constant 0 : index
    %c0_79 = arith.constant 0 : index
    %311 = vector.load %arg3[%c0_78, %c0_79] : memref<256x768xf32, #tpu.memory_space<vmem>>, vector<256x768xf32>
    %cst_80 = arith.constant dense<0.000000e+00> : vector<8x768xf32>
    %312 = tpu.matmul %308, %311, %cst_80 {dimension_numbers = #tpu.dot_dimension_numbers<[1], [0], [0], [1], [0, 0, 1, 1], [], []>} : vector<8x256xf32>, vector<256x768xf32>, vector<8x768xf32> -> vector<8x768xf32>
    %313 = vector.extract_strided_slice %309 {offsets = [0, 0], sizes = [8, 256], strides = [1, 1]} : vector<8x384xf32> to vector<8x256xf32>
    %314 = vector.extract_strided_slice %312 {offsets = [0, 0], sizes = [8, 256], strides = [1, 1]} : vector<8x768xf32> to vector<8x256xf32>
    %315 = arith.addf %313, %314 : vector<8x256xf32>
    %316 = arith.negf %315 : vector<8x256xf32>
    %317 = math.exp %316 : vector<8x256xf32>
    %cst_81 = arith.constant 1.000000e+00 : f32
    %318 = vector.broadcast %cst_81 : f32 to vector<8x256xf32>
    %319 = arith.addf %318, %317 : vector<8x256xf32>
    %320 = arith.divf %318, %319 : vector<8x256xf32>
    %321 = vector.extract_strided_slice %309 {offsets = [0, 256], sizes = [8, 128], strides = [1, 1]} : vector<8x384xf32> to vector<8x128xf32>
    %322 = vector.extract_strided_slice %320 {offsets = [0, 0], sizes = [8, 128], strides = [1, 1]} : vector<8x256xf32> to vector<8x128xf32>
    %323 = vector.extract_strided_slice %312 {offsets = [0, 256], sizes = [8, 128], strides = [1, 1]} : vector<8x768xf32> to vector<8x128xf32>
    %324 = arith.addf %323, %12 : vector<8x128xf32>
    %325 = arith.mulf %322, %324 : vector<8x128xf32>
    %326 = arith.addf %321, %325 : vector<8x128xf32>
    %327 = math.tanh %326 : vector<8x128xf32>
    %328 = vector.extract_strided_slice %320 {offsets = [0, 128], sizes = [8, 128], strides = [1, 1]} : vector<8x256xf32> to vector<8x128xf32>
    %cst_82 = arith.constant 1.000000e+00 : f32
    %329 = vector.broadcast %cst_82 : f32 to vector<8x128xf32>
    %330 = arith.subf %329, %328 : vector<8x128xf32>
    %331 = arith.mulf %330, %327 : vector<8x128xf32>
    %332 = vector.extract_strided_slice %308 {offsets = [0, 0], sizes = [8, 128], strides = [1, 1]} : vector<8x256xf32> to vector<8x128xf32>
    %333 = arith.mulf %328, %332 : vector<8x128xf32>
    %334 = arith.addf %331, %333 : vector<8x128xf32>
    %335 = vector.extract_strided_slice %310 {offsets = [0, 0], sizes = [8, 256], strides = [1, 1]} : vector<8x384xf32> to vector<8x256xf32>
    %336 = vector.extract_strided_slice %312 {offsets = [0, 384], sizes = [8, 256], strides = [1, 1]} : vector<8x768xf32> to vector<8x256xf32>
    %337 = arith.addf %335, %336 : vector<8x256xf32>
    %338 = arith.negf %337 : vector<8x256xf32>
    %339 = math.exp %338 : vector<8x256xf32>
    %cst_83 = arith.constant 1.000000e+00 : f32
    %340 = vector.broadcast %cst_83 : f32 to vector<8x256xf32>
    %341 = arith.addf %340, %339 : vector<8x256xf32>
    %342 = arith.divf %340, %341 : vector<8x256xf32>
    %343 = vector.extract_strided_slice %310 {offsets = [0, 256], sizes = [8, 128], strides = [1, 1]} : vector<8x384xf32> to vector<8x128xf32>
    %344 = vector.extract_strided_slice %342 {offsets = [0, 0], sizes = [8, 128], strides = [1, 1]} : vector<8x256xf32> to vector<8x128xf32>
    %345 = vector.extract_strided_slice %312 {offsets = [0, 640], sizes = [8, 128], strides = [1, 1]} : vector<8x768xf32> to vector<8x128xf32>
    %346 = arith.addf %345, %13 : vector<8x128xf32>
    %347 = arith.mulf %344, %346 : vector<8x128xf32>
    %348 = arith.addf %343, %347 : vector<8x128xf32>
    %349 = math.tanh %348 : vector<8x128xf32>
    %350 = vector.extract_strided_slice %342 {offsets = [0, 128], sizes = [8, 128], strides = [1, 1]} : vector<8x256xf32> to vector<8x128xf32>
    %cst_84 = arith.constant 1.000000e+00 : f32
    %351 = vector.broadcast %cst_84 : f32 to vector<8x128xf32>
    %352 = arith.subf %351, %350 : vector<8x128xf32>
    %353 = arith.mulf %352, %349 : vector<8x128xf32>
    %354 = vector.extract_strided_slice %308 {offsets = [0, 128], sizes = [8, 128], strides = [1, 1]} : vector<8x256xf32> to vector<8x128xf32>
    %355 = arith.mulf %350, %354 : vector<8x128xf32>
    %356 = arith.addf %353, %355 : vector<8x128xf32>
    %357 = tpu.concatenate %334, %356 in 1 : vector<8x128xf32>, vector<8x128xf32> -> vector<8x256xf32>
    %c56_85 = arith.constant 56 : index
    %c0_86 = arith.constant 0 : index
    %358 = vector.load %arg9[%c56_85, %c0_86] : memref<64x384xf32, #tpu.memory_space<vmem>>, vector<8x384xf32>
    %c0_87 = arith.constant 0 : index
    %c0_88 = arith.constant 0 : index
    %359 = vector.load %arg10[%c0_87, %c0_88] : memref<64x384xf32, #tpu.memory_space<vmem>>, vector<8x384xf32>
    %c0_89 = arith.constant 0 : index
    %c0_90 = arith.constant 0 : index
    %360 = vector.load %arg3[%c0_89, %c0_90] : memref<256x768xf32, #tpu.memory_space<vmem>>, vector<256x768xf32>
    %cst_91 = arith.constant dense<0.000000e+00> : vector<8x768xf32>
    %361 = tpu.matmul %357, %360, %cst_91 {dimension_numbers = #tpu.dot_dimension_numbers<[1], [0], [0], [1], [0, 0, 1, 1], [], []>} : vector<8x256xf32>, vector<256x768xf32>, vector<8x768xf32> -> vector<8x768xf32>
    %362 = vector.extract_strided_slice %358 {offsets = [0, 0], sizes = [8, 256], strides = [1, 1]} : vector<8x384xf32> to vector<8x256xf32>
    %363 = vector.extract_strided_slice %361 {offsets = [0, 0], sizes = [8, 256], strides = [1, 1]} : vector<8x768xf32> to vector<8x256xf32>
    %364 = arith.addf %362, %363 : vector<8x256xf32>
    %365 = arith.negf %364 : vector<8x256xf32>
    %366 = math.exp %365 : vector<8x256xf32>
    %cst_92 = arith.constant 1.000000e+00 : f32
    %367 = vector.broadcast %cst_92 : f32 to vector<8x256xf32>
    %368 = arith.addf %367, %366 : vector<8x256xf32>
    %369 = arith.divf %367, %368 : vector<8x256xf32>
    %370 = vector.extract_strided_slice %358 {offsets = [0, 256], sizes = [8, 128], strides = [1, 1]} : vector<8x384xf32> to vector<8x128xf32>
    %371 = vector.extract_strided_slice %369 {offsets = [0, 0], sizes = [8, 128], strides = [1, 1]} : vector<8x256xf32> to vector<8x128xf32>
    %372 = vector.extract_strided_slice %361 {offsets = [0, 256], sizes = [8, 128], strides = [1, 1]} : vector<8x768xf32> to vector<8x128xf32>
    %373 = arith.addf %372, %12 : vector<8x128xf32>
    %374 = arith.mulf %371, %373 : vector<8x128xf32>
    %375 = arith.addf %370, %374 : vector<8x128xf32>
    %376 = math.tanh %375 : vector<8x128xf32>
    %377 = vector.extract_strided_slice %369 {offsets = [0, 128], sizes = [8, 128], strides = [1, 1]} : vector<8x256xf32> to vector<8x128xf32>
    %cst_93 = arith.constant 1.000000e+00 : f32
    %378 = vector.broadcast %cst_93 : f32 to vector<8x128xf32>
    %379 = arith.subf %378, %377 : vector<8x128xf32>
    %380 = arith.mulf %379, %376 : vector<8x128xf32>
    %381 = vector.extract_strided_slice %357 {offsets = [0, 0], sizes = [8, 128], strides = [1, 1]} : vector<8x256xf32> to vector<8x128xf32>
    %382 = arith.mulf %377, %381 : vector<8x128xf32>
    %383 = arith.addf %380, %382 : vector<8x128xf32>
    %384 = vector.extract_strided_slice %359 {offsets = [0, 0], sizes = [8, 256], strides = [1, 1]} : vector<8x384xf32> to vector<8x256xf32>
    %385 = vector.extract_strided_slice %361 {offsets = [0, 384], sizes = [8, 256], strides = [1, 1]} : vector<8x768xf32> to vector<8x256xf32>
    %386 = arith.addf %384, %385 : vector<8x256xf32>
    %387 = arith.negf %386 : vector<8x256xf32>
    %388 = math.exp %387 : vector<8x256xf32>
    %cst_94 = arith.constant 1.000000e+00 : f32
    %389 = vector.broadcast %cst_94 : f32 to vector<8x256xf32>
    %390 = arith.addf %389, %388 : vector<8x256xf32>
    %391 = arith.divf %389, %390 : vector<8x256xf32>
    %392 = vector.extract_strided_slice %359 {offsets = [0, 256], sizes = [8, 128], strides = [1, 1]} : vector<8x384xf32> to vector<8x128xf32>
    %393 = vector.extract_strided_slice %391 {offsets = [0, 0], sizes = [8, 128], strides = [1, 1]} : vector<8x256xf32> to vector<8x128xf32>
    %394 = vector.extract_strided_slice %361 {offsets = [0, 640], sizes = [8, 128], strides = [1, 1]} : vector<8x768xf32> to vector<8x128xf32>
    %395 = arith.addf %394, %13 : vector<8x128xf32>
    %396 = arith.mulf %393, %395 : vector<8x128xf32>
    %397 = arith.addf %392, %396 : vector<8x128xf32>
    %398 = math.tanh %397 : vector<8x128xf32>
    %399 = vector.extract_strided_slice %391 {offsets = [0, 128], sizes = [8, 128], strides = [1, 1]} : vector<8x256xf32> to vector<8x128xf32>
    %cst_95 = arith.constant 1.000000e+00 : f32
    %400 = vector.broadcast %cst_95 : f32 to vector<8x128xf32>
    %401 = arith.subf %400, %399 : vector<8x128xf32>
    %402 = arith.mulf %401, %398 : vector<8x128xf32>
    %403 = vector.extract_strided_slice %357 {offsets = [0, 128], sizes = [8, 128], strides = [1, 1]} : vector<8x256xf32> to vector<8x128xf32>
    %404 = arith.mulf %399, %403 : vector<8x128xf32>
    %405 = arith.addf %402, %404 : vector<8x128xf32>
    %406 = tpu.concatenate %383, %405 in 1 : vector<8x128xf32>, vector<8x128xf32> -> vector<8x256xf32>
    %c0_96 = arith.constant 0 : index
    %c0_97 = arith.constant 0 : index
    %407 = vector.load %arg6[%c0_96, %c0_97] : memref<256x128xf32, #tpu.memory_space<vmem>>, vector<256x128xf32>
    %cst_98 = arith.constant dense<0.000000e+00> : vector<8x128xf32>
    %408 = tpu.matmul %406, %407, %cst_98 {dimension_numbers = #tpu.dot_dimension_numbers<[1], [0], [0], [1], [0, 0, 1, 1], [], []>} : vector<8x256xf32>, vector<256x128xf32>, vector<8x128xf32> -> vector<8x128xf32>
    %c0_99 = arith.constant 0 : index
    %c0_100 = arith.constant 0 : index
    %409 = vector.load %arg7[%c0_99, %c0_100] : memref<8x128xf32, #tpu.memory_space<vmem>>, vector<8x128xf32>
    %410 = arith.addf %408, %409 : vector<8x128xf32>
    %c0_101 = arith.constant 0 : index
    %c0_102 = arith.constant 0 : index
    %411 = vector.load %arg8[%c0_101, %c0_102] : memref<8x128xf32, #tpu.memory_space<vmem>>, vector<8x128xf32>
    tpu.vector_store %arg8[%c0_101, %c0_102], %410 {strides = array<i32>} : memref<8x128xf32, #tpu.memory_space<vmem>>, vector<8x128xf32>,
    return
  }
}

</mosaic_0001>

<llo_original>
// kernel: baseline_rnn_forward.1
$region0: #{baseline_rnn_forward.1}
  #allocation0 [shape = 'u32[]', space=smem, size = 0x4, offset = 0x4, fixed_abs, tag = 'smem constant byte address 0x4 - core index']
  #allocation1 [shape = 'u32[144,128]{1,0:T(1,128)}', space=vmem, size = 0x12000, scoped, tag = 'internal scratch']
  #allocation2 [shape = 'f32[64,384]{1,0:T(8,128)}', space=vmem, size = 0x18000, scoped, tag = 'scratch operand']
  #allocation3 [shape = 'f32[64,384]{1,0:T(8,128)}', space=vmem, size = 0x18000, scoped, tag = 'scratch operand']
  %s0 = inlined_call_operand.vmem [shape: s32[64,1], index: 0, kind: input, shape index: {}]
  %s1 = inlined_call_operand.vmem [shape: f32[128,384], index: 1, kind: input, shape index: {}]
  %s2 = inlined_call_operand.vmem [shape: f32[128,384], index: 2, kind: input, shape index: {}]
  %s3 = inlined_call_operand.vmem [shape: f32[256,768], index: 3, kind: input, shape index: {}]
  %s4 = inlined_call_operand.vmem [shape: f32[8,128], index: 4, kind: input, shape index: {}]
  %s5 = inlined_call_operand.vmem [shape: f32[8,128], index: 5, kind: input, shape index: {}]
  %s6 = inlined_call_operand.vmem [shape: f32[256,128], index: 6, kind: input, shape index: {}]
  %s7 = inlined_call_operand.vmem [shape: f32[8,128], index: 7, kind: input, shape index: {}]
  %s8 = inlined_call_operand.vmem [shape: f32[8,128], index: 8, kind: output, shape index: {}]
  %s9 = sld [smem:[#allocation0]]
  $region42: #{baseline_rnn_forward.1} parent=0
    _
  %s11 = ssub.s32 1, %s9
  %s12 = scalar_select 0, %s11, %s9
  // Predicated region
  $region2: #{baseline_rnn_forward.1} parent=0 // pred_check
    _
  $region3: #{baseline_rnn_forward.1} parent=0 // pred_check_branch
    %14 = sbr.rel (0) target = $region5
  $region4: #{baseline_rnn_forward.1} parent=0 // pred_region
    _
  $region5: #{baseline_rnn_forward.1} parent=0 // pred_fallthru
    _
  // Predicated region
  $region6: #{baseline_rnn_forward.1} parent=0 // pred_check
    _
  $region7: #{baseline_rnn_forward.1} parent=0 // pred_check_branch
    %16 = sbr.rel (0) target = $region9
  $region8: #{baseline_rnn_forward.1} parent=0 // pred_region
    _
  $region9: #{baseline_rnn_forward.1} parent=0 // pred_fallthru
    _
  // Predicated region
  $region10: #{baseline_rnn_forward.1} parent=0 // pred_check
    _
  $region11: #{baseline_rnn_forward.1} parent=0 // pred_check_branch
    %18 = sbr.rel (0) target = $region13
  $region12: #{baseline_rnn_forward.1} parent=0 // pred_region
    _
  $region13: #{baseline_rnn_forward.1} parent=0 // pred_fallthru
    _
  // Predicated region
  $region14: #{baseline_rnn_forward.1} parent=0 // pred_check
    _
  $region15: #{baseline_rnn_forward.1} parent=0 // pred_check_branch
    %20 = sbr.rel (0) target = $region17
  $region16: #{baseline_rnn_forward.1} parent=0 // pred_region
    _
  $region17: #{baseline_rnn_forward.1} parent=0 // pred_fallthru
    _
  // Predicated region
  $region18: #{baseline_rnn_forward.1} parent=0 // pred_check
    _
  $region19: #{baseline_rnn_forward.1} parent=0 // pred_check_branch
    %22 = sbr.rel (0) target = $region21
  $region20: #{baseline_rnn_forward.1} parent=0 // pred_region
    _
  $region21: #{baseline_rnn_forward.1} parent=0 // pred_fallthru
    _
  // Predicated region
  $region22: #{baseline_rnn_forward.1} parent=0 // pred_check
    _
  $region23: #{baseline_rnn_forward.1} parent=0 // pred_check_branch
    %24 = sbr.rel (0) target = $region25
  $region24: #{baseline_rnn_forward.1} parent=0 // pred_region
    _
  $region25: #{baseline_rnn_forward.1} parent=0 // pred_fallthru
    _
  // Predicated region
  $region26: #{baseline_rnn_forward.1} parent=0 // pred_check
    _
  $region27: #{baseline_rnn_forward.1} parent=0 // pred_check_branch
    %26 = sbr.rel (0) target = $region29
  $region28: #{baseline_rnn_forward.1} parent=0 // pred_region
    _
  $region29: #{baseline_rnn_forward.1} parent=0 // pred_fallthru
    _
  // Predicated region
  $region30: #{baseline_rnn_forward.1} parent=0 // pred_check
    _
  $region31: #{baseline_rnn_forward.1} parent=0 // pred_check_branch
    %28 = sbr.rel (0) target = $region33
  $region32: #{baseline_rnn_forward.1} parent=0 // pred_region
    _
  $region33: #{baseline_rnn_forward.1} parent=0 // pred_fallthru
    _
  %v29 = vld [vmem:[%s0] sm:$0xff]
  %v30 = vld [vmem:[%s0 + $0x8] sm:$0xff]
  %v31 = vld [vmem:[%s0 + $0x10] sm:$0xff]
  %v32 = vld [vmem:[%s0 + $0x18] sm:$0xff]
  %v33 = vld [vmem:[%s0 + $0x20] sm:$0xff]
  %v34 = vld [vmem:[%s0 + $0x28] sm:$0xff]
  %v35 = vld [vmem:[%s0 + $0x30] sm:$0xff]
  %v36 = vld [vmem:[%s0 + $0x38] sm:$0xff]
  %v37 = vlaneseq
  %v38 = vand.u32 %v37, 127
  %39 = vset.pattern.permute.xlu0 0
  %40 = vperm.xlu0 %39, %v29
  %v41 = vpop.permute.xlu0 %40
  %42 = vset.pattern.permute.xlu0 0
  %43 = vperm.xlu0 %42, %v30
  %v44 = vpop.permute.xlu0 %43
  %45 = vset.pattern.permute.xlu0 0
  %46 = vperm.xlu0 %45, %v31
  %v47 = vpop.permute.xlu0 %46
  %48 = vset.pattern.permute.xlu0 0
  %49 = vperm.xlu0 %48, %v32
  %v50 = vpop.permute.xlu0 %49
  %51 = vset.pattern.permute.xlu0 0
  %52 = vperm.xlu0 %51, %v33
  %v53 = vpop.permute.xlu0 %52
  %54 = vset.pattern.permute.xlu0 0
  %55 = vperm.xlu0 %54, %v34
  %v56 = vpop.permute.xlu0 %55
  %57 = vset.pattern.permute.xlu0 0
  %58 = vperm.xlu0 %57, %v35
  %v59 = vpop.permute.xlu0 %58
  %60 = vset.pattern.permute.xlu0 0
  %61 = vperm.xlu0 %60, %v36
  %v62 = vpop.permute.xlu0 %61
  %vm63 = vcmp.eq.s32.totalorder %v38, %v41
  %vm64 = vcmp.eq.s32.totalorder %v38, %v44
  %vm65 = vcmp.eq.s32.totalorder %v38, %v47
  %vm66 = vcmp.eq.s32.totalorder %v38, %v50
  %vm67 = vcmp.eq.s32.totalorder %v38, %v53
  %vm68 = vcmp.eq.s32.totalorder %v38, %v56
  %vm69 = vcmp.eq.s32.totalorder %v38, %v59
  %vm70 = vcmp.eq.s32.totalorder %v38, %v62
  %v71 = vsel %vm63, 1, 0
  %v72 = vsel %vm64, 1, 0
  %v73 = vsel %vm65, 1, 0
  %v74 = vsel %vm66, 1, 0
  %v75 = vsel %vm67, 1, 0
  %v76 = vsel %vm68, 1, 0
  %v77 = vsel %vm69, 1, 0
  %v78 = vsel %vm70, 1, 0
  %v79 = vcvt.s32.f32 %v71
  %v80 = vcvt.s32.f32 %v72
  %v81 = vcvt.s32.f32 %v73
  %v82 = vcvt.s32.f32 %v74
  %v83 = vcvt.s32.f32 %v75
  %v84 = vcvt.s32.f32 %v76
  %v85 = vcvt.s32.f32 %v77
  %v86 = vcvt.s32.f32 %v78
  %v87 = vld [vmem:[%s1] sm:$0xff]
  %v88 = vld [vmem:[%s1 + $0x8] sm:$0xff]
  %v89 = vld [vmem:[%s1 + $0x10] sm:$0xff]
  %v90 = vld [vmem:[%s1 + $0x18] sm:$0xff]
  %v91 = vld [vmem:[%s1 + $0x20] sm:$0xff]
  %v92 = vld [vmem:[%s1 + $0x28] sm:$0xff]
  %v93 = vld [vmem:[%s1 + $0x30] sm:$0xff]
  %v94 = vld [vmem:[%s1 + $0x38] sm:$0xff]
  %v95 = vld [vmem:[%s1 + $0x40] sm:$0xff]
  %v96 = vld [vmem:[%s1 + $0x48] sm:$0xff]
  %v97 = vld [vmem:[%s1 + $0x50] sm:$0xff]
  %v98 = vld [vmem:[%s1 + $0x58] sm:$0xff]
  %v99 = vld [vmem:[%s1 + $0x60] sm:$0xff]
  %v100 = vld [vmem:[%s1 + $0x68] sm:$0xff]
  %v101 = vld [vmem:[%s1 + $0x70] sm:$0xff]
  %v102 = vld [vmem:[%s1 + $0x78] sm:$0xff]
  %v103 = vld [vmem:[%s1 + $0x80] sm:$0xff]
  %v104 = vld [vmem:[%s1 + $0x88] sm:$0xff]
  %v105 = vld [vmem:[%s1 + $0x90] sm:$0xff]
  %v106 = vld [vmem:[%s1 + $0x98] sm:$0xff]
  %v107 = vld [vmem:[%s1 + $0xa0] sm:$0xff]
  %v108 = vld [vmem:[%s1 + $0xa8] sm:$0xff]
  %v109 = vld [vmem:[%s1 + $0xb0] sm:$0xff]
  %v110 = vld [vmem:[%s1 + $0xb8] sm:$0xff]
  %v111 = vld [vmem:[%s1 + $0xc0] sm:$0xff]
  %v112 = vld [vmem:[%s1 + $0xc8] sm:$0xff]
  %v113 = vld [vmem:[%s1 + $0xd0] sm:$0xff]
  %v114 = vld [vmem:[%s1 + $0xd8] sm:$0xff]
  %v115 = vld [vmem:[%s1 + $0xe0] sm:$0xff]
  %v116 = vld [vmem:[%s1 + $0xe8] sm:$0xff]
  %v117 = vld [vmem:[%s1 + $0xf0] sm:$0xff]
  %v118 = vld [vmem:[%s1 + $0xf8] sm:$0xff]
  %v119 = vld [vmem:[%s1 + $0x100] sm:$0xff]
  %v120 = vld [vmem:[%s1 + $0x108] sm:$0xff]
  %v121 = vld [vmem:[%s1 + $0x110] sm:$0xff]
  %v122 = vld [vmem:[%s1 + $0x118] sm:$0xff]
  %v123 = vld [vmem:[%s1 + $0x120] sm:$0xff]
  %v124 = vld [vmem:[%s1 + $0x128] sm:$0xff]
  %v125 = vld [vmem:[%s1 + $0x130] sm:$0xff]
  %v126 = vld [vmem:[%s1 + $0x138] sm:$0xff]
  %v127 = vld [vmem:[%s1 + $0x140] sm:$0xff]
  %v128 = vld [vmem:[%s1 + $0x148] sm:$0xff]
  %v129 = vld [vmem:[%s1 + $0x150] sm:$0xff]
  %v130 = vld [vmem:[%s1 + $0x158] sm:$0xff]
  %v131 = vld [vmem:[%s1 + $0x160] sm:$0xff]
  %v132 = vld [vmem:[%s1 + $0x168] sm:$0xff]
  %v133 = vld [vmem:[%s1 + $0x170] sm:$0xff]
  %v134 = vld [vmem:[%s1 + $0x178] sm:$0xff]
  %135 = vmatprep.subr.mxu0 %v133
  %136 = vmatpush1.msra.mxu0 %v132
  %137 = vmatprep.subr.mxu0 %v130
  %138 = vmatpush1.msra.mxu0 %v129
  %139 = vmatprep.subr.mxu0 %v127
  %140 = vmatpush1.msra.mxu0 %v126
  %141 = vmatprep.subr.mxu0 %v124
  %142 = vmatpush1.msra.mxu0 %v123
  %143 = vmatprep.subr.mxu0 %v121
  %144 = vmatpush1.msra.mxu0 %v120
  %145 = vmatprep.subr.mxu0 %v118
  %146 = vmatpush1.msra.mxu0 %v117
  %147 = vmatprep.subr.mxu0 %v115
  %148 = vmatpush1.msra.mxu0 %v114
  %149 = vmatprep.subr.mxu0 %v112
  %150 = vmatpush1.msra.mxu0 %v111
  %151 = vmatprep.subr.mxu0 %v109
  %152 = vmatpush1.msra.mxu0 %v108
  %153 = vmatprep.subr.mxu0 %v106
  %154 = vmatpush1.msra.mxu0 %v105
  %155 = vmatprep.subr.mxu0 %v103
  %156 = vmatpush1.msra.mxu0 %v102
  %157 = vmatprep.subr.mxu0 %v100
  %158 = vmatpush1.msra.mxu0 %v99
  %159 = vmatprep.subr.mxu0 %v97
  %160 = vmatpush1.msra.mxu0 %v96
  %161 = vmatprep.subr.mxu0 %v94
  %162 = vmatpush1.msra.mxu0 %v93
  %163 = vmatprep.subr.mxu0 %v91
  %164 = vmatpush1.msra.mxu0 %v90
  %165 = vmatprep.subr.mxu0 %v88
  %166 = vmatpush1.msra.mxu0 %v87
  %167 = vmatprep.subr.mxu0 0.0
  %168 = vmatpush2.msra.mxu0 0.0
  %169 = vmatprep.subr.mxu0 0.0
  %170 = vmatpush2.msra.mxu0 0.0
  %171 = vmatprep.subr.mxu0 0.0
  %172 = vmatpush2.msra.mxu0 0.0
  %173 = vmatprep.subr.mxu0 0.0
  %174 = vmatpush2.msra.mxu0 0.0
  %175 = vmatprep.subr.mxu0 0.0
  %176 = vmatpush2.msra.mxu0 0.0
  %177 = vmatprep.subr.mxu0 0.0
  %178 = vmatpush2.msra.mxu0 0.0
  %179 = vmatprep.subr.mxu0 0.0
  %180 = vmatpush2.msra.mxu0 0.0
  %181 = vmatprep.subr.mxu0 0.0
  %182 = vmatpush2.msra.mxu0 0.0
  %183 = vmatprep.subr.mxu0 0.0
  %184 = vmatpush2.msra.mxu0 0.0
  %185 = vmatprep.subr.mxu0 0.0
  %186 = vmatpush2.msra.mxu0 0.0
  %187 = vmatprep.subr.mxu0 0.0
  %188 = vmatpush2.msra.mxu0 0.0
  %189 = vmatprep.subr.mxu0 0.0
  %190 = vmatpush2.msra.mxu0 0.0
  %191 = vmatprep.subr.mxu0 0.0
  %192 = vmatpush2.msra.mxu0 0.0
  %193 = vmatprep.subr.mxu0 0.0
  %194 = vmatpush2.msra.mxu0 0.0
  %195 = vmatprep.subr.mxu0 0.0
  %196 = vmatpush2.msra.mxu0 0.0
  %197 = vmatprep.subr.mxu0 0.0
  %198 = vmatpush2.msra.mxu0 0.0
  %199 = vmatprep.mubr.f32.mxu0 0.0
  %200 = vmatmul.mubr.f32.gmra.mxu0 %v79
  %v201 = vpop.f32.mrf.mxu0
  %v202 = vadd.f32 0.0, %v201
  %v203 = vpop.f32.mrf.mxu0
  %v204 = vadd.f32 0.0, %v203
  %205 = vmatprep.mubr.f32.mxu0 0.0
  %206 = vmatmul.mubr.f32.gmra.mxu0 %v80
  %v207 = vpop.f32.mrf.mxu0
  %v208 = vadd.f32 0.0, %v207
  %v209 = vpop.f32.mrf.mxu0
  %v210 = vadd.f32 0.0, %v209
  %211 = vmatprep.mubr.f32.mxu0 0.0
  %212 = vmatmul.mubr.f32.gmra.mxu0 %v81
  %v213 = vpop.f32.mrf.mxu0
  %v214 = vadd.f32 0.0, %v213
  %v215 = vpop.f32.mrf.mxu0
  %v216 = vadd.f32 0.0, %v215
  %217 = vmatprep.mubr.f32.mxu0 0.0
  %218 = vmatmul.mubr.f32.gmra.mxu0 %v82
  %v219 = vpop.f32.mrf.mxu0
  %v220 = vadd.f32 0.0, %v219
  %v221 = vpop.f32.mrf.mxu0
  %v222 = vadd.f32 0.0, %v221
  %223 = vmatprep.mubr.f32.mxu0 0.0
  %224 = vmatmul.mubr.f32.gmra.mxu0 %v83
  %v225 = vpop.f32.mrf.mxu0
  %v226 = vadd.f32 0.0, %v225
  %v227 = vpop.f32.mrf.mxu0
  %v228 = vadd.f32 0.0, %v227
  %229 = vmatprep.mubr.f32.mxu0 0.0
  %230 = vmatmul.mubr.f32.gmra.mxu0 %v84
  %v231 = vpop.f32.mrf.mxu0
  %v232 = vadd.f32 0.0, %v231
  %v233 = vpop.f32.mrf.mxu0
  %v234 = vadd.f32 0.0, %v233
  %235 = vmatprep.mubr.f32.mxu0 0.0
  %236 = vmatmul.mubr.f32.gmra.mxu0 %v85
  %v237 = vpop.f32.mrf.mxu0
  %v238 = vadd.f32 0.0, %v237
  %v239 = vpop.f32.mrf.mxu0
  %v240 = vadd.f32 0.0, %v239
  %241 = vmatprep.mubr.f32.mxu0 0.0
  %242 = vmatmul.mubr.f32.gmra.mxu0 %v86
  %v243 = vpop.f32.mrf.mxu0
  %v244 = vadd.f32 0.0, %v243
  %v245 = vpop.f32.mrf.mxu0
  %v246 = vadd.f32 0.0, %v245
  %247 = vdwg.mxu0
  %248 = vmatprep.subr.mxu0 0.0
  %249 = vmatpush1.msra.mxu0 %v134
  %250 = vmatprep.subr.mxu0 0.0
  %251 = vmatpush1.msra.mxu0 %v131
  %252 = vmatprep.subr.mxu0 0.0
  %253 = vmatpush1.msra.mxu0 %v128
  %254 = vmatprep.subr.mxu0 0.0
  %255 = vmatpush1.msra.mxu0 %v125
  %256 = vmatprep.subr.mxu0 0.0
  %257 = vmatpush1.msra.mxu0 %v122
  %258 = vmatprep.subr.mxu0 0.0
  %259 = vmatpush1.msra.mxu0 %v119
  %260 = vmatprep.subr.mxu0 0.0
  %261 = vmatpush1.msra.mxu0 %v116
  %262 = vmatprep.subr.mxu0 0.0
  %263 = vmatpush1.msra.mxu0 %v113
  %264 = vmatprep.subr.mxu0 0.0
  %265 = vmatpush1.msra.mxu0 %v110
  %266 = vmatprep.subr.mxu0 0.0
  %267 = vmatpush1.msra.mxu0 %v107
  %268 = vmatprep.subr.mxu0 0.0
  %269 = vmatpush1.msra.mxu0 %v104
  %270 = vmatprep.subr.mxu0 0.0
  %271 = vmatpush1.msra.mxu0 %v101
  %272 = vmatprep.subr.mxu0 0.0
  %273 = vmatpush1.msra.mxu0 %v98
  %274 = vmatprep.subr.mxu0 0.0
  %275 = vmatpush1.msra.mxu0 %v95
  %276 = vmatprep.subr.mxu0 0.0
  %277 = vmatpush1.msra.mxu0 %v92
  %278 = vmatprep.subr.mxu0 0.0
  %279 = vmatpush1.msra.mxu0 %v89
  %280 = vmatprep.subr.mxu0 0.0
  %281 = vmatpush2.msra.mxu0 0.0
  %282 = vmatprep.subr.mxu0 0.0
  %283 = vmatpush2.msra.mxu0 0.0
  %284 = vmatprep.subr.mxu0 0.0
  %285 = vmatpush2.msra.mxu0 0.0
  %286 = vmatprep.subr.mxu0 0.0
  %287 = vmatpush2.msra.mxu0 0.0
  %288 = vmatprep.subr.mxu0 0.0
  %289 = vmatpush2.msra.mxu0 0.0
  %290 = vmatprep.subr.mxu0 0.0
  %291 = vmatpush2.msra.mxu0 0.0
  %292 = vmatprep.subr.mxu0 0.0
  %293 = vmatpush2.msra.mxu0 0.0
  %294 = vmatprep.subr.mxu0 0.0
  %295 = vmatpush2.msra.mxu0 0.0
  %296 = vmatprep.subr.mxu0 0.0
  %297 = vmatpush2.msra.mxu0 0.0
  %298 = vmatprep.subr.mxu0 0.0
  %299 = vmatpush2.msra.mxu0 0.0
  %300 = vmatprep.subr.mxu0 0.0
  %301 = vmatpush2.msra.mxu0 0.0
  %302 = vmatprep.subr.mxu0 0.0
  %303 = vmatpush2.msra.mxu0 0.0
  %304 = vmatprep.subr.mxu0 0.0
  %305 = vmatpush2.msra.mxu0 0.0
  %306 = vmatprep.subr.mxu0 0.0
  %307 = vmatpush2.msra.mxu0 0.0
  %308 = vmatprep.subr.mxu0 0.0
  %309 = vmatpush2.msra.mxu0 0.0
  %310 = vmatprep.subr.mxu0 0.0
  %311 = vmatpush2.msra.mxu0 0.0
  %312 = vmatprep.mubr.f32.mxu0 0.0
  %313 = vmatmul.mubr.f32.gmra.mxu0 %v79
  %v314 = vpop.f32.mrf.mxu0
  %v315 = vadd.f32 0.0, %v314
  %v316 = vpop.f32.mrf.mxu0
  %317 = vmatprep.mubr.f32.mxu0 0.0
  %318 = vmatmul.mubr.f32.gmra.mxu0 %v80
  %v319 = vpop.f32.mrf.mxu0
  %v320 = vadd.f32 0.0, %v319
  %v321 = vpop.f32.mrf.mxu0
  %322 = vmatprep.mubr.f32.mxu0 0.0
  %323 = vmatmul.mubr.f32.gmra.mxu0 %v81
  %v324 = vpop.f32.mrf.mxu0
  %v325 = vadd.f32 0.0, %v324
  %v326 = vpop.f32.mrf.mxu0
  %327 = vmatprep.mubr.f32.mxu0 0.0
  %328 = vmatmul.mubr.f32.gmra.mxu0 %v82
  %v329 = vpop.f32.mrf.mxu0
  %v330 = vadd.f32 0.0, %v329
  %v331 = vpop.f32.mrf.mxu0
  %332 = vmatprep.mubr.f32.mxu0 0.0
  %333 = vmatmul.mubr.f32.gmra.mxu0 %v83
  %v334 = vpop.f32.mrf.mxu0
  %v335 = vadd.f32 0.0, %v334
  %v336 = vpop.f32.mrf.mxu0
  %337 = vmatprep.mubr.f32.mxu0 0.0
  %338 = vmatmul.mubr.f32.gmra.mxu0 %v84
  %v339 = vpop.f32.mrf.mxu0
  %v340 = vadd.f32 0.0, %v339
  %v341 = vpop.f32.mrf.mxu0
  %342 = vmatprep.mubr.f32.mxu0 0.0
  %343 = vmatmul.mubr.f32.gmra.mxu0 %v85
  %v344 = vpop.f32.mrf.mxu0
  %v345 = vadd.f32 0.0, %v344
  %v346 = vpop.f32.mrf.mxu0
  %347 = vmatprep.mubr.f32.mxu0 0.0
  %348 = vmatmul.mubr.f32.gmra.mxu0 %v86
  %v349 = vpop.f32.mrf.mxu0
  %v350 = vadd.f32 0.0, %v349
  %v351 = vpop.f32.mrf.mxu0
  %352 = vdwg.mxu0
  %353 = vst [vmem:[#allocation2] sm:$0xff] %v202
  %354 = vst [vmem:[#allocation2 + $0x8] sm:$0xff] %v204
  %355 = vst [vmem:[#allocation2 + $0x10] sm:$0xff] %v315
  %356 = vst [vmem:[#allocation2 + $0x18] sm:$0xff] %v208
  %357 = vst [vmem:[#allocation2 + $0x20] sm:$0xff] %v210
  %358 = vst [vmem:[#allocation2 + $0x28] sm:$0xff] %v320
  %359 = vst [vmem:[#allocation2 + $0x30] sm:$0xff] %v214
  %360 = vst [vmem:[#allocation2 + $0x38] sm:$0xff] %v216
  %361 = vst [vmem:[#allocation2 + $0x40] sm:$0xff] %v325
  %362 = vst [vmem:[#allocation2 + $0x48] sm:$0xff] %v220
  %363 = vst [vmem:[#allocation2 + $0x50] sm:$0xff] %v222
  %364 = vst [vmem:[#allocation2 + $0x58] sm:$0xff] %v330
  %365 = vst [vmem:[#allocation2 + $0x60] sm:$0xff] %v226
  %366 = vst [vmem:[#allocation2 + $0x68] sm:$0xff] %v228
  %367 = vst [vmem:[#allocation2 + $0x70] sm:$0xff] %v335
  %368 = vst [vmem:[#allocation2 + $0x78] sm:$0xff] %v232
  %369 = vst [vmem:[#allocation2 + $0x80] sm:$0xff] %v234
  %370 = vst [vmem:[#allocation2 + $0x88] sm:$0xff] %v340
  %371 = vst [vmem:[#allocation2 + $0x90] sm:$0xff] %v238
  %372 = vst [vmem:[#allocation2 + $0x98] sm:$0xff] %v240
  %373 = vst [vmem:[#allocation2 + $0xa0] sm:$0xff] %v345
  %374 = vst [vmem:[#allocation2 + $0xa8] sm:$0xff] %v244
  %375 = vst [vmem:[#allocation2 + $0xb0] sm:$0xff] %v246
  %376 = vst [vmem:[#allocation2 + $0xb8] sm:$0xff] %v350
  %v377 = vld [vmem:[%s2] sm:$0xff]
  %v378 = vld [vmem:[%s2 + $0x8] sm:$0xff]
  %v379 = vld [vmem:[%s2 + $0x10] sm:$0xff]
  %v380 = vld [vmem:[%s2 + $0x18] sm:$0xff]
  %v381 = vld [vmem:[%s2 + $0x20] sm:$0xff]
  %v382 = vld [vmem:[%s2 + $0x28] sm:$0xff]
  %v383 = vld [vmem:[%s2 + $0x30] sm:$0xff]
  %v384 = vld [vmem:[%s2 + $0x38] sm:$0xff]
  %v385 = vld [vmem:[%s2 + $0x40] sm:$0xff]
  %v386 = vld [vmem:[%s2 + $0x48] sm:$0xff]
  %v387 = vld [vmem:[%s2 + $0x50] sm:$0xff]
  %v388 = vld [vmem:[%s2 + $0x58] sm:$0xff]
  %v389 = vld [vmem:[%s2 + $0x60] sm:$0xff]
  %v390 = vld [vmem:[%s2 + $0x68] sm:$0xff]
  %v391 = vld [vmem:[%s2 + $0x70] sm:$0xff]
  %v392 = vld [vmem:[%s2 + $0x78] sm:$0xff]
  %v393 = vld [vmem:[%s2 + $0x80] sm:$0xff]
  %v394 = vld [vmem:[%s2 + $0x88] sm:$0xff]
  %v395 = vld [vmem:[%s2 + $0x90] sm:$0xff]
  %v396 = vld [vmem:[%s2 + $0x98] sm:$0xff]
  %v397 = vld [vmem:[%s2 + $0xa0] sm:$0xff]
  %v398 = vld [vmem:[%s2 + $0xa8] sm:$0xff]
  %v399 = vld [vmem:[%s2 + $0xb0] sm:$0xff]
  %v400 = vld [vmem:[%s2 + $0xb8] sm:$0xff]
  %v401 = vld [vmem:[%s2 + $0xc0] sm:$0xff]
  %v402 = vld [vmem:[%s2 + $0xc8] sm:$0xff]
  %v403 = vld [vmem:[%s2 + $0xd0] sm:$0xff]
  %v404 = vld [vmem:[%s2 + $0xd8] sm:$0xff]
  %v405 = vld [vmem:[%s2 + $0xe0] sm:$0xff]
  %v406 = vld [vmem:[%s2 + $0xe8] sm:$0xff]
  %v407 = vld [vmem:[%s2 + $0xf0] sm:$0xff]
  %v408 = vld [vmem:[%s2 + $0xf8] sm:$0xff]
  %v409 = vld [vmem:[%s2 + $0x100] sm:$0xff]
  %v410 = vld [vmem:[%s2 + $0x108] sm:$0xff]
  %v411 = vld [vmem:[%s2 + $0x110] sm:$0xff]
  %v412 = vld [vmem:[%s2 + $0x118] sm:$0xff]
  %v413 = vld [vmem:[%s2 + $0x120] sm:$0xff]
  %v414 = vld [vmem:[%s2 + $0x128] sm:$0xff]
  %v415 = vld [vmem:[%s2 + $0x130] sm:$0xff]
  %v416 = vld [vmem:[%s2 + $0x138] sm:$0xff]
  %v417 = vld [vmem:[%s2 + $0x140] sm:$0xff]
  %v418 = vld [vmem:[%s2 + $0x148] sm:$0xff]
  %v419 = vld [vmem:[%s2 + $0x150] sm:$0xff]
  %v420 = vld [vmem:[%s2 + $0x158] sm:$0xff]
  %v421 = vld [vmem:[%s2 + $0x160] sm:$0xff]
  %v422 = vld [vmem:[%s2 + $0x168] sm:$0xff]
  %v423 = vld [vmem:[%s2 + $0x170] sm:$0xff]
  %v424 = vld [vmem:[%s2 + $0x178] sm:$0xff]
  %425 = vmatprep.subr.mxu0 %v423
  %426 = vmatpush1.msra.mxu0 %v422
  %427 = vmatprep.subr.mxu0 %v420
  %428 = vmatpush1.msra.mxu0 %v419
  %429 = vmatprep.subr.mxu0 %v417
  %430 = vmatpush1.msra.mxu0 %v416
  %431 = vmatprep.subr.mxu0 %v414
  %432 = vmatpush1.msra.mxu0 %v413
  %433 = vmatprep.subr.mxu0 %v411
  %434 = vmatpush1.msra.mxu0 %v410
  %435 = vmatprep.subr.mxu0 %v408
  %436 = vmatpush1.msra.mxu0 %v407
  %437 = vmatprep.subr.mxu0 %v405
  %438 = vmatpush1.msra.mxu0 %v404
  %439 = vmatprep.subr.mxu0 %v402
  %440 = vmatpush1.msra.mxu0 %v401
  %441 = vmatprep.subr.mxu0 %v399
  %442 = vmatpush1.msra.mxu0 %v398
  %443 = vmatprep.subr.mxu0 %v396
  %444 = vmatpush1.msra.mxu0 %v395
  %445 = vmatprep.subr.mxu0 %v393
  %446 = vmatpush1.msra.mxu0 %v392
  %447 = vmatprep.subr.mxu0 %v390
  %448 = vmatpush1.msra.mxu0 %v389
  %449 = vmatprep.subr.mxu0 %v387
  %450 = vmatpush1.msra.mxu0 %v386
  %451 = vmatprep.subr.mxu0 %v384
  %452 = vmatpush1.msra.mxu0 %v383
  %453 = vmatprep.subr.mxu0 %v381
  %454 = vmatpush1.msra.mxu0 %v380
  %455 = vmatprep.subr.mxu0 %v378
  %456 = vmatpush1.msra.mxu0 %v377
  %457 = vmatprep.subr.mxu0 0.0
  %458 = vmatpush2.msra.mxu0 0.0
  %459 = vmatprep.subr.mxu0 0.0
  %460 = vmatpush2.msra.mxu0 0.0
  %461 = vmatprep.subr.mxu0 0.0
  %462 = vmatpush2.msra.mxu0 0.0
  %463 = vmatprep.subr.mxu0 0.0
  %464 = vmatpush2.msra.mxu0 0.0
  %465 = vmatprep.subr.mxu0 0.0
  %466 = vmatpush2.msra.mxu0 0.0
  %467 = vmatprep.subr.mxu0 0.0
  %468 = vmatpush2.msra.mxu0 0.0
  %469 = vmatprep.subr.mxu0 0.0
  %470 = vmatpush2.msra.mxu0 0.0
  %471 = vmatprep.subr.mxu0 0.0
  %472 = vmatpush2.msra.mxu0 0.0
  %473 = vmatprep.subr.mxu0 0.0
  %474 = vmatpush2.msra.mxu0 0.0
  %475 = vmatprep.subr.mxu0 0.0
  %476 = vmatpush2.msra.mxu0 0.0
  %477 = vmatprep.subr.mxu0 0.0
  %478 = vmatpush2.msra.mxu0 0.0
  %479 = vmatprep.subr.mxu0 0.0
  %480 = vmatpush2.msra.mxu0 0.0
  %481 = vmatprep.subr.mxu0 0.0
  %482 = vmatpush2.msra.mxu0 0.0
  %483 = vmatprep.subr.mxu0 0.0
  %484 = vmatpush2.msra.mxu0 0.0
  %485 = vmatprep.subr.mxu0 0.0
  %486 = vmatpush2.msra.mxu0 0.0
  %487 = vmatprep.subr.mxu0 0.0
  %488 = vmatpush2.msra.mxu0 0.0
  %489 = vmatprep.mubr.f32.mxu0 0.0
  %490 = vmatmul.mubr.f32.gmra.mxu0 %v79
  %v491 = vpop.f32.mrf.mxu0
  %v492 = vadd.f32 0.0, %v491
  %v493 = vpop.f32.mrf.mxu0
  %v494 = vadd.f32 0.0, %v493
  %495 = vmatprep.mubr.f32.mxu0 0.0
  %496 = vmatmul.mubr.f32.gmra.mxu0 %v80
  %v497 = vpop.f32.mrf.mxu0
  %v498 = vadd.f32 0.0, %v497
  %v499 = vpop.f32.mrf.mxu0
  %v500 = vadd.f32 0.0, %v499
  %501 = vmatprep.mubr.f32.mxu0 0.0
  %502 = vmatmul.mubr.f32.gmra.mxu0 %v81
  %v503 = vpop.f32.mrf.mxu0
  %v504 = vadd.f32 0.0, %v503
  %v505 = vpop.f32.mrf.mxu0
  %v506 = vadd.f32 0.0, %v505
  %507 = vmatprep.mubr.f32.mxu0 0.0
  %508 = vmatmul.mubr.f32.gmra.mxu0 %v82
  %v509 = vpop.f32.mrf.mxu0
  %v510 = vadd.f32 0.0, %v509
  %v511 = vpop.f32.mrf.mxu0
  %v512 = vadd.f32 0.0, %v511
  %513 = vmatprep.mubr.f32.mxu0 0.0
  %514 = vmatmul.mubr.f32.gmra.mxu0 %v83
  %v515 = vpop.f32.mrf.mxu0
  %v516 = vadd.f32 0.0, %v515
  %v517 = vpop.f32.mrf.mxu0
  %v518 = vadd.f32 0.0, %v517
  %519 = vmatprep.mubr.f32.mxu0 0.0
  %520 = vmatmul.mubr.f32.gmra.mxu0 %v84
  %v521 = vpop.f32.mrf.mxu0
  %v522 = vadd.f32 0.0, %v521
  %v523 = vpop.f32.mrf.mxu0
  %v524 = vadd.f32 0.0, %v523
  %525 = vmatprep.mubr.f32.mxu0 0.0
  %526 = vmatmul.mubr.f32.gmra.mxu0 %v85
  %v527 = vpop.f32.mrf.mxu0
  %v528 = vadd.f32 0.0, %v527
  %v529 = vpop.f32.mrf.mxu0
  %v530 = vadd.f32 0.0, %v529
  %531 = vmatprep.mubr.f32.mxu0 0.0
  %532 = vmatmul.mubr.f32.gmra.mxu0 %v86
  %v533 = vpop.f32.mrf.mxu0
  %v534 = vadd.f32 0.0, %v533
  %v535 = vpop.f32.mrf.mxu0
  %v536 = vadd.f32 0.0, %v535
  %537 = vdwg.mxu0
  %538 = vmatprep.subr.mxu0 0.0
  %539 = vmatpush1.msra.mxu0 %v424
  %540 = vmatprep.subr.mxu0 0.0
  %541 = vmatpush1.msra.mxu0 %v421
  %542 = vmatprep.subr.mxu0 0.0
  %543 = vmatpush1.msra.mxu0 %v418
  %544 = vmatprep.subr.mxu0 0.0
  %545 = vmatpush1.msra.mxu0 %v415
  %546 = vmatprep.subr.mxu0 0.0
  %547 = vmatpush1.msra.mxu0 %v412
  %548 = vmatprep.subr.mxu0 0.0
  %549 = vmatpush1.msra.mxu0 %v409
  %550 = vmatprep.subr.mxu0 0.0
  %551 = vmatpush1.msra.mxu0 %v406
  %552 = vmatprep.subr.mxu0 0.0
  %553 = vmatpush1.msra.mxu0 %v403
  %554 = vmatprep.subr.mxu0 0.0
  %555 = vmatpush1.msra.mxu0 %v400
  %556 = vmatprep.subr.mxu0 0.0
  %557 = vmatpush1.msra.mxu0 %v397
  %558 = vmatprep.subr.mxu0 0.0
  %559 = vmatpush1.msra.mxu0 %v394
  %560 = vmatprep.subr.mxu0 0.0
  %561 = vmatpush1.msra.mxu0 %v391
  %562 = vmatprep.subr.mxu0 0.0
  %563 = vmatpush1.msra.mxu0 %v388
  %564 = vmatprep.subr.mxu0 0.0
  %565 = vmatpush1.msra.mxu0 %v385
  %566 = vmatprep.subr.mxu0 0.0
  %567 = vmatpush1.msra.mxu0 %v382
  %568 = vmatprep.subr.mxu0 0.0
  %569 = vmatpush1.msra.mxu0 %v379
  %570 = vmatprep.subr.mxu0 0.0
  %571 = vmatpush2.msra.mxu0 0.0
  %572 = vmatprep.subr.mxu0 0.0
  %573 = vmatpush2.msra.mxu0 0.0
  %574 = vmatprep.subr.mxu0 0.0
  %575 = vmatpush2.msra.mxu0 0.0
  %576 = vmatprep.subr.mxu0 0.0
  %577 = vmatpush2.msra.mxu0 0.0
  %578 = vmatprep.subr.mxu0 0.0
  %579 = vmatpush2.msra.mxu0 0.0
  %580 = vmatprep.subr.mxu0 0.0
  %581 = vmatpush2.msra.mxu0 0.0
  %582 = vmatprep.subr.mxu0 0.0
  %583 = vmatpush2.msra.mxu0 0.0
  %584 = vmatprep.subr.mxu0 0.0
  %585 = vmatpush2.msra.mxu0 0.0
  %586 = vmatprep.subr.mxu0 0.0
  %587 = vmatpush2.msra.mxu0 0.0
  %588 = vmatprep.subr.mxu0 0.0
  %589 = vmatpush2.msra.mxu0 0.0
  %590 = vmatprep.subr.mxu0 0.0
  %591 = vmatpush2.msra.mxu0 0.0
  %592 = vmatprep.subr.mxu0 0.0
  %593 = vmatpush2.msra.mxu0 0.0
  %594 = vmatprep.subr.mxu0 0.0
  %595 = vmatpush2.msra.mxu0 0.0
  %596 = vmatprep.subr.mxu0 0.0
  %597 = vmatpush2.msra.mxu0 0.0
  %598 = vmatprep.subr.mxu0 0.0
  %599 = vmatpush2.msra.mxu0 0.0
  %600 = vmatprep.subr.mxu0 0.0
  %601 = vmatpush2.msra.mxu0 0.0
  %602 = vmatprep.mubr.f32.mxu0 0.0
  %603 = vmatmul.mubr.f32.gmra.mxu0 %v79
  %v604 = vpop.f32.mrf.mxu0
  %v605 = vadd.f32 0.0, %v604
  %v606 = vpop.f32.mrf.mxu0
  %607 = vmatprep.mubr.f32.mxu0 0.0
  %608 = vmatmul.mubr.f32.gmra.mxu0 %v80
  %v609 = vpop.f32.mrf.mxu0
  %v610 = vadd.f32 0.0, %v609
  %v611 = vpop.f32.mrf.mxu0
  %612 = vmatprep.mubr.f32.mxu0 0.0
  %613 = vmatmul.mubr.f32.gmra.mxu0 %v81
  %v614 = vpop.f32.mrf.mxu0
  %v615 = vadd.f32 0.0, %v614
  %v616 = vpop.f32.mrf.mxu0
  %617 = vmatprep.mubr.f32.mxu0 0.0
  %618 = vmatmul.mubr.f32.gmra.mxu0 %v82
  %v619 = vpop.f32.mrf.mxu0
  %v620 = vadd.f32 0.0, %v619
  %v621 = vpop.f32.mrf.mxu0
  %622 = vmatprep.mubr.f32.mxu0 0.0
  %623 = vmatmul.mubr.f32.gmra.mxu0 %v83
  %v624 = vpop.f32.mrf.mxu0
  %v625 = vadd.f32 0.0, %v624
  %v626 = vpop.f32.mrf.mxu0
  %627 = vmatprep.mubr.f32.mxu0 0.0
  %628 = vmatmul.mubr.f32.gmra.mxu0 %v84
  %v629 = vpop.f32.mrf.mxu0
  %v630 = vadd.f32 0.0, %v629
  %v631 = vpop.f32.mrf.mxu0
  %632 = vmatprep.mubr.f32.mxu0 0.0
  %633 = vmatmul.mubr.f32.gmra.mxu0 %v85
  %v634 = vpop.f32.mrf.mxu0
  %v635 = vadd.f32 0.0, %v634
  %v636 = vpop.f32.mrf.mxu0
  %637 = vmatprep.mubr.f32.mxu0 0.0
  %638 = vmatmul.mubr.f32.gmra.mxu0 %v86
  %v639 = vpop.f32.mrf.mxu0
  %v640 = vadd.f32 0.0, %v639
  %v641 = vpop.f32.mrf.mxu0
  %642 = vdwg.mxu0
  %643 = vst [vmem:[#allocation3] sm:$0xff] %v492
  %644 = vst [vmem:[#allocation3 + $0x8] sm:$0xff] %v494
  %645 = vst [vmem:[#allocation3 + $0x10] sm:$0xff] %v605
  %646 = vst [vmem:[#allocation3 + $0x18] sm:$0xff] %v498
  %647 = vst [vmem:[#allocation3 + $0x20] sm:$0xff] %v500
  %648 = vst [vmem:[#allocation3 + $0x28] sm:$0xff] %v610
  %649 = vst [vmem:[#allocation3 + $0x30] sm:$0xff] %v504
  %650 = vst [vmem:[#allocation3 + $0x38] sm:$0xff] %v506
  %651 = vst [vmem:[#allocation3 + $0x40] sm:$0xff] %v615
  %652 = vst [vmem:[#allocation3 + $0x48] sm:$0xff] %v510
  %653 = vst [vmem:[#allocation3 + $0x50] sm:$0xff] %v512
  %654 = vst [vmem:[#allocation3 + $0x58] sm:$0xff] %v620
  %655 = vst [vmem:[#allocation3 + $0x60] sm:$0xff] %v516
  %656 = vst [vmem:[#allocation3 + $0x68] sm:$0xff] %v518
  %657 = vst [vmem:[#allocation3 + $0x70] sm:$0xff] %v625
  %658 = vst [vmem:[#allocation3 + $0x78] sm:$0xff] %v522
  %659 = vst [vmem:[#allocation3 + $0x80] sm:$0xff] %v524
  %660 = vst [vmem:[#allocation3 + $0x88] sm:$0xff] %v630
  %661 = vst [vmem:[#allocation3 + $0x90] sm:$0xff] %v528
  %662 = vst [vmem:[#allocation3 + $0x98] sm:$0xff] %v530
  %663 = vst [vmem:[#allocation3 + $0xa0] sm:$0xff] %v635
  %664 = vst [vmem:[#allocation3 + $0xa8] sm:$0xff] %v534
  %665 = vst [vmem:[#allocation3 + $0xb0] sm:$0xff] %v536
  %666 = vst [vmem:[#allocation3 + $0xb8] sm:$0xff] %v640
  %v667 = vld [vmem:[%s4] sm:$0xff]
  %v668 = vld [vmem:[%s5] sm:$0xff]
  %v669 = vld [vmem:[#allocation2] sm:$0xff]
  %v670 = vld [vmem:[#allocation2 + $0x8] sm:$0xff]
  %v671 = vld [vmem:[#allocation2 + $0x10] sm:$0xff]
  %v672 = vld [vmem:[#allocation3 + $0xa8] sm:$0xff]
  %v673 = vld [vmem:[#allocation3 + $0xb0] sm:$0xff]
  %v674 = vld [vmem:[#allocation3 + $0xb8] sm:$0xff]
  %v675 = vld [vmem:[%s3] sm:$0xff]
  %v676 = vld [vmem:[%s3 + $0x8] sm:$0xff]
  %v677 = vld [vmem:[%s3 + $0x10] sm:$0xff]
  %v678 = vld [vmem:[%s3 + $0x18] sm:$0xff]
  %v679 = vld [vmem:[%s3 + $0x20] sm:$0xff]
  %v680 = vld [vmem:[%s3 + $0x28] sm:$0xff]
  %v681 = vld [vmem:[%s3 + $0x30] sm:$0xff]
  %v682 = vld [vmem:[%s3 + $0x38] sm:$0xff]
  %v683 = vld [vmem:[%s3 + $0x40] sm:$0xff]
  %v684 = vld [vmem:[%s3 + $0x48] sm:$0xff]
  %v685 = vld [vmem:[%s3 + $0x50] sm:$0xff]
  %v686 = vld [vmem:[%s3 + $0x58] sm:$0xff]
  %v687 = vld [vmem:[%s3 + $0x60] sm:$0xff]
  %v688 = vld [vmem:[%s3 + $0x68] sm:$0xff]
  %v689 = vld [vmem:[%s3 + $0x70] sm:$0xff]
  %v690 = vld [vmem:[%s3 + $0x78] sm:$0xff]
  %v691 = vld [vmem:[%s3 + $0x80] sm:$0xff]
  %v692 = vld [vmem:[%s3 + $0x88] sm:$0xff]
  %v693 = vld [vmem:[%s3 + $0x90] sm:$0xff]
  %v694 = vld [vmem:[%s3 + $0x98] sm:$0xff]
  %v695 = vld [vmem:[%s3 + $0xa0] sm:$0xff]
  %v696 = vld [vmem:[%s3 + $0xa8] sm:$0xff]
  %v697 = vld [vmem:[%s3 + $0xb0] sm:$0xff]
  %v698 = vld [vmem:[%s3 + $0xb8] sm:$0xff]
  %v699 = vld [vmem:[%s3 + $0xc0] sm:$0xff]
  %v700 = vld [vmem:[%s3 + $0xc8] sm:$0xff]
  %v701 = vld [vmem:[%s3 + $0xd0] sm:$0xff]
  %v702 = vld [vmem:[%s3 + $0xd8] sm:$0xff]
  %v703 = vld [vmem:[%s3 + $0xe0] sm:$0xff]
  %v704 = vld [vmem:[%s3 + $0xe8] sm:$0xff]
  %v705 = vld [vmem:[%s3 + $0xf0] sm:$0xff]
  %v706 = vld [vmem:[%s3 + $0xf8] sm:$0xff]
  %v707 = vld [vmem:[%s3 + $0x100] sm:$0xff]
  %v708 = vld [vmem:[%s3 + $0x108] sm:$0xff]
  %v709 = vld [vmem:[%s3 + $0x110] sm:$0xff]
  %v710 = vld [vmem:[%s3 + $0x118] sm:$0xff]
  %v711 = vld [vmem:[%s3 + $0x120] sm:$0xff]
  %v712 = vld [vmem:[%s3 + $0x128] sm:$0xff]
  %v713 = vld [vmem:[%s3 + $0x130] sm:$0xff]
  %v714 = vld [vmem:[%s3 + $0x138] sm:$0xff]
  %v715 = vld [vmem:[%s3 + $0x140] sm:$0xff]
  %v716 = vld [vmem:[%s3 + $0x148] sm:$0xff]
  %v717 = vld [vmem:[%s3 + $0x150] sm:$0xff]
  %v718 = vld [vmem:[%s3 + $0x158] sm:$0xff]
  %v719 = vld [vmem:[%s3 + $0x160] sm:$0xff]
  %v720 = vld [vmem:[%s3 + $0x168] sm:$0xff]
  %v721 = vld [vmem:[%s3 + $0x170] sm:$0xff]
  %v722 = vld [vmem:[%s3 + $0x178] sm:$0xff]
  %v723 = vld [vmem:[%s3 + $0x180] sm:$0xff]
  %v724 = vld [vmem:[%s3 + $0x188] sm:$0xff]
  %v725 = vld [vmem:[%s3 + $0x190] sm:$0xff]
  %v726 = vld [vmem:[%s3 + $0x198] sm:$0xff]
  %v727 = vld [vmem:[%s3 + $0x1a0] sm:$0xff]
  %v728 = vld [vmem:[%s3 + $0x1a8] sm:$0xff]
  %v729 = vld [vmem:[%s3 + $0x1b0] sm:$0xff]
  %v730 = vld [vmem:[%s3 + $0x1b8] sm:$0xff]
  %v731 = vld [vmem:[%s3 + $0x1c0] sm:$0xff]
  %v732 = vld [vmem:[%s3 + $0x1c8] sm:$0xff]
  %v733 = vld [vmem:[%s3 + $0x1d0] sm:$0xff]
  %v734 = vld [vmem:[%s3 + $0x1d8] sm:$0xff]
  %v735 = vld [vmem:[%s3 + $0x1e0] sm:$0xff]
  %v736 = vld [vmem:[%s3 + $0x1e8] sm:$0xff]
  %v737 = vld [vmem:[%s3 + $0x1f0] sm:$0xff]
  %v738 = vld [vmem:[%s3 + $0x1f8] sm:$0xff]
  %v739 = vld [vmem:[%s3 + $0x200] sm:$0xff]
  %v740 = vld [vmem:[%s3 + $0x208] sm:$0xff]
  %v741 = vld [vmem:[%s3 + $0x210] sm:$0xff]
  %v742 = vld [vmem:[%s3 + $0x218] sm:$0xff]
  %v743 = vld [vmem:[%s3 + $0x220] sm:$0xff]
  %v744 = vld [vmem:[%s3 + $0x228] sm:$0xff]
  %v745 = vld [vmem:[%s3 + $0x230] sm:$0xff]
  %v746 = vld [vmem:[%s3 + $0x238] sm:$0xff]
  %v747 = vld [vmem:[%s3 + $0x240] sm:$0xff]
  %v748 = vld [vmem:[%s3 + $0x248] sm:$0xff]
  %v749 = vld [vmem:[%s3 + $0x250] sm:$0xff]
  %v750 = vld [vmem:[%s3 + $0x258] sm:$0xff]
  %v751 = vld [vmem:[%s3 + $0x260] sm:$0xff]
  %v752 = vld [vmem:[%s3 + $0x268] sm:$0xff]
  %v753 = vld [vmem:[%s3 + $0x270] sm:$0xff]
  %v754 = vld [vmem:[%s3 + $0x278] sm:$0xff]
  %v755 = vld [vmem:[%s3 + $0x280] sm:$0xff]
  %v756 = vld [vmem:[%s3 + $0x288] sm:$0xff]
  %v757 = vld [vmem:[%s3 + $0x290] sm:$0xff]
  %v758 = vld [vmem:[%s3 + $0x298] sm:$0xff]
  %v759 = vld [vmem:[%s3 + $0x2a0] sm:$0xff]
  %v760 = vld [vmem:[%s3 + $0x2a8] sm:$0xff]
  %v761 = vld [vmem:[%s3 + $0x2b0] sm:$0xff]
  %v762 = vld [vmem:[%s3 + $0x2b8] sm:$0xff]
  %v763 = vld [vmem:[%s3 + $0x2c0] sm:$0xff]
  %v764 = vld [vmem:[%s3 + $0x2c8] sm:$0xff]
  %v765 = vld [vmem:[%s3 + $0x2d0] sm:$0xff]
  %v766 = vld [vmem:[%s3 + $0x2d8] sm:$0xff]
  %v767 = vld [vmem:[%s3 + $0x2e0] sm:$0xff]
  %v768 = vld [vmem:[%s3 + $0x2e8] sm:$0xff]
  %v769 = vld [vmem:[%s3 + $0x2f0] sm:$0xff]
  %v770 = vld [vmem:[%s3 + $0x2f8] sm:$0xff]
  %v771 = vld [vmem:[%s3 + $0x300] sm:$0xff]
  %v772 = vld [vmem:[%s3 + $0x308] sm:$0xff]
  %v773 = vld [vmem:[%s3 + $0x310] sm:$0xff]
  %v774 = vld [vmem:[%s3 + $0x318] sm:$0xff]
  %v775 = vld [vmem:[%s3 + $0x320] sm:$0xff]
  %v776 = vld [vmem:[%s3 + $0x328] sm:$0xff]
  %v777 = vld [vmem:[%s3 + $0x330] sm:$0xff]
  %v778 = vld [vmem:[%s3 + $0x338] sm:$0xff]
  %v779 = vld [vmem:[%s3 + $0x340] sm:$0xff]
  %v780 = vld [vmem:[%s3 + $0x348] sm:$0xff]
  %v781 = vld [vmem:[%s3 + $0x350] sm:$0xff]
  %v782 = vld [vmem:[%s3 + $0x358] sm:$0xff]
  %v783 = vld [vmem:[%s3 + $0x360] sm:$0xff]
  %v784 = vld [vmem:[%s3 + $0x368] sm:$0xff]
  %v785 = vld [vmem:[%s3 + $0x370] sm:$0xff]
  %v786 = vld [vmem:[%s3 + $0x378] sm:$0xff]
  %v787 = vld [vmem:[%s3 + $0x380] sm:$0xff]
  %v788 = vld [vmem:[%s3 + $0x388] sm:$0xff]
  %v789 = vld [vmem:[%s3 + $0x390] sm:$0xff]
  %v790 = vld [vmem:[%s3 + $0x398] sm:$0xff]
  %v791 = vld [vmem:[%s3 + $0x3a0] sm:$0xff]
  %v792 = vld [vmem:[%s3 + $0x3a8] sm:$0xff]
  %v793 = vld [vmem:[%s3 + $0x3b0] sm:$0xff]
  %v794 = vld [vmem:[%s3 + $0x3b8] sm:$0xff]
  %v795 = vld [vmem:[%s3 + $0x3c0] sm:$0xff]
  %v796 = vld [vmem:[%s3 + $0x3c8] sm:$0xff]
  %v797 = vld [vmem:[%s3 + $0x3d0] sm:$0xff]
  %v798 = vld [vmem:[%s3 + $0x3d8] sm:$0xff]
  %v799 = vld [vmem:[%s3 + $0x3e0] sm:$0xff]
  %v800 = vld [vmem:[%s3 + $0x3e8] sm:$0xff]
  %v801 = vld [vmem:[%s3 + $0x3f0] sm:$0xff]
  %v802 = vld [vmem:[%s3 + $0x3f8] sm:$0xff]
  %v803 = vld [vmem:[%s3 + $0x400] sm:$0xff]
  %v804 = vld [vmem:[%s3 + $0x408] sm:$0xff]
  %v805 = vld [vmem:[%s3 + $0x410] sm:$0xff]
  %v806 = vld [vmem:[%s3 + $0x418] sm:$0xff]
  %v807 = vld [vmem:[%s3 + $0x420] sm:$0xff]
  %v808 = vld [vmem:[%s3 + $0x428] sm:$0xff]
  %v809 = vld [vmem:[%s3 + $0x430] sm:$0xff]
  %v810 = vld [vmem:[%s3 + $0x438] sm:$0xff]
  %v811 = vld [vmem:[%s3 + $0x440] sm:$0xff]
  %v812 = vld [vmem:[%s3 + $0x448] sm:$0xff]
  %v813 = vld [vmem:[%s3 + $0x450] sm:$0xff]
  %v814 = vld [vmem:[%s3 + $0x458] sm:$0xff]
  %v815 = vld [vmem:[%s3 + $0x460] sm:$0xff]
  %v816 = vld [vmem:[%s3 + $0x468] sm:$0xff]
  %v817 = vld [vmem:[%s3 + $0x470] sm:$0xff]
  %v818 = vld [vmem:[%s3 + $0x478] sm:$0xff]
  %v819 = vld [vmem:[%s3 + $0x480] sm:$0xff]
  %v820 = vld [vmem:[%s3 + $0x488] sm:$0xff]
  %v821 = vld [vmem:[%s3 + $0x490] sm:$0xff]
  %v822 = vld [vmem:[%s3 + $0x498] sm:$0xff]
  %v823 = vld [vmem:[%s3 + $0x4a0] sm:$0xff]
  %v824 = vld [vmem:[%s3 + $0x4a8] sm:$0xff]
  %v825 = vld [vmem:[%s3 + $0x4b0] sm:$0xff]
  %v826 = vld [vmem:[%s3 + $0x4b8] sm:$0xff]
  %v827 = vld [vmem:[%s3 + $0x4c0] sm:$0xff]
  %v828 = vld [vmem:[%s3 + $0x4c8] sm:$0xff]
  %v829 = vld [vmem:[%s3 + $0x4d0] sm:$0xff]
  %v830 = vld [vmem:[%s3 + $0x4d8] sm:$0xff]
  %v831 = vld [vmem:[%s3 + $0x4e0] sm:$0xff]
  %v832 = vld [vmem:[%s3 + $0x4e8] sm:$0xff]
  %v833 = vld [vmem:[%s3 + $0x4f0] sm:$0xff]
  %v834 = vld [vmem:[%s3 + $0x4f8] sm:$0xff]
  %v835 = vld [vmem:[%s3 + $0x500] sm:$0xff]
  %v836 = vld [vmem:[%s3 + $0x508] sm:$0xff]
  %v837 = vld [vmem:[%s3 + $0x510] sm:$0xff]
  %v838 = vld [vmem:[%s3 + $0x518] sm:$0xff]
  %v839 = vld [vmem:[%s3 + $0x520] sm:$0xff]
  %v840 = vld [vmem:[%s3 + $0x528] sm:$0xff]
  %v841 = vld [vmem:[%s3 + $0x530] sm:$0xff]
  %v842 = vld [vmem:[%s3 + $0x538] sm:$0xff]
  %v843 = vld [vmem:[%s3 + $0x540] sm:$0xff]
  %v844 = vld [vmem:[%s3 + $0x548] sm:$0xff]
  %v845 = vld [vmem:[%s3 + $0x550] sm:$0xff]
  %v846 = vld [vmem:[%s3 + $0x558] sm:$0xff]
  %v847 = vld [vmem:[%s3 + $0x560] sm:$0xff]
  %v848 = vld [vmem:[%s3 + $0x568] sm:$0xff]
  %v849 = vld [vmem:[%s3 + $0x570] sm:$0xff]
  %v850 = vld [vmem:[%s3 + $0x578] sm:$0xff]
  %v851 = vld [vmem:[%s3 + $0x580] sm:$0xff]
  %v852 = vld [vmem:[%s3 + $0x588] sm:$0xff]
  %v853 = vld [vmem:[%s3 + $0x590] sm:$0xff]
  %v854 = vld [vmem:[%s3 + $0x598] sm:$0xff]
  %v855 = vld [vmem:[%s3 + $0x5a0] sm:$0xff]
  %v856 = vld [vmem:[%s3 + $0x5a8] sm:$0xff]
  %v857 = vld [vmem:[%s3 + $0x5b0] sm:$0xff]
  %v858 = vld [vmem:[%s3 + $0x5b8] sm:$0xff]
  %v859 = vld [vmem:[%s3 + $0x5c0] sm:$0xff]
  %v860 = vld [vmem:[%s3 + $0x5c8] sm:$0xff]
  %v861 = vld [vmem:[%s3 + $0x5d0] sm:$0xff]
  %v862 = vld [vmem:[%s3 + $0x5d8] sm:$0xff]
  %v863 = vld [vmem:[%s3 + $0x5e0] sm:$0xff]
  %v864 = vld [vmem:[%s3 + $0x5e8] sm:$0xff]
  %v865 = vld [vmem:[%s3 + $0x5f0] sm:$0xff]
  %v866 = vld [vmem:[%s3 + $0x5f8] sm:$0xff]
  %867 = vmatprep.subr.mxu0 %v766
  %868 = vmatpush1.msra.mxu0 %v765
  %869 = vmatprep.subr.mxu0 %v760
  %870 = vmatpush1.msra.mxu0 %v759
  %871 = vmatprep.subr.mxu0 %v754
  %872 = vmatpush1.msra.mxu0 %v753
  %873 = vmatprep.subr.mxu0 %v748
  %874 = vmatpush1.msra.mxu0 %v747
  %875 = vmatprep.subr.mxu0 %v742
  %876 = vmatpush1.msra.mxu0 %v741
  %877 = vmatprep.subr.mxu0 %v736
  %878 = vmatpush1.msra.mxu0 %v735
  %879 = vmatprep.subr.mxu0 %v730
  %880 = vmatpush1.msra.mxu0 %v729
  %881 = vmatprep.subr.mxu0 %v724
  %882 = vmatpush1.msra.mxu0 %v723
  %883 = vmatprep.subr.mxu0 %v718
  %884 = vmatpush1.msra.mxu0 %v717
  %885 = vmatprep.subr.mxu0 %v712
  %886 = vmatpush1.msra.mxu0 %v711
  %887 = vmatprep.subr.mxu0 %v706
  %888 = vmatpush1.msra.mxu0 %v705
  %889 = vmatprep.subr.mxu0 %v700
  %890 = vmatpush1.msra.mxu0 %v699
  %891 = vmatprep.subr.mxu0 %v694
  %892 = vmatpush1.msra.mxu0 %v693
  %893 = vmatprep.subr.mxu0 %v688
  %894 = vmatpush1.msra.mxu0 %v687
  %895 = vmatprep.subr.mxu0 %v682
  %896 = vmatpush1.msra.mxu0 %v681
  %897 = vmatprep.subr.mxu0 %v676
  %898 = vmatpush1.msra.mxu0 %v675
  %899 = vmatprep.subr.mxu0 %v862
  %900 = vmatpush2.msra.mxu0 %v861
  %901 = vmatprep.subr.mxu0 %v856
  %902 = vmatpush2.msra.mxu0 %v855
  %903 = vmatprep.subr.mxu0 %v850
  %904 = vmatpush2.msra.mxu0 %v849
  %905 = vmatprep.subr.mxu0 %v844
  %906 = vmatpush2.msra.mxu0 %v843
  %907 = vmatprep.subr.mxu0 %v838
  %908 = vmatpush2.msra.mxu0 %v837
  %909 = vmatprep.subr.mxu0 %v832
  %910 = vmatpush2.msra.mxu0 %v831
  %911 = vmatprep.subr.mxu0 %v826
  %912 = vmatpush2.msra.mxu0 %v825
  %913 = vmatprep.subr.mxu0 %v820
  %914 = vmatpush2.msra.mxu0 %v819
  %915 = vmatprep.subr.mxu0 %v814
  %916 = vmatpush2.msra.mxu0 %v813
  %917 = vmatprep.subr.mxu0 %v808
  %918 = vmatpush2.msra.mxu0 %v807
  %919 = vmatprep.subr.mxu0 %v802
  %920 = vmatpush2.msra.mxu0 %v801
  %921 = vmatprep.subr.mxu0 %v796
  %922 = vmatpush2.msra.mxu0 %v795
  %923 = vmatprep.subr.mxu0 %v790
  %924 = vmatpush2.msra.mxu0 %v789
  %925 = vmatprep.subr.mxu0 %v784
  %926 = vmatpush2.msra.mxu0 %v783
  %927 = vmatprep.subr.mxu0 %v778
  %928 = vmatpush2.msra.mxu0 %v777
  %929 = vmatprep.subr.mxu0 %v772
  %930 = vmatpush2.msra.mxu0 %v771
  %931 = vmatprep.mubr.f32.mxu0 0.0
  %932 = vmatmul.mubr.f32.gmra.mxu0 0.0
  %v933 = vpop.f32.mrf.mxu0
  %v934 = vadd.f32 0.0, %v933
  %v935 = vpop.f32.mrf.mxu0
  %v936 = vadd.f32 0.0, %v935
  %937 = vdwg.mxu0
  %938 = vmatprep.subr.mxu0 %v768
  %939 = vmatpush1.msra.mxu0 %v767
  %940 = vmatprep.subr.mxu0 %v762
  %941 = vmatpush1.msra.mxu0 %v761
  %942 = vmatprep.subr.mxu0 %v756
  %943 = vmatpush1.msra.mxu0 %v755
  %944 = vmatprep.subr.mxu0 %v750
  %945 = vmatpush1.msra.mxu0 %v749
  %946 = vmatprep.subr.mxu0 %v744
  %947 = vmatpush1.msra.mxu0 %v743
  %948 = vmatprep.subr.mxu0 %v738
  %949 = vmatpush1.msra.mxu0 %v737
  %950 = vmatprep.subr.mxu0 %v732
  %951 = vmatpush1.msra.mxu0 %v731
  %952 = vmatprep.subr.mxu0 %v726
  %953 = vmatpush1.msra.mxu0 %v725
  %954 = vmatprep.subr.mxu0 %v720
  %955 = vmatpush1.msra.mxu0 %v719
  %956 = vmatprep.subr.mxu0 %v714
  %957 = vmatpush1.msra.mxu0 %v713
  %958 = vmatprep.subr.mxu0 %v708
  %959 = vmatpush1.msra.mxu0 %v707
  %960 = vmatprep.subr.mxu0 %v702
  %961 = vmatpush1.msra.mxu0 %v701
  %962 = vmatprep.subr.mxu0 %v696
  %963 = vmatpush1.msra.mxu0 %v695
  %964 = vmatprep.subr.mxu0 %v690
  %965 = vmatpush1.msra.mxu0 %v689
  %966 = vmatprep.subr.mxu0 %v684
  %967 = vmatpush1.msra.mxu0 %v683
  %968 = vmatprep.subr.mxu0 %v678
  %969 = vmatpush1.msra.mxu0 %v677
  %970 = vmatprep.subr.mxu0 %v864
  %971 = vmatpush2.msra.mxu0 %v863
  %972 = vmatprep.subr.mxu0 %v858
  %973 = vmatpush2.msra.mxu0 %v857
  %974 = vmatprep.subr.mxu0 %v852
  %975 = vmatpush2.msra.mxu0 %v851
  %976 = vmatprep.subr.mxu0 %v846
  %977 = vmatpush2.msra.mxu0 %v845
  %978 = vmatprep.subr.mxu0 %v840
  %979 = vmatpush2.msra.mxu0 %v839
  %980 = vmatprep.subr.mxu0 %v834
  %981 = vmatpush2.msra.mxu0 %v833
  %982 = vmatprep.subr.mxu0 %v828
  %983 = vmatpush2.msra.mxu0 %v827
  %984 = vmatprep.subr.mxu0 %v822
  %985 = vmatpush2.msra.mxu0 %v821
  %986 = vmatprep.subr.mxu0 %v816
  %987 = vmatpush2.msra.mxu0 %v815
  %988 = vmatprep.subr.mxu0 %v810
  %989 = vmatpush2.msra.mxu0 %v809
  %990 = vmatprep.subr.mxu0 %v804
  %991 = vmatpush2.msra.mxu0 %v803
  %992 = vmatprep.subr.mxu0 %v798
  %993 = vmatpush2.msra.mxu0 %v797
  %994 = vmatprep.subr.mxu0 %v792
  %995 = vmatpush2.msra.mxu0 %v791
  %996 = vmatprep.subr.mxu0 %v786
  %997 = vmatpush2.msra.mxu0 %v785
  %998 = vmatprep.subr.mxu0 %v780
  %999 = vmatpush2.msra.mxu0 %v779
  %1000 = vmatprep.subr.mxu0 %v774
  %1001 = vmatpush2.msra.mxu0 %v773
  %1002 = vmatprep.mubr.f32.mxu0 0.0
  %1003 = vmatmul.mubr.f32.gmra.mxu0 0.0
  %v1004 = vpop.f32.mrf.mxu0
  %v1005 = vadd.f32 0.0, %v1004
  %v1006 = vpop.f32.mrf.mxu0
  %v1007 = vadd.f32 0.0, %v1006
  %1008 = vdwg.mxu0
  %1009 = vmatprep.subr.mxu0 %v770
  %1010 = vmatpush1.msra.mxu0 %v769
  %1011 = vmatprep.subr.mxu0 %v764
  %1012 = vmatpush1.msra.mxu0 %v763
  %1013 = vmatprep.subr.mxu0 %v758
  %1014 = vmatpush1.msra.mxu0 %v757
  %1015 = vmatprep.subr.mxu0 %v752
  %1016 = vmatpush1.msra.mxu0 %v751
  %1017 = vmatprep.subr.mxu0 %v746
  %1018 = vmatpush1.msra.mxu0 %v745
  %1019 = vmatprep.subr.mxu0 %v740
  %1020 = vmatpush1.msra.mxu0 %v739
  %1021 = vmatprep.subr.mxu0 %v734
  %1022 = vmatpush1.msra.mxu0 %v733
  %1023 = vmatprep.subr.mxu0 %v728
  %1024 = vmatpush1.msra.mxu0 %v727
  %1025 = vmatprep.subr.mxu0 %v722
  %1026 = vmatpush1.msra.mxu0 %v721
  %1027 = vmatprep.subr.mxu0 %v716
  %1028 = vmatpush1.msra.mxu0 %v715
  %1029 = vmatprep.subr.mxu0 %v710
  %1030 = vmatpush1.msra.mxu0 %v709
  %1031 = vmatprep.subr.mxu0 %v704
  %1032 = vmatpush1.msra.mxu0 %v703
  %1033 = vmatprep.subr.mxu0 %v698
  %1034 = vmatpush1.msra.mxu0 %v697
  %1035 = vmatprep.subr.mxu0 %v692
  %1036 = vmatpush1.msra.mxu0 %v691
  %1037 = vmatprep.subr.mxu0 %v686
  %1038 = vmatpush1.msra.mxu0 %v685
  %1039 = vmatprep.subr.mxu0 %v680
  %1040 = vmatpush1.msra.mxu0 %v679
  %1041 = vmatprep.subr.mxu0 %v866
  %1042 = vmatpush2.msra.mxu0 %v865
  %1043 = vmatprep.subr.mxu0 %v860
  %1044 = vmatpush2.msra.mxu0 %v859
  %1045 = vmatprep.subr.mxu0 %v854
  %1046 = vmatpush2.msra.mxu0 %v853
  %1047 = vmatprep.subr.mxu0 %v848
  %1048 = vmatpush2.msra.mxu0 %v847
  %1049 = vmatprep.subr.mxu0 %v842
  %1050 = vmatpush2.msra.mxu0 %v841
  %1051 = vmatprep.subr.mxu0 %v836
  %1052 = vmatpush2.msra.mxu0 %v835
  %1053 = vmatprep.subr.mxu0 %v830
  %1054 = vmatpush2.msra.mxu0 %v829
  %1055 = vmatprep.subr.mxu0 %v824
  %1056 = vmatpush2.msra.mxu0 %v823
  %1057 = vmatprep.subr.mxu0 %v818
  %1058 = vmatpush2.msra.mxu0 %v817
  %1059 = vmatprep.subr.mxu0 %v812
  %1060 = vmatpush2.msra.mxu0 %v811
  %1061 = vmatprep.subr.mxu0 %v806
  %1062 = vmatpush2.msra.mxu0 %v805
  %1063 = vmatprep.subr.mxu0 %v800
  %1064 = vmatpush2.msra.mxu0 %v799
  %1065 = vmatprep.subr.mxu0 %v794
  %1066 = vmatpush2.msra.mxu0 %v793
  %1067 = vmatprep.subr.mxu0 %v788
  %1068 = vmatpush2.msra.mxu0 %v787
  %1069 = vmatprep.subr.mxu0 %v782
  %1070 = vmatpush2.msra.mxu0 %v781
  %1071 = vmatprep.subr.mxu0 %v776
  %1072 = vmatpush2.msra.mxu0 %v775
  %1073 = vmatprep.mubr.f32.mxu0 0.0
  %1074 = vmatmul.mubr.f32.gmra.mxu0 0.0
  %v1075 = vpop.f32.mrf.mxu0
  %v1076 = vadd.f32 0.0, %v1075
  %v1077 = vpop.f32.mrf.mxu0
  %v1078 = vadd.f32 0.0, %v1077
  %1079 = vdwg.mxu0
  %v1080 = vadd.f32 %v669, %v934
  %v1081 = vadd.f32 %v670, %v936
  %v1082 = vxor.u32 %v1080, 2147483648
  %v1083 = vxor.u32 %v1081, 2147483648
  %v1084 = vmul.f32 %v1082, 1.442695
  %v1085 = vpow.pop %v1084
  %v1086 = vmul.f32 %v1083, 1.442695
  %v1087 = vpow.pop %v1086
  %v1088 = vadd.f32 %v1085, 1.0
  %v1089 = vadd.f32 %v1087, 1.0
  %v1090 = vrcp.pop %v1088
  %v1091 = vmul.f32 1.0, %v1090
  %v1092 = vrcp.pop %v1089
  %v1093 = vmul.f32 1.0, %v1092
  %v1094 = vadd.f32 %v1005, %v667
  %v1095 = vmul.f32 %v1091, %v1094
  %v1096 = vadd.f32 %v671, %v1095
  %v1097 = vtanh.pop %v1096
  %v1098 = vsub.f32 1.0, %v1093
  %v1099 = vmul.f32 %v1098, %v1097
  %v1100 = vmul.f32 %v1093, 0.0
  %v1101 = vadd.f32 %v1099, %v1100
  %v1102 = vadd.f32 %v672, %v1007
  %v1103 = vadd.f32 %v673, %v1076
  %v1104 = vxor.u32 %v1102, 2147483648
  %v1105 = vxor.u32 %v1103, 2147483648
  %v1106 = vmul.f32 %v1104, 1.442695
  %v1107 = vpow.pop %v1106
  %v1108 = vmul.f32 %v1105, 1.442695
  %v1109 = vpow.pop %v1108
  %v1110 = vadd.f32 %v1107, 1.0
  %v1111 = vadd.f32 %v1109, 1.0
  %v1112 = vrcp.pop %v1110
  %v1113 = vmul.f32 1.0, %v1112
  %v1114 = vrcp.pop %v1111
  %v1115 = vmul.f32 1.0, %v1114
  %v1116 = vadd.f32 %v1078, %v668
  %v1117 = vmul.f32 %v1113, %v1116
  %v1118 = vadd.f32 %v674, %v1117
  %v1119 = vtanh.pop %v1118
  %v1120 = vsub.f32 1.0, %v1115
  %v1121 = vmul.f32 %v1120, %v1119
  %v1122 = vmul.f32 %v1115, 0.0
  %v1123 = vadd.f32 %v1121, %v1122
  %v1124 = vld [vmem:[#allocation2 + $0x18] sm:$0xff]
  %v1125 = vld [vmem:[#allocation2 + $0x20] sm:$0xff]
  %v1126 = vld [vmem:[#allocation2 + $0x28] sm:$0xff]
  %v1127 = vld [vmem:[#allocation3 + $0x90] sm:$0xff]
  %v1128 = vld [vmem:[#allocation3 + $0x98] sm:$0xff]
  %v1129 = vld [vmem:[#allocation3 + $0xa0] sm:$0xff]
  %1130 = vmatprep.subr.mxu0 %v766
  %1131 = vmatpush1.msra.mxu0 %v765
  %1132 = vmatprep.subr.mxu0 %v760
  %1133 = vmatpush1.msra.mxu0 %v759
  %1134 = vmatprep.subr.mxu0 %v754
  %1135 = vmatpush1.msra.mxu0 %v753
  %1136 = vmatprep.subr.mxu0 %v748
  %1137 = vmatpush1.msra.mxu0 %v747
  %1138 = vmatprep.subr.mxu0 %v742
  %1139 = vmatpush1.msra.mxu0 %v741
  %1140 = vmatprep.subr.mxu0 %v736
  %1141 = vmatpush1.msra.mxu0 %v735
  %1142 = vmatprep.subr.mxu0 %v730
  %1143 = vmatpush1.msra.mxu0 %v729
  %1144 = vmatprep.subr.mxu0 %v724
  %1145 = vmatpush1.msra.mxu0 %v723
  %1146 = vmatprep.subr.mxu0 %v718
  %1147 = vmatpush1.msra.mxu0 %v717
  %1148 = vmatprep.subr.mxu0 %v712
  %1149 = vmatpush1.msra.mxu0 %v711
  %1150 = vmatprep.subr.mxu0 %v706
  %1151 = vmatpush1.msra.mxu0 %v705
  %1152 = vmatprep.subr.mxu0 %v700
  %1153 = vmatpush1.msra.mxu0 %v699
  %1154 = vmatprep.subr.mxu0 %v694
  %1155 = vmatpush1.msra.mxu0 %v693
  %1156 = vmatprep.subr.mxu0 %v688
  %1157 = vmatpush1.msra.mxu0 %v687
  %1158 = vmatprep.subr.mxu0 %v682
  %1159 = vmatpush1.msra.mxu0 %v681
  %1160 = vmatprep.subr.mxu0 %v676
  %1161 = vmatpush1.msra.mxu0 %v675
  %1162 = vmatprep.subr.mxu0 %v862
  %1163 = vmatpush2.msra.mxu0 %v861
  %1164 = vmatprep.subr.mxu0 %v856
  %1165 = vmatpush2.msra.mxu0 %v855
  %1166 = vmatprep.subr.mxu0 %v850
  %1167 = vmatpush2.msra.mxu0 %v849
  %1168 = vmatprep.subr.mxu0 %v844
  %1169 = vmatpush2.msra.mxu0 %v843
  %1170 = vmatprep.subr.mxu0 %v838
  %1171 = vmatpush2.msra.mxu0 %v837
  %1172 = vmatprep.subr.mxu0 %v832
  %1173 = vmatpush2.msra.mxu0 %v831
  %1174 = vmatprep.subr.mxu0 %v826
  %1175 = vmatpush2.msra.mxu0 %v825
  %1176 = vmatprep.subr.mxu0 %v820
  %1177 = vmatpush2.msra.mxu0 %v819
  %1178 = vmatprep.subr.mxu0 %v814
  %1179 = vmatpush2.msra.mxu0 %v813
  %1180 = vmatprep.subr.mxu0 %v808
  %1181 = vmatpush2.msra.mxu0 %v807
  %1182 = vmatprep.subr.mxu0 %v802
  %1183 = vmatpush2.msra.mxu0 %v801
  %1184 = vmatprep.subr.mxu0 %v796
  %1185 = vmatpush2.msra.mxu0 %v795
  %1186 = vmatprep.subr.mxu0 %v790
  %1187 = vmatpush2.msra.mxu0 %v789
  %1188 = vmatprep.subr.mxu0 %v784
  %1189 = vmatpush2.msra.mxu0 %v783
  %1190 = vmatprep.subr.mxu0 %v778
  %1191 = vmatpush2.msra.mxu0 %v777
  %1192 = vmatprep.subr.mxu0 %v772
  %1193 = vmatpush2.msra.mxu0 %v771
  %1194 = vmatprep.mubr.f32.mxu0 %v1123
  %1195 = vmatmul.mubr.f32.gmra.mxu0 %v1101
  %v1196 = vpop.f32.mrf.mxu0
  %v1197 = vadd.f32 0.0, %v1196
  %v1198 = vpop.f32.mrf.mxu0
  %v1199 = vadd.f32 0.0, %v1198
  %1200 = vdwg.mxu0
  %1201 = vmatprep.subr.mxu0 %v768
  %1202 = vmatpush1.msra.mxu0 %v767
  %1203 = vmatprep.subr.mxu0 %v762
  %1204 = vmatpush1.msra.mxu0 %v761
  %1205 = vmatprep.subr.mxu0 %v756
  %1206 = vmatpush1.msra.mxu0 %v755
  %1207 = vmatprep.subr.mxu0 %v750
  %1208 = vmatpush1.msra.mxu0 %v749
  %1209 = vmatprep.subr.mxu0 %v744
  %1210 = vmatpush1.msra.mxu0 %v743
  %1211 = vmatprep.subr.mxu0 %v738
  %1212 = vmatpush1.msra.mxu0 %v737
  %1213 = vmatprep.subr.mxu0 %v732
  %1214 = vmatpush1.msra.mxu0 %v731
  %1215 = vmatprep.subr.mxu0 %v726
  %1216 = vmatpush1.msra.mxu0 %v725
  %1217 = vmatprep.subr.mxu0 %v720
  %1218 = vmatpush1.msra.mxu0 %v719
  %1219 = vmatprep.subr.mxu0 %v714
  %1220 = vmatpush1.msra.mxu0 %v713
  %1221 = vmatprep.subr.mxu0 %v708
  %1222 = vmatpush1.msra.mxu0 %v707
  %1223 = vmatprep.subr.mxu0 %v702
  %1224 = vmatpush1.msra.mxu0 %v701
  %1225 = vmatprep.subr.mxu0 %v696
  %1226 = vmatpush1.msra.mxu0 %v695
  %1227 = vmatprep.subr.mxu0 %v690
  %1228 = vmatpush1.msra.mxu0 %v689
  %1229 = vmatprep.subr.mxu0 %v684
  %1230 = vmatpush1.msra.mxu0 %v683
  %1231 = vmatprep.subr.mxu0 %v678
  %1232 = vmatpush1.msra.mxu0 %v677
  %1233 = vmatprep.subr.mxu0 %v864
  %1234 = vmatpush2.msra.mxu0 %v863
  %1235 = vmatprep.subr.mxu0 %v858
  %1236 = vmatpush2.msra.mxu0 %v857
  %1237 = vmatprep.subr.mxu0 %v852
  %1238 = vmatpush2.msra.mxu0 %v851
  %1239 = vmatprep.subr.mxu0 %v846
  %1240 = vmatpush2.msra.mxu0 %v845
  %1241 = vmatprep.subr.mxu0 %v840
  %1242 = vmatpush2.msra.mxu0 %v839
  %1243 = vmatprep.subr.mxu0 %v834
  %1244 = vmatpush2.msra.mxu0 %v833
  %1245 = vmatprep.subr.mxu0 %v828
  %1246 = vmatpush2.msra.mxu0 %v827
  %1247 = vmatprep.subr.mxu0 %v822
  %1248 = vmatpush2.msra.mxu0 %v821
  %1249 = vmatprep.subr.mxu0 %v816
  %1250 = vmatpush2.msra.mxu0 %v815
  %1251 = vmatprep.subr.mxu0 %v810
  %1252 = vmatpush2.msra.mxu0 %v809
  %1253 = vmatprep.subr.mxu0 %v804
  %1254 = vmatpush2.msra.mxu0 %v803
  %1255 = vmatprep.subr.mxu0 %v798
  %1256 = vmatpush2.msra.mxu0 %v797
  %1257 = vmatprep.subr.mxu0 %v792
  %1258 = vmatpush2.msra.mxu0 %v791
  %1259 = vmatprep.subr.mxu0 %v786
  %1260 = vmatpush2.msra.mxu0 %v785
  %1261 = vmatprep.subr.mxu0 %v780
  %1262 = vmatpush2.msra.mxu0 %v779
  %1263 = vmatprep.subr.mxu0 %v774
  %1264 = vmatpush2.msra.mxu0 %v773
  %1265 = vmatprep.mubr.f32.mxu0 %v1123
  %1266 = vmatmul.mubr.f32.gmra.mxu0 %v1101
  %v1267 = vpop.f32.mrf.mxu0
  %v1268 = vadd.f32 0.0, %v1267
  %v1269 = vpop.f32.mrf.mxu0
  %v1270 = vadd.f32 0.0, %v1269
  %1271 = vdwg.mxu0
  %1272 = vmatprep.subr.mxu0 %v770
  %1273 = vmatpush1.msra.mxu0 %v769
  %1274 = vmatprep.subr.mxu0 %v764
  %1275 = vmatpush1.msra.mxu0 %v763
  %1276 = vmatprep.subr.mxu0 %v758
  %1277 = vmatpush1.msra.mxu0 %v757
  %1278 = vmatprep.subr.mxu0 %v752
  %1279 = vmatpush1.msra.mxu0 %v751
  %1280 = vmatprep.subr.mxu0 %v746
  %1281 = vmatpush1.msra.mxu0 %v745
  %1282 = vmatprep.subr.mxu0 %v740
  %1283 = vmatpush1.msra.mxu0 %v739
  %1284 = vmatprep.subr.mxu0 %v734
  %1285 = vmatpush1.msra.mxu0 %v733
  %1286 = vmatprep.subr.mxu0 %v728
  %1287 = vmatpush1.msra.mxu0 %v727
  %1288 = vmatprep.subr.mxu0 %v722
  %1289 = vmatpush1.msra.mxu0 %v721
  %1290 = vmatprep.subr.mxu0 %v716
  %1291 = vmatpush1.msra.mxu0 %v715
  %1292 = vmatprep.subr.mxu0 %v710
  %1293 = vmatpush1.msra.mxu0 %v709
  %1294 = vmatprep.subr.mxu0 %v704
  %1295 = vmatpush1.msra.mxu0 %v703
  %1296 = vmatprep.subr.mxu0 %v698
  %1297 = vmatpush1.msra.mxu0 %v697
  %1298 = vmatprep.subr.mxu0 %v692
  %1299 = vmatpush1.msra.mxu0 %v691
  %1300 = vmatprep.subr.mxu0 %v686
  %1301 = vmatpush1.msra.mxu0 %v685
  %1302 = vmatprep.subr.mxu0 %v680
  %1303 = vmatpush1.msra.mxu0 %v679
  %1304 = vmatprep.subr.mxu0 %v866
  %1305 = vmatpush2.msra.mxu0 %v865
  %1306 = vmatprep.subr.mxu0 %v860
  %1307 = vmatpush2.msra.mxu0 %v859
  %1308 = vmatprep.subr.mxu0 %v854
  %1309 = vmatpush2.msra.mxu0 %v853
  %1310 = vmatprep.subr.mxu0 %v848
  %1311 = vmatpush2.msra.mxu0 %v847
  %1312 = vmatprep.subr.mxu0 %v842
  %1313 = vmatpush2.msra.mxu0 %v841
  %1314 = vmatprep.subr.mxu0 %v836
  %1315 = vmatpush2.msra.mxu0 %v835
  %1316 = vmatprep.subr.mxu0 %v830
  %1317 = vmatpush2.msra.mxu0 %v829
  %1318 = vmatprep.subr.mxu0 %v824
  %1319 = vmatpush2.msra.mxu0 %v823
  %1320 = vmatprep.subr.mxu0 %v818
  %1321 = vmatpush2.msra.mxu0 %v817
  %1322 = vmatprep.subr.mxu0 %v812
  %1323 = vmatpush2.msra.mxu0 %v811
  %1324 = vmatprep.subr.mxu0 %v806
  %1325 = vmatpush2.msra.mxu0 %v805
  %1326 = vmatprep.subr.mxu0 %v800
  %1327 = vmatpush2.msra.mxu0 %v799
  %1328 = vmatprep.subr.mxu0 %v794
  %1329 = vmatpush2.msra.mxu0 %v793
  %1330 = vmatprep.subr.mxu0 %v788
  %1331 = vmatpush2.msra.mxu0 %v787
  %1332 = vmatprep.subr.mxu0 %v782
  %1333 = vmatpush2.msra.mxu0 %v781
  %1334 = vmatprep.subr.mxu0 %v776
  %1335 = vmatpush2.msra.mxu0 %v775
  %1336 = vmatprep.mubr.f32.mxu0 %v1123
  %1337 = vmatmul.mubr.f32.gmra.mxu0 %v1101
  %v1338 = vpop.f32.mrf.mxu0
  %v1339 = vadd.f32 0.0, %v1338
  %v1340 = vpop.f32.mrf.mxu0
  %v1341 = vadd.f32 0.0, %v1340
  %1342 = vdwg.mxu0
  %v1343 = vadd.f32 %v1124, %v1197
  %v1344 = vadd.f32 %v1125, %v1199
  %v1345 = vxor.u32 %v1343, 2147483648
  %v1346 = vxor.u32 %v1344, 2147483648
  %v1347 = vmul.f32 %v1345, 1.442695
  %v1348 = vpow.pop %v1347
  %v1349 = vmul.f32 %v1346, 1.442695
  %v1350 = vpow.pop %v1349
  %v1351 = vadd.f32 %v1348, 1.0
  %v1352 = vadd.f32 %v1350, 1.0
  %v1353 = vrcp.pop %v1351
  %v1354 = vmul.f32 1.0, %v1353
  %v1355 = vrcp.pop %v1352
  %v1356 = vmul.f32 1.0, %v1355
  %v1357 = vadd.f32 %v1268, %v667
  %v1358 = vmul.f32 %v1354, %v1357
  %v1359 = vadd.f32 %v1126, %v1358
  %v1360 = vtanh.pop %v1359
  %v1361 = vsub.f32 1.0, %v1356
  %v1362 = vmul.f32 %v1361, %v1360
  %v1363 = vmul.f32 %v1356, %v1101
  %v1364 = vadd.f32 %v1362, %v1363
  %v1365 = vadd.f32 %v1127, %v1270
  %v1366 = vadd.f32 %v1128, %v1339
  %v1367 = vxor.u32 %v1365, 2147483648
  %v1368 = vxor.u32 %v1366, 2147483648
  %v1369 = vmul.f32 %v1367, 1.442695
  %v1370 = vpow.pop %v1369
  %v1371 = vmul.f32 %v1368, 1.442695
  %v1372 = vpow.pop %v1371
  %v1373 = vadd.f32 %v1370, 1.0
  %v1374 = vadd.f32 %v1372, 1.0
  %v1375 = vrcp.pop %v1373
  %v1376 = vmul.f32 1.0, %v1375
  %v1377 = vrcp.pop %v1374
  %v1378 = vmul.f32 1.0, %v1377
  %v1379 = vadd.f32 %v1341, %v668
  %v1380 = vmul.f32 %v1376, %v1379
  %v1381 = vadd.f32 %v1129, %v1380
  %v1382 = vtanh.pop %v1381
  %v1383 = vsub.f32 1.0, %v1378
  %v1384 = vmul.f32 %v1383, %v1382
  %v1385 = vmul.f32 %v1378, %v1123
  %v1386 = vadd.f32 %v1384, %v1385
  %v1387 = vld [vmem:[#allocation2 + $0x30] sm:$0xff]
  %v1388 = vld [vmem:[#allocation2 + $0x38] sm:$0xff]
  %v1389 = vld [vmem:[#allocation2 + $0x40] sm:$0xff]
  %v1390 = vld [vmem:[#allocation3 + $0x78] sm:$0xff]
  %v1391 = vld [vmem:[#allocation3 + $0x80] sm:$0xff]
  %v1392 = vld [vmem:[#allocation3 + $0x88] sm:$0xff]
  %1393 = vmatprep.subr.mxu0 %v766
  %1394 = vmatpush1.msra.mxu0 %v765
  %1395 = vmatprep.subr.mxu0 %v760
  %1396 = vmatpush1.msra.mxu0 %v759
  %1397 = vmatprep.subr.mxu0 %v754
  %1398 = vmatpush1.msra.mxu0 %v753
  %1399 = vmatprep.subr.mxu0 %v748
  %1400 = vmatpush1.msra.mxu0 %v747
  %1401 = vmatprep.subr.mxu0 %v742
  %1402 = vmatpush1.msra.mxu0 %v741
  %1403 = vmatprep.subr.mxu0 %v736
  %1404 = vmatpush1.msra.mxu0 %v735
  %1405 = vmatprep.subr.mxu0 %v730
  %1406 = vmatpush1.msra.mxu0 %v729
  %1407 = vmatprep.subr.mxu0 %v724
  %1408 = vmatpush1.msra.mxu0 %v723
  %1409 = vmatprep.subr.mxu0 %v718
  %1410 = vmatpush1.msra.mxu0 %v717
  %1411 = vmatprep.subr.mxu0 %v712
  %1412 = vmatpush1.msra.mxu0 %v711
  %1413 = vmatprep.subr.mxu0 %v706
  %1414 = vmatpush1.msra.mxu0 %v705
  %1415 = vmatprep.subr.mxu0 %v700
  %1416 = vmatpush1.msra.mxu0 %v699
  %1417 = vmatprep.subr.mxu0 %v694
  %1418 = vmatpush1.msra.mxu0 %v693
  %1419 = vmatprep.subr.mxu0 %v688
  %1420 = vmatpush1.msra.mxu0 %v687
  %1421 = vmatprep.subr.mxu0 %v682
  %1422 = vmatpush1.msra.mxu0 %v681
  %1423 = vmatprep.subr.mxu0 %v676
  %1424 = vmatpush1.msra.mxu0 %v675
  %1425 = vmatprep.subr.mxu0 %v862
  %1426 = vmatpush2.msra.mxu0 %v861
  %1427 = vmatprep.subr.mxu0 %v856
  %1428 = vmatpush2.msra.mxu0 %v855
  %1429 = vmatprep.subr.mxu0 %v850
  %1430 = vmatpush2.msra.mxu0 %v849
  %1431 = vmatprep.subr.mxu0 %v844
  %1432 = vmatpush2.msra.mxu0 %v843
  %1433 = vmatprep.subr.mxu0 %v838
  %1434 = vmatpush2.msra.mxu0 %v837
  %1435 = vmatprep.subr.mxu0 %v832
  %1436 = vmatpush2.msra.mxu0 %v831
  %1437 = vmatprep.subr.mxu0 %v826
  %1438 = vmatpush2.msra.mxu0 %v825
  %1439 = vmatprep.subr.mxu0 %v820
  %1440 = vmatpush2.msra.mxu0 %v819
  %1441 = vmatprep.subr.mxu0 %v814
  %1442 = vmatpush2.msra.mxu0 %v813
  %1443 = vmatprep.subr.mxu0 %v808
  %1444 = vmatpush2.msra.mxu0 %v807
  %1445 = vmatprep.subr.mxu0 %v802
  %1446 = vmatpush2.msra.mxu0 %v801
  %1447 = vmatprep.subr.mxu0 %v796
  %1448 = vmatpush2.msra.mxu0 %v795
  %1449 = vmatprep.subr.mxu0 %v790
  %1450 = vmatpush2.msra.mxu0 %v789
  %1451 = vmatprep.subr.mxu0 %v784
  %1452 = vmatpush2.msra.mxu0 %v783
  %1453 = vmatprep.subr.mxu0 %v778
  %1454 = vmatpush2.msra.mxu0 %v777
  %1455 = vmatprep.subr.mxu0 %v772
  %1456 = vmatpush2.msra.mxu0 %v771
  %1457 = vmatprep.mubr.f32.mxu0 %v1386
  %1458 = vmatmul.mubr.f32.gmra.mxu0 %v1364
  %v1459 = vpop.f32.mrf.mxu0
  %v1460 = vadd.f32 0.0, %v1459
  %v1461 = vpop.f32.mrf.mxu0
  %v1462 = vadd.f32 0.0, %v1461
  %1463 = vdwg.mxu0
  %1464 = vmatprep.subr.mxu0 %v768
  %1465 = vmatpush1.msra.mxu0 %v767
  %1466 = vmatprep.subr.mxu0 %v762
  %1467 = vmatpush1.msra.mxu0 %v761
  %1468 = vmatprep.subr.mxu0 %v756
  %1469 = vmatpush1.msra.mxu0 %v755
  %1470 = vmatprep.subr.mxu0 %v750
  %1471 = vmatpush1.msra.mxu0 %v749
  %1472 = vmatprep.subr.mxu0 %v744
  %1473 = vmatpush1.msra.mxu0 %v743
  %1474 = vmatprep.subr.mxu0 %v738
  %1475 = vmatpush1.msra.mxu0 %v737
  %1476 = vmatprep.subr.mxu0 %v732
  %1477 = vmatpush1.msra.mxu0 %v731
  %1478 = vmatprep.subr.mxu0 %v726
  %1479 = vmatpush1.msra.mxu0 %v725
  %1480 = vmatprep.subr.mxu0 %v720
  %1481 = vmatpush1.msra.mxu0 %v719
  %1482 = vmatprep.subr.mxu0 %v714
  %1483 = vmatpush1.msra.mxu0 %v713
  %1484 = vmatprep.subr.mxu0 %v708
  %1485 = vmatpush1.msra.mxu0 %v707
  %1486 = vmatprep.subr.mxu0 %v702
  %1487 = vmatpush1.msra.mxu0 %v701
  %1488 = vmatprep.subr.mxu0 %v696
  %1489 = vmatpush1.msra.mxu0 %v695
  %1490 = vmatprep.subr.mxu0 %v690
  %1491 = vmatpush1.msra.mxu0 %v689
  %1492 = vmatprep.subr.mxu0 %v684
  %1493 = vmatpush1.msra.mxu0 %v683
  %1494 = vmatprep.subr.mxu0 %v678
  %1495 = vmatpush1.msra.mxu0 %v677
  %1496 = vmatprep.subr.mxu0 %v864
  %1497 = vmatpush2.msra.mxu0 %v863
  %1498 = vmatprep.subr.mxu0 %v858
  %1499 = vmatpush2.msra.mxu0 %v857
  %1500 = vmatprep.subr.mxu0 %v852
  %1501 = vmatpush2.msra.mxu0 %v851
  %1502 = vmatprep.subr.mxu0 %v846
  %1503 = vmatpush2.msra.mxu0 %v845
  %1504 = vmatprep.subr.mxu0 %v840
  %1505 = vmatpush2.msra.mxu0 %v839
  %1506 = vmatprep.subr.mxu0 %v834
  %1507 = vmatpush2.msra.mxu0 %v833
  %1508 = vmatprep.subr.mxu0 %v828
  %1509 = vmatpush2.msra.mxu0 %v827
  %1510 = vmatprep.subr.mxu0 %v822
  %1511 = vmatpush2.msra.mxu0 %v821
  %1512 = vmatprep.subr.mxu0 %v816
  %1513 = vmatpush2.msra.mxu0 %v815
  %1514 = vmatprep.subr.mxu0 %v810
  %1515 = vmatpush2.msra.mxu0 %v809
  %1516 = vmatprep.subr.mxu0 %v804
  %1517 = vmatpush2.msra.mxu0 %v803
  %1518 = vmatprep.subr.mxu0 %v798
  %1519 = vmatpush2.msra.mxu0 %v797
  %1520 = vmatprep.subr.mxu0 %v792
  %1521 = vmatpush2.msra.mxu0 %v791
  %1522 = vmatprep.subr.mxu0 %v786
  %1523 = vmatpush2.msra.mxu0 %v785
  %1524 = vmatprep.subr.mxu0 %v780
  %1525 = vmatpush2.msra.mxu0 %v779
  %1526 = vmatprep.subr.mxu0 %v774
  %1527 = vmatpush2.msra.mxu0 %v773
  %1528 = vmatprep.mubr.f32.mxu0 %v1386
  %1529 = vmatmul.mubr.f32.gmra.mxu0 %v1364
  %v1530 = vpop.f32.mrf.mxu0
  %v1531 = vadd.f32 0.0, %v1530
  %v1532 = vpop.f32.mrf.mxu0
  %v1533 = vadd.f32 0.0, %v1532
  %1534 = vdwg.mxu0
  %1535 = vmatprep.subr.mxu0 %v770
  %1536 = vmatpush1.msra.mxu0 %v769
  %1537 = vmatprep.subr.mxu0 %v764
  %1538 = vmatpush1.msra.mxu0 %v763
  %1539 = vmatprep.subr.mxu0 %v758
  %1540 = vmatpush1.msra.mxu0 %v757
  %1541 = vmatprep.subr.mxu0 %v752
  %1542 = vmatpush1.msra.mxu0 %v751
  %1543 = vmatprep.subr.mxu0 %v746
  %1544 = vmatpush1.msra.mxu0 %v745
  %1545 = vmatprep.subr.mxu0 %v740
  %1546 = vmatpush1.msra.mxu0 %v739
  %1547 = vmatprep.subr.mxu0 %v734
  %1548 = vmatpush1.msra.mxu0 %v733
  %1549 = vmatprep.subr.mxu0 %v728
  %1550 = vmatpush1.msra.mxu0 %v727
  %1551 = vmatprep.subr.mxu0 %v722
  %1552 = vmatpush1.msra.mxu0 %v721
  %1553 = vmatprep.subr.mxu0 %v716
  %1554 = vmatpush1.msra.mxu0 %v715
  %1555 = vmatprep.subr.mxu0 %v710
  %1556 = vmatpush1.msra.mxu0 %v709
  %1557 = vmatprep.subr.mxu0 %v704
  %1558 = vmatpush1.msra.mxu0 %v703
  %1559 = vmatprep.subr.mxu0 %v698
  %1560 = vmatpush1.msra.mxu0 %v697
  %1561 = vmatprep.subr.mxu0 %v692
  %1562 = vmatpush1.msra.mxu0 %v691
  %1563 = vmatprep.subr.mxu0 %v686
  %1564 = vmatpush1.msra.mxu0 %v685
  %1565 = vmatprep.subr.mxu0 %v680
  %1566 = vmatpush1.msra.mxu0 %v679
  %1567 = vmatprep.subr.mxu0 %v866
  %1568 = vmatpush2.msra.mxu0 %v865
  %1569 = vmatprep.subr.mxu0 %v860
  %1570 = vmatpush2.msra.mxu0 %v859
  %1571 = vmatprep.subr.mxu0 %v854
  %1572 = vmatpush2.msra.mxu0 %v853
  %1573 = vmatprep.subr.mxu0 %v848
  %1574 = vmatpush2.msra.mxu0 %v847
  %1575 = vmatprep.subr.mxu0 %v842
  %1576 = vmatpush2.msra.mxu0 %v841
  %1577 = vmatprep.subr.mxu0 %v836
  %1578 = vmatpush2.msra.mxu0 %v835
  %1579 = vmatprep.subr.mxu0 %v830
  %1580 = vmatpush2.msra.mxu0 %v829
  %1581 = vmatprep.subr.mxu0 %v824
  %1582 = vmatpush2.msra.mxu0 %v823
  %1583 = vmatprep.subr.mxu0 %v818
  %1584 = vmatpush2.msra.mxu0 %v817
  %1585 = vmatprep.subr.mxu0 %v812
  %1586 = vmatpush2.msra.mxu0 %v811
  %1587 = vmatprep.subr.mxu0 %v806
  %1588 = vmatpush2.msra.mxu0 %v805
  %1589 = vmatprep.subr.mxu0 %v800
  %1590 = vmatpush2.msra.mxu0 %v799
  %1591 = vmatprep.subr.mxu0 %v794
  %1592 = vmatpush2.msra.mxu0 %v793
  %1593 = vmatprep.subr.mxu0 %v788
  %1594 = vmatpush2.msra.mxu0 %v787
  %1595 = vmatprep.subr.mxu0 %v782
  %1596 = vmatpush2.msra.mxu0 %v781
  %1597 = vmatprep.subr.mxu0 %v776
  %1598 = vmatpush2.msra.mxu0 %v775
  %1599 = vmatprep.mubr.f32.mxu0 %v1386
  %1600 = vmatmul.mubr.f32.gmra.mxu0 %v1364
  %v1601 = vpop.f32.mrf.mxu0
  %v1602 = vadd.f32 0.0, %v1601
  %v1603 = vpop.f32.mrf.mxu0
  %v1604 = vadd.f32 0.0, %v1603
  %1605 = vdwg.mxu0
  %v1606 = vadd.f32 %v1387, %v1460
  %v1607 = vadd.f32 %v1388, %v1462
  %v1608 = vxor.u32 %v1606, 2147483648
  %v1609 = vxor.u32 %v1607, 2147483648
  %v1610 = vmul.f32 %v1608, 1.442695
  %v1611 = vpow.pop %v1610
  %v1612 = vmul.f32 %v1609, 1.442695
  %v1613 = vpow.pop %v1612
  %v1614 = vadd.f32 %v1611, 1.0
  %v1615 = vadd.f32 %v1613, 1.0
  %v1616 = vrcp.pop %v1614
  %v1617 = vmul.f32 1.0, %v1616
  %v1618 = vrcp.pop %v1615
  %v1619 = vmul.f32 1.0, %v1618
  %v1620 = vadd.f32 %v1531, %v667
  %v1621 = vmul.f32 %v1617, %v1620
  %v1622 = vadd.f32 %v1389, %v1621
  %v1623 = vtanh.pop %v1622
  %v1624 = vsub.f32 1.0, %v1619
  %v1625 = vmul.f32 %v1624, %v1623
  %v1626 = vmul.f32 %v1619, %v1364
  %v1627 = vadd.f32 %v1625, %v1626
  %v1628 = vadd.f32 %v1390, %v1533
  %v1629 = vadd.f32 %v1391, %v1602
  %v1630 = vxor.u32 %v1628, 2147483648
  %v1631 = vxor.u32 %v1629, 2147483648
  %v1632 = vmul.f32 %v1630, 1.442695
  %v1633 = vpow.pop %v1632
  %v1634 = vmul.f32 %v1631, 1.442695
  %v1635 = vpow.pop %v1634
  %v1636 = vadd.f32 %v1633, 1.0
  %v1637 = vadd.f32 %v1635, 1.0
  %v1638 = vrcp.pop %v1636
  %v1639 = vmul.f32 1.0, %v1638
  %v1640 = vrcp.pop %v1637
  %v1641 = vmul.f32 1.0, %v1640
  %v1642 = vadd.f32 %v1604, %v668
  %v1643 = vmul.f32 %v1639, %v1642
  %v1644 = vadd.f32 %v1392, %v1643
  %v1645 = vtanh.pop %v1644
  %v1646 = vsub.f32 1.0, %v1641
  %v1647 = vmul.f32 %v1646, %v1645
  %v1648 = vmul.f32 %v1641, %v1386
  %v1649 = vadd.f32 %v1647, %v1648
  %v1650 = vld [vmem:[#allocation2 + $0x48] sm:$0xff]
  %v1651 = vld [vmem:[#allocation2 + $0x50] sm:$0xff]
  %v1652 = vld [vmem:[#allocation2 + $0x58] sm:$0xff]
  %v1653 = vld [vmem:[#allocation3 + $0x60] sm:$0xff]
  %v1654 = vld [vmem:[#allocation3 + $0x68] sm:$0xff]
  %v1655 = vld [vmem:[#allocation3 + $0x70] sm:$0xff]
  %1656 = vmatprep.subr.mxu0 %v766
  %1657 = vmatpush1.msra.mxu0 %v765
  %1658 = vmatprep.subr.mxu0 %v760
  %1659 = vmatpush1.msra.mxu0 %v759
  %1660 = vmatprep.subr.mxu0 %v754
  %1661 = vmatpush1.msra.mxu0 %v753
  %1662 = vmatprep.subr.mxu0 %v748
  %1663 = vmatpush1.msra.mxu0 %v747
  %1664 = vmatprep.subr.mxu0 %v742
  %1665 = vmatpush1.msra.mxu0 %v741
  %1666 = vmatprep.subr.mxu0 %v736
  %1667 = vmatpush1.msra.mxu0 %v735
  %1668 = vmatprep.subr.mxu0 %v730
  %1669 = vmatpush1.msra.mxu0 %v729
  %1670 = vmatprep.subr.mxu0 %v724
  %1671 = vmatpush1.msra.mxu0 %v723
  %1672 = vmatprep.subr.mxu0 %v718
  %1673 = vmatpush1.msra.mxu0 %v717
  %1674 = vmatprep.subr.mxu0 %v712
  %1675 = vmatpush1.msra.mxu0 %v711
  %1676 = vmatprep.subr.mxu0 %v706
  %1677 = vmatpush1.msra.mxu0 %v705
  %1678 = vmatprep.subr.mxu0 %v700
  %1679 = vmatpush1.msra.mxu0 %v699
  %1680 = vmatprep.subr.mxu0 %v694
  %1681 = vmatpush1.msra.mxu0 %v693
  %1682 = vmatprep.subr.mxu0 %v688
  %1683 = vmatpush1.msra.mxu0 %v687
  %1684 = vmatprep.subr.mxu0 %v682
  %1685 = vmatpush1.msra.mxu0 %v681
  %1686 = vmatprep.subr.mxu0 %v676
  %1687 = vmatpush1.msra.mxu0 %v675
  %1688 = vmatprep.subr.mxu0 %v862
  %1689 = vmatpush2.msra.mxu0 %v861
  %1690 = vmatprep.subr.mxu0 %v856
  %1691 = vmatpush2.msra.mxu0 %v855
  %1692 = vmatprep.subr.mxu0 %v850
  %1693 = vmatpush2.msra.mxu0 %v849
  %1694 = vmatprep.subr.mxu0 %v844
  %1695 = vmatpush2.msra.mxu0 %v843
  %1696 = vmatprep.subr.mxu0 %v838
  %1697 = vmatpush2.msra.mxu0 %v837
  %1698 = vmatprep.subr.mxu0 %v832
  %1699 = vmatpush2.msra.mxu0 %v831
  %1700 = vmatprep.subr.mxu0 %v826
  %1701 = vmatpush2.msra.mxu0 %v825
  %1702 = vmatprep.subr.mxu0 %v820
  %1703 = vmatpush2.msra.mxu0 %v819
  %1704 = vmatprep.subr.mxu0 %v814
  %1705 = vmatpush2.msra.mxu0 %v813
  %1706 = vmatprep.subr.mxu0 %v808
  %1707 = vmatpush2.msra.mxu0 %v807
  %1708 = vmatprep.subr.mxu0 %v802
  %1709 = vmatpush2.msra.mxu0 %v801
  %1710 = vmatprep.subr.mxu0 %v796
  %1711 = vmatpush2.msra.mxu0 %v795
  %1712 = vmatprep.subr.mxu0 %v790
  %1713 = vmatpush2.msra.mxu0 %v789
  %1714 = vmatprep.subr.mxu0 %v784
  %1715 = vmatpush2.msra.mxu0 %v783
  %1716 = vmatprep.subr.mxu0 %v778
  %1717 = vmatpush2.msra.mxu0 %v777
  %1718 = vmatprep.subr.mxu0 %v772
  %1719 = vmatpush2.msra.mxu0 %v771
  %1720 = vmatprep.mubr.f32.mxu0 %v1649
  %1721 = vmatmul.mubr.f32.gmra.mxu0 %v1627
  %v1722 = vpop.f32.mrf.mxu0
  %v1723 = vadd.f32 0.0, %v1722
  %v1724 = vpop.f32.mrf.mxu0
  %v1725 = vadd.f32 0.0, %v1724
  %1726 = vdwg.mxu0
  %1727 = vmatprep.subr.mxu0 %v768
  %1728 = vmatpush1.msra.mxu0 %v767
  %1729 = vmatprep.subr.mxu0 %v762
  %1730 = vmatpush1.msra.mxu0 %v761
  %1731 = vmatprep.subr.mxu0 %v756
  %1732 = vmatpush1.msra.mxu0 %v755
  %1733 = vmatprep.subr.mxu0 %v750
  %1734 = vmatpush1.msra.mxu0 %v749
  %1735 = vmatprep.subr.mxu0 %v744
  %1736 = vmatpush1.msra.mxu0 %v743
  %1737 = vmatprep.subr.mxu0 %v738
  %1738 = vmatpush1.msra.mxu0 %v737
  %1739 = vmatprep.subr.mxu0 %v732
  %1740 = vmatpush1.msra.mxu0 %v731
  %1741 = vmatprep.subr.mxu0 %v726
  %1742 = vmatpush1.msra.mxu0 %v725
  %1743 = vmatprep.subr.mxu0 %v720
  %1744 = vmatpush1.msra.mxu0 %v719
  %1745 = vmatprep.subr.mxu0 %v714
  %1746 = vmatpush1.msra.mxu0 %v713
  %1747 = vmatprep.subr.mxu0 %v708
  %1748 = vmatpush1.msra.mxu0 %v707
  %1749 = vmatprep.subr.mxu0 %v702
  %1750 = vmatpush1.msra.mxu0 %v701
  %1751 = vmatprep.subr.mxu0 %v696
  %1752 = vmatpush1.msra.mxu0 %v695
  %1753 = vmatprep.subr.mxu0 %v690
  %1754 = vmatpush1.msra.mxu0 %v689
  %1755 = vmatprep.subr.mxu0 %v684
  %1756 = vmatpush1.msra.mxu0 %v683
  %1757 = vmatprep.subr.mxu0 %v678
  %1758 = vmatpush1.msra.mxu0 %v677
  %1759 = vmatprep.subr.mxu0 %v864
  %1760 = vmatpush2.msra.mxu0 %v863
  %1761 = vmatprep.subr.mxu0 %v858
  %1762 = vmatpush2.msra.mxu0 %v857
  %1763 = vmatprep.subr.mxu0 %v852
  %1764 = vmatpush2.msra.mxu0 %v851
  %1765 = vmatprep.subr.mxu0 %v846
  %1766 = vmatpush2.msra.mxu0 %v845
  %1767 = vmatprep.subr.mxu0 %v840
  %1768 = vmatpush2.msra.mxu0 %v839
  %1769 = vmatprep.subr.mxu0 %v834
  %1770 = vmatpush2.msra.mxu0 %v833
  %1771 = vmatprep.subr.mxu0 %v828
  %1772 = vmatpush2.msra.mxu0 %v827
  %1773 = vmatprep.subr.mxu0 %v822
  %1774 = vmatpush2.msra.mxu0 %v821
  %1775 = vmatprep.subr.mxu0 %v816
  %1776 = vmatpush2.msra.mxu0 %v815
  %1777 = vmatprep.subr.mxu0 %v810
  %1778 = vmatpush2.msra.mxu0 %v809
  %1779 = vmatprep.subr.mxu0 %v804
  %1780 = vmatpush2.msra.mxu0 %v803
  %1781 = vmatprep.subr.mxu0 %v798
  %1782 = vmatpush2.msra.mxu0 %v797
  %1783 = vmatprep.subr.mxu0 %v792
  %1784 = vmatpush2.msra.mxu0 %v791
  %1785 = vmatprep.subr.mxu0 %v786
  %1786 = vmatpush2.msra.mxu0 %v785
  %1787 = vmatprep.subr.mxu0 %v780
  %1788 = vmatpush2.msra.mxu0 %v779
  %1789 = vmatprep.subr.mxu0 %v774
  %1790 = vmatpush2.msra.mxu0 %v773
  %1791 = vmatprep.mubr.f32.mxu0 %v1649
  %1792 = vmatmul.mubr.f32.gmra.mxu0 %v1627
  %v1793 = vpop.f32.mrf.mxu0
  %v1794 = vadd.f32 0.0, %v1793
  %v1795 = vpop.f32.mrf.mxu0
  %v1796 = vadd.f32 0.0, %v1795
  %1797 = vdwg.mxu0
  %1798 = vmatprep.subr.mxu0 %v770
  %1799 = vmatpush1.msra.mxu0 %v769
  %1800 = vmatprep.subr.mxu0 %v764
  %1801 = vmatpush1.msra.mxu0 %v763
  %1802 = vmatprep.subr.mxu0 %v758
  %1803 = vmatpush1.msra.mxu0 %v757
  %1804 = vmatprep.subr.mxu0 %v752
  %1805 = vmatpush1.msra.mxu0 %v751
  %1806 = vmatprep.subr.mxu0 %v746
  %1807 = vmatpush1.msra.mxu0 %v745
  %1808 = vmatprep.subr.mxu0 %v740
  %1809 = vmatpush1.msra.mxu0 %v739
  %1810 = vmatprep.subr.mxu0 %v734
  %1811 = vmatpush1.msra.mxu0 %v733
  %1812 = vmatprep.subr.mxu0 %v728
  %1813 = vmatpush1.msra.mxu0 %v727
  %1814 = vmatprep.subr.mxu0 %v722
  %1815 = vmatpush1.msra.mxu0 %v721
  %1816 = vmatprep.subr.mxu0 %v716
  %1817 = vmatpush1.msra.mxu0 %v715
  %1818 = vmatprep.subr.mxu0 %v710
  %1819 = vmatpush1.msra.mxu0 %v709
  %1820 = vmatprep.subr.mxu0 %v704
  %1821 = vmatpush1.msra.mxu0 %v703
  %1822 = vmatprep.subr.mxu0 %v698
  %1823 = vmatpush1.msra.mxu0 %v697
  %1824 = vmatprep.subr.mxu0 %v692
  %1825 = vmatpush1.msra.mxu0 %v691
  %1826 = vmatprep.subr.mxu0 %v686
  %1827 = vmatpush1.msra.mxu0 %v685
  %1828 = vmatprep.subr.mxu0 %v680
  %1829 = vmatpush1.msra.mxu0 %v679
  %1830 = vmatprep.subr.mxu0 %v866
  %1831 = vmatpush2.msra.mxu0 %v865
  %1832 = vmatprep.subr.mxu0 %v860
  %1833 = vmatpush2.msra.mxu0 %v859
  %1834 = vmatprep.subr.mxu0 %v854
  %1835 = vmatpush2.msra.mxu0 %v853
  %1836 = vmatprep.subr.mxu0 %v848
  %1837 = vmatpush2.msra.mxu0 %v847
  %1838 = vmatprep.subr.mxu0 %v842
  %1839 = vmatpush2.msra.mxu0 %v841
  %1840 = vmatprep.subr.mxu0 %v836
  %1841 = vmatpush2.msra.mxu0 %v835
  %1842 = vmatprep.subr.mxu0 %v830
  %1843 = vmatpush2.msra.mxu0 %v829
  %1844 = vmatprep.subr.mxu0 %v824
  %1845 = vmatpush2.msra.mxu0 %v823
  %1846 = vmatprep.subr.mxu0 %v818
  %1847 = vmatpush2.msra.mxu0 %v817
  %1848 = vmatprep.subr.mxu0 %v812
  %1849 = vmatpush2.msra.mxu0 %v811
  %1850 = vmatprep.subr.mxu0 %v806
  %1851 = vmatpush2.msra.mxu0 %v805
  %1852 = vmatprep.subr.mxu0 %v800
  %1853 = vmatpush2.msra.mxu0 %v799
  %1854 = vmatprep.subr.mxu0 %v794
  %1855 = vmatpush2.msra.mxu0 %v793
  %1856 = vmatprep.subr.mxu0 %v788
  %1857 = vmatpush2.msra.mxu0 %v787
  %1858 = vmatprep.subr.mxu0 %v782
  %1859 = vmatpush2.msra.mxu0 %v781
  %1860 = vmatprep.subr.mxu0 %v776
  %1861 = vmatpush2.msra.mxu0 %v775
  %1862 = vmatprep.mubr.f32.mxu0 %v1649
  %1863 = vmatmul.mubr.f32.gmra.mxu0 %v1627
  %v1864 = vpop.f32.mrf.mxu0
  %v1865 = vadd.f32 0.0, %v1864
  %v1866 = vpop.f32.mrf.mxu0
  %v1867 = vadd.f32 0.0, %v1866
  %1868 = vdwg.mxu0
  %v1869 = vadd.f32 %v1650, %v1723
  %v1870 = vadd.f32 %v1651, %v1725
  %v1871 = vxor.u32 %v1869, 2147483648
  %v1872 = vxor.u32 %v1870, 2147483648
  %v1873 = vmul.f32 %v1871, 1.442695
  %v1874 = vpow.pop %v1873
  %v1875 = vmul.f32 %v1872, 1.442695
  %v1876 = vpow.pop %v1875
  %v1877 = vadd.f32 %v1874, 1.0
  %v1878 = vadd.f32 %v1876, 1.0
  %v1879 = vrcp.pop %v1877
  %v1880 = vmul.f32 1.0, %v1879
  %v1881 = vrcp.pop %v1878
  %v1882 = vmul.f32 1.0, %v1881
  %v1883 = vadd.f32 %v1794, %v667
  %v1884 = vmul.f32 %v1880, %v1883
  %v1885 = vadd.f32 %v1652, %v1884
  %v1886 = vtanh.pop %v1885
  %v1887 = vsub.f32 1.0, %v1882
  %v1888 = vmul.f32 %v1887, %v1886
  %v1889 = vmul.f32 %v1882, %v1627
  %v1890 = vadd.f32 %v1888, %v1889
  %v1891 = vadd.f32 %v1653, %v1796
  %v1892 = vadd.f32 %v1654, %v1865
  %v1893 = vxor.u32 %v1891, 2147483648
  %v1894 = vxor.u32 %v1892, 2147483648
  %v1895 = vmul.f32 %v1893, 1.442695
  %v1896 = vpow.pop %v1895
  %v1897 = vmul.f32 %v1894, 1.442695
  %v1898 = vpow.pop %v1897
  %v1899 = vadd.f32 %v1896, 1.0
  %v1900 = vadd.f32 %v1898, 1.0
  %v1901 = vrcp.pop %v1899
  %v1902 = vmul.f32 1.0, %v1901
  %v1903 = vrcp.pop %v1900
  %v1904 = vmul.f32 1.0, %v1903
  %v1905 = vadd.f32 %v1867, %v668
  %v1906 = vmul.f32 %v1902, %v1905
  %v1907 = vadd.f32 %v1655, %v1906
  %v1908 = vtanh.pop %v1907
  %v1909 = vsub.f32 1.0, %v1904
  %v1910 = vmul.f32 %v1909, %v1908
  %v1911 = vmul.f32 %v1904, %v1649
  %v1912 = vadd.f32 %v1910, %v1911
  %v1913 = vld [vmem:[#allocation2 + $0x60] sm:$0xff]
  %v1914 = vld [vmem:[#allocation2 + $0x68] sm:$0xff]
  %v1915 = vld [vmem:[#allocation2 + $0x70] sm:$0xff]
  %v1916 = vld [vmem:[#allocation3 + $0x48] sm:$0xff]
  %v1917 = vld [vmem:[#allocation3 + $0x50] sm:$0xff]
  %v1918 = vld [vmem:[#allocation3 + $0x58] sm:$0xff]
  %1919 = vmatprep.subr.mxu0 %v766
  %1920 = vmatpush1.msra.mxu0 %v765
  %1921 = vmatprep.subr.mxu0 %v760
  %1922 = vmatpush1.msra.mxu0 %v759
  %1923 = vmatprep.subr.mxu0 %v754
  %1924 = vmatpush1.msra.mxu0 %v753
  %1925 = vmatprep.subr.mxu0 %v748
  %1926 = vmatpush1.msra.mxu0 %v747
  %1927 = vmatprep.subr.mxu0 %v742
  %1928 = vmatpush1.msra.mxu0 %v741
  %1929 = vmatprep.subr.mxu0 %v736
  %1930 = vmatpush1.msra.mxu0 %v735
  %1931 = vmatprep.subr.mxu0 %v730
  %1932 = vmatpush1.msra.mxu0 %v729
  %1933 = vmatprep.subr.mxu0 %v724
  %1934 = vmatpush1.msra.mxu0 %v723
  %1935 = vmatprep.subr.mxu0 %v718
  %1936 = vmatpush1.msra.mxu0 %v717
  %1937 = vmatprep.subr.mxu0 %v712
  %1938 = vmatpush1.msra.mxu0 %v711
  %1939 = vmatprep.subr.mxu0 %v706
  %1940 = vmatpush1.msra.mxu0 %v705
  %1941 = vmatprep.subr.mxu0 %v700
  %1942 = vmatpush1.msra.mxu0 %v699
  %1943 = vmatprep.subr.mxu0 %v694
  %1944 = vmatpush1.msra.mxu0 %v693
  %1945 = vmatprep.subr.mxu0 %v688
  %1946 = vmatpush1.msra.mxu0 %v687
  %1947 = vmatprep.subr.mxu0 %v682
  %1948 = vmatpush1.msra.mxu0 %v681
  %1949 = vmatprep.subr.mxu0 %v676
  %1950 = vmatpush1.msra.mxu0 %v675
  %1951 = vmatprep.subr.mxu0 %v862
  %1952 = vmatpush2.msra.mxu0 %v861
  %1953 = vmatprep.subr.mxu0 %v856
  %1954 = vmatpush2.msra.mxu0 %v855
  %1955 = vmatprep.subr.mxu0 %v850
  %1956 = vmatpush2.msra.mxu0 %v849
  %1957 = vmatprep.subr.mxu0 %v844
  %1958 = vmatpush2.msra.mxu0 %v843
  %1959 = vmatprep.subr.mxu0 %v838
  %1960 = vmatpush2.msra.mxu0 %v837
  %1961 = vmatprep.subr.mxu0 %v832
  %1962 = vmatpush2.msra.mxu0 %v831
  %1963 = vmatprep.subr.mxu0 %v826
  %1964 = vmatpush2.msra.mxu0 %v825
  %1965 = vmatprep.subr.mxu0 %v820
  %1966 = vmatpush2.msra.mxu0 %v819
  %1967 = vmatprep.subr.mxu0 %v814
  %1968 = vmatpush2.msra.mxu0 %v813
  %1969 = vmatprep.subr.mxu0 %v808
  %1970 = vmatpush2.msra.mxu0 %v807
  %1971 = vmatprep.subr.mxu0 %v802
  %1972 = vmatpush2.msra.mxu0 %v801
  %1973 = vmatprep.subr.mxu0 %v796
  %1974 = vmatpush2.msra.mxu0 %v795
  %1975 = vmatprep.subr.mxu0 %v790
  %1976 = vmatpush2.msra.mxu0 %v789
  %1977 = vmatprep.subr.mxu0 %v784
  %1978 = vmatpush2.msra.mxu0 %v783
  %1979 = vmatprep.subr.mxu0 %v778
  %1980 = vmatpush2.msra.mxu0 %v777
  %1981 = vmatprep.subr.mxu0 %v772
  %1982 = vmatpush2.msra.mxu0 %v771
  %1983 = vmatprep.mubr.f32.mxu0 %v1912
  %1984 = vmatmul.mubr.f32.gmra.mxu0 %v1890
  %v1985 = vpop.f32.mrf.mxu0
  %v1986 = vadd.f32 0.0, %v1985
  %v1987 = vpop.f32.mrf.mxu0
  %v1988 = vadd.f32 0.0, %v1987
  %1989 = vdwg.mxu0
  %1990 = vmatprep.subr.mxu0 %v768
  %1991 = vmatpush1.msra.mxu0 %v767
  %1992 = vmatprep.subr.mxu0 %v762
  %1993 = vmatpush1.msra.mxu0 %v761
  %1994 = vmatprep.subr.mxu0 %v756
  %1995 = vmatpush1.msra.mxu0 %v755
  %1996 = vmatprep.subr.mxu0 %v750
  %1997 = vmatpush1.msra.mxu0 %v749
  %1998 = vmatprep.subr.mxu0 %v744
  %1999 = vmatpush1.msra.mxu0 %v743
  %2000 = vmatprep.subr.mxu0 %v738
  %2001 = vmatpush1.msra.mxu0 %v737
  %2002 = vmatprep.subr.mxu0 %v732
  %2003 = vmatpush1.msra.mxu0 %v731
  %2004 = vmatprep.subr.mxu0 %v726
  %2005 = vmatpush1.msra.mxu0 %v725
  %2006 = vmatprep.subr.mxu0 %v720
  %2007 = vmatpush1.msra.mxu0 %v719
  %2008 = vmatprep.subr.mxu0 %v714
  %2009 = vmatpush1.msra.mxu0 %v713
  %2010 = vmatprep.subr.mxu0 %v708
  %2011 = vmatpush1.msra.mxu0 %v707
  %2012 = vmatprep.subr.mxu0 %v702
  %2013 = vmatpush1.msra.mxu0 %v701
  %2014 = vmatprep.subr.mxu0 %v696
  %2015 = vmatpush1.msra.mxu0 %v695
  %2016 = vmatprep.subr.mxu0 %v690
  %2017 = vmatpush1.msra.mxu0 %v689
  %2018 = vmatprep.subr.mxu0 %v684
  %2019 = vmatpush1.msra.mxu0 %v683
  %2020 = vmatprep.subr.mxu0 %v678
  %2021 = vmatpush1.msra.mxu0 %v677
  %2022 = vmatprep.subr.mxu0 %v864
  %2023 = vmatpush2.msra.mxu0 %v863
  %2024 = vmatprep.subr.mxu0 %v858
  %2025 = vmatpush2.msra.mxu0 %v857
  %2026 = vmatprep.subr.mxu0 %v852
  %2027 = vmatpush2.msra.mxu0 %v851
  %2028 = vmatprep.subr.mxu0 %v846
  %2029 = vmatpush2.msra.mxu0 %v845
  %2030 = vmatprep.subr.mxu0 %v840
  %2031 = vmatpush2.msra.mxu0 %v839
  %2032 = vmatprep.subr.mxu0 %v834
  %2033 = vmatpush2.msra.mxu0 %v833
  %2034 = vmatprep.subr.mxu0 %v828
  %2035 = vmatpush2.msra.mxu0 %v827
  %2036 = vmatprep.subr.mxu0 %v822
  %2037 = vmatpush2.msra.mxu0 %v821
  %2038 = vmatprep.subr.mxu0 %v816
  %2039 = vmatpush2.msra.mxu0 %v815
  %2040 = vmatprep.subr.mxu0 %v810
  %2041 = vmatpush2.msra.mxu0 %v809
  %2042 = vmatprep.subr.mxu0 %v804
  %2043 = vmatpush2.msra.mxu0 %v803
  %2044 = vmatprep.subr.mxu0 %v798
  %2045 = vmatpush2.msra.mxu0 %v797
  %2046 = vmatprep.subr.mxu0 %v792
  %2047 = vmatpush2.msra.mxu0 %v791
  %2048 = vmatprep.subr.mxu0 %v786
  %2049 = vmatpush2.msra.mxu0 %v785
  %2050 = vmatprep.subr.mxu0 %v780
  %2051 = vmatpush2.msra.mxu0 %v779
  %2052 = vmatprep.subr.mxu0 %v774
  %2053 = vmatpush2.msra.mxu0 %v773
  %2054 = vmatprep.mubr.f32.mxu0 %v1912
  %2055 = vmatmul.mubr.f32.gmra.mxu0 %v1890
  %v2056 = vpop.f32.mrf.mxu0
  %v2057 = vadd.f32 0.0, %v2056
  %v2058 = vpop.f32.mrf.mxu0
  %v2059 = vadd.f32 0.0, %v2058
  %2060 = vdwg.mxu0
  %2061 = vmatprep.subr.mxu0 %v770
  %2062 = vmatpush1.msra.mxu0 %v769
  %2063 = vmatprep.subr.mxu0 %v764
  %2064 = vmatpush1.msra.mxu0 %v763
  %2065 = vmatprep.subr.mxu0 %v758
  %2066 = vmatpush1.msra.mxu0 %v757
  %2067 = vmatprep.subr.mxu0 %v752
  %2068 = vmatpush1.msra.mxu0 %v751
  %2069 = vmatprep.subr.mxu0 %v746
  %2070 = vmatpush1.msra.mxu0 %v745
  %2071 = vmatprep.subr.mxu0 %v740
  %2072 = vmatpush1.msra.mxu0 %v739
  %2073 = vmatprep.subr.mxu0 %v734
  %2074 = vmatpush1.msra.mxu0 %v733
  %2075 = vmatprep.subr.mxu0 %v728
  %2076 = vmatpush1.msra.mxu0 %v727
  %2077 = vmatprep.subr.mxu0 %v722
  %2078 = vmatpush1.msra.mxu0 %v721
  %2079 = vmatprep.subr.mxu0 %v716
  %2080 = vmatpush1.msra.mxu0 %v715
  %2081 = vmatprep.subr.mxu0 %v710
  %2082 = vmatpush1.msra.mxu0 %v709
  %2083 = vmatprep.subr.mxu0 %v704
  %2084 = vmatpush1.msra.mxu0 %v703
  %2085 = vmatprep.subr.mxu0 %v698
  %2086 = vmatpush1.msra.mxu0 %v697
  %2087 = vmatprep.subr.mxu0 %v692
  %2088 = vmatpush1.msra.mxu0 %v691
  %2089 = vmatprep.subr.mxu0 %v686
  %2090 = vmatpush1.msra.mxu0 %v685
  %2091 = vmatprep.subr.mxu0 %v680
  %2092 = vmatpush1.msra.mxu0 %v679
  %2093 = vmatprep.subr.mxu0 %v866
  %2094 = vmatpush2.msra.mxu0 %v865
  %2095 = vmatprep.subr.mxu0 %v860
  %2096 = vmatpush2.msra.mxu0 %v859
  %2097 = vmatprep.subr.mxu0 %v854
  %2098 = vmatpush2.msra.mxu0 %v853
  %2099 = vmatprep.subr.mxu0 %v848
  %2100 = vmatpush2.msra.mxu0 %v847
  %2101 = vmatprep.subr.mxu0 %v842
  %2102 = vmatpush2.msra.mxu0 %v841
  %2103 = vmatprep.subr.mxu0 %v836
  %2104 = vmatpush2.msra.mxu0 %v835
  %2105 = vmatprep.subr.mxu0 %v830
  %2106 = vmatpush2.msra.mxu0 %v829
  %2107 = vmatprep.subr.mxu0 %v824
  %2108 = vmatpush2.msra.mxu0 %v823
  %2109 = vmatprep.subr.mxu0 %v818
  %2110 = vmatpush2.msra.mxu0 %v817
  %2111 = vmatprep.subr.mxu0 %v812
  %2112 = vmatpush2.msra.mxu0 %v811
  %2113 = vmatprep.subr.mxu0 %v806
  %2114 = vmatpush2.msra.mxu0 %v805
  %2115 = vmatprep.subr.mxu0 %v800
  %2116 = vmatpush2.msra.mxu0 %v799
  %2117 = vmatprep.subr.mxu0 %v794
  %2118 = vmatpush2.msra.mxu0 %v793
  %2119 = vmatprep.subr.mxu0 %v788
  %2120 = vmatpush2.msra.mxu0 %v787
  %2121 = vmatprep.subr.mxu0 %v782
  %2122 = vmatpush2.msra.mxu0 %v781
  %2123 = vmatprep.subr.mxu0 %v776
  %2124 = vmatpush2.msra.mxu0 %v775
  %2125 = vmatprep.mubr.f32.mxu0 %v1912
  %2126 = vmatmul.mubr.f32.gmra.mxu0 %v1890
  %v2127 = vpop.f32.mrf.mxu0
  %v2128 = vadd.f32 0.0, %v2127
  %v2129 = vpop.f32.mrf.mxu0
  %v2130 = vadd.f32 0.0, %v2129
  %2131 = vdwg.mxu0
  %v2132 = vadd.f32 %v1913, %v1986
  %v2133 = vadd.f32 %v1914, %v1988
  %v2134 = vxor.u32 %v2132, 2147483648
  %v2135 = vxor.u32 %v2133, 2147483648
  %v2136 = vmul.f32 %v2134, 1.442695
  %v2137 = vpow.pop %v2136
  %v2138 = vmul.f32 %v2135, 1.442695
  %v2139 = vpow.pop %v2138
  %v2140 = vadd.f32 %v2137, 1.0
  %v2141 = vadd.f32 %v2139, 1.0
  %v2142 = vrcp.pop %v2140
  %v2143 = vmul.f32 1.0, %v2142
  %v2144 = vrcp.pop %v2141
  %v2145 = vmul.f32 1.0, %v2144
  %v2146 = vadd.f32 %v2057, %v667
  %v2147 = vmul.f32 %v2143, %v2146
  %v2148 = vadd.f32 %v1915, %v2147
  %v2149 = vtanh.pop %v2148
  %v2150 = vsub.f32 1.0, %v2145
  %v2151 = vmul.f32 %v2150, %v2149
  %v2152 = vmul.f32 %v2145, %v1890
  %v2153 = vadd.f32 %v2151, %v2152
  %v2154 = vadd.f32 %v1916, %v2059
  %v2155 = vadd.f32 %v1917, %v2128
  %v2156 = vxor.u32 %v2154, 2147483648
  %v2157 = vxor.u32 %v2155, 2147483648
  %v2158 = vmul.f32 %v2156, 1.442695
  %v2159 = vpow.pop %v2158
  %v2160 = vmul.f32 %v2157, 1.442695
  %v2161 = vpow.pop %v2160
  %v2162 = vadd.f32 %v2159, 1.0
  %v2163 = vadd.f32 %v2161, 1.0
  %v2164 = vrcp.pop %v2162
  %v2165 = vmul.f32 1.0, %v2164
  %v2166 = vrcp.pop %v2163
  %v2167 = vmul.f32 1.0, %v2166
  %v2168 = vadd.f32 %v2130, %v668
  %v2169 = vmul.f32 %v2165, %v2168
  %v2170 = vadd.f32 %v1918, %v2169
  %v2171 = vtanh.pop %v2170
  %v2172 = vsub.f32 1.0, %v2167
  %v2173 = vmul.f32 %v2172, %v2171
  %v2174 = vmul.f32 %v2167, %v1912
  %v2175 = vadd.f32 %v2173, %v2174
  %v2176 = vld [vmem:[#allocation2 + $0x78] sm:$0xff]
  %v2177 = vld [vmem:[#allocation2 + $0x80] sm:$0xff]
  %v2178 = vld [vmem:[#allocation2 + $0x88] sm:$0xff]
  %v2179 = vld [vmem:[#allocation3 + $0x30] sm:$0xff]
  %v2180 = vld [vmem:[#allocation3 + $0x38] sm:$0xff]
  %v2181 = vld [vmem:[#allocation3 + $0x40] sm:$0xff]
  %2182 = vmatprep.subr.mxu0 %v766
  %2183 = vmatpush1.msra.mxu0 %v765
  %2184 = vmatprep.subr.mxu0 %v760
  %2185 = vmatpush1.msra.mxu0 %v759
  %2186 = vmatprep.subr.mxu0 %v754
  %2187 = vmatpush1.msra.mxu0 %v753
  %2188 = vmatprep.subr.mxu0 %v748
  %2189 = vmatpush1.msra.mxu0 %v747
  %2190 = vmatprep.subr.mxu0 %v742
  %2191 = vmatpush1.msra.mxu0 %v741
  %2192 = vmatprep.subr.mxu0 %v736
  %2193 = vmatpush1.msra.mxu0 %v735
  %2194 = vmatprep.subr.mxu0 %v730
  %2195 = vmatpush1.msra.mxu0 %v729
  %2196 = vmatprep.subr.mxu0 %v724
  %2197 = vmatpush1.msra.mxu0 %v723
  %2198 = vmatprep.subr.mxu0 %v718
  %2199 = vmatpush1.msra.mxu0 %v717
  %2200 = vmatprep.subr.mxu0 %v712
  %2201 = vmatpush1.msra.mxu0 %v711
  %2202 = vmatprep.subr.mxu0 %v706
  %2203 = vmatpush1.msra.mxu0 %v705
  %2204 = vmatprep.subr.mxu0 %v700
  %2205 = vmatpush1.msra.mxu0 %v699
  %2206 = vmatprep.subr.mxu0 %v694
  %2207 = vmatpush1.msra.mxu0 %v693
  %2208 = vmatprep.subr.mxu0 %v688
  %2209 = vmatpush1.msra.mxu0 %v687
  %2210 = vmatprep.subr.mxu0 %v682
  %2211 = vmatpush1.msra.mxu0 %v681
  %2212 = vmatprep.subr.mxu0 %v676
  %2213 = vmatpush1.msra.mxu0 %v675
  %2214 = vmatprep.subr.mxu0 %v862
  %2215 = vmatpush2.msra.mxu0 %v861
  %2216 = vmatprep.subr.mxu0 %v856
  %2217 = vmatpush2.msra.mxu0 %v855
  %2218 = vmatprep.subr.mxu0 %v850
  %2219 = vmatpush2.msra.mxu0 %v849
  %2220 = vmatprep.subr.mxu0 %v844
  %2221 = vmatpush2.msra.mxu0 %v843
  %2222 = vmatprep.subr.mxu0 %v838
  %2223 = vmatpush2.msra.mxu0 %v837
  %2224 = vmatprep.subr.mxu0 %v832
  %2225 = vmatpush2.msra.mxu0 %v831
  %2226 = vmatprep.subr.mxu0 %v826
  %2227 = vmatpush2.msra.mxu0 %v825
  %2228 = vmatprep.subr.mxu0 %v820
  %2229 = vmatpush2.msra.mxu0 %v819
  %2230 = vmatprep.subr.mxu0 %v814
  %2231 = vmatpush2.msra.mxu0 %v813
  %2232 = vmatprep.subr.mxu0 %v808
  %2233 = vmatpush2.msra.mxu0 %v807
  %2234 = vmatprep.subr.mxu0 %v802
  %2235 = vmatpush2.msra.mxu0 %v801
  %2236 = vmatprep.subr.mxu0 %v796
  %2237 = vmatpush2.msra.mxu0 %v795
  %2238 = vmatprep.subr.mxu0 %v790
  %2239 = vmatpush2.msra.mxu0 %v789
  %2240 = vmatprep.subr.mxu0 %v784
  %2241 = vmatpush2.msra.mxu0 %v783
  %2242 = vmatprep.subr.mxu0 %v778
  %2243 = vmatpush2.msra.mxu0 %v777
  %2244 = vmatprep.subr.mxu0 %v772
  %2245 = vmatpush2.msra.mxu0 %v771
  %2246 = vmatprep.mubr.f32.mxu0 %v2175
  %2247 = vmatmul.mubr.f32.gmra.mxu0 %v2153
  %v2248 = vpop.f32.mrf.mxu0
  %v2249 = vadd.f32 0.0, %v2248
  %v2250 = vpop.f32.mrf.mxu0
  %v2251 = vadd.f32 0.0, %v2250
  %2252 = vdwg.mxu0
  %2253 = vmatprep.subr.mxu0 %v768
  %2254 = vmatpush1.msra.mxu0 %v767
  %2255 = vmatprep.subr.mxu0 %v762
  %2256 = vmatpush1.msra.mxu0 %v761
  %2257 = vmatprep.subr.mxu0 %v756
  %2258 = vmatpush1.msra.mxu0 %v755
  %2259 = vmatprep.subr.mxu0 %v750
  %2260 = vmatpush1.msra.mxu0 %v749
  %2261 = vmatprep.subr.mxu0 %v744
  %2262 = vmatpush1.msra.mxu0 %v743
  %2263 = vmatprep.subr.mxu0 %v738
  %2264 = vmatpush1.msra.mxu0 %v737
  %2265 = vmatprep.subr.mxu0 %v732
  %2266 = vmatpush1.msra.mxu0 %v731
  %2267 = vmatprep.subr.mxu0 %v726
  %2268 = vmatpush1.msra.mxu0 %v725
  %2269 = vmatprep.subr.mxu0 %v720
  %2270 = vmatpush1.msra.mxu0 %v719
  %2271 = vmatprep.subr.mxu0 %v714
  %2272 = vmatpush1.msra.mxu0 %v713
  %2273 = vmatprep.subr.mxu0 %v708
  %2274 = vmatpush1.msra.mxu0 %v707
  %2275 = vmatprep.subr.mxu0 %v702
  %2276 = vmatpush1.msra.mxu0 %v701
  %2277 = vmatprep.subr.mxu0 %v696
  %2278 = vmatpush1.msra.mxu0 %v695
  %2279 = vmatprep.subr.mxu0 %v690
  %2280 = vmatpush1.msra.mxu0 %v689
  %2281 = vmatprep.subr.mxu0 %v684
  %2282 = vmatpush1.msra.mxu0 %v683
  %2283 = vmatprep.subr.mxu0 %v678
  %2284 = vmatpush1.msra.mxu0 %v677
  %2285 = vmatprep.subr.mxu0 %v864
  %2286 = vmatpush2.msra.mxu0 %v863
  %2287 = vmatprep.subr.mxu0 %v858
  %2288 = vmatpush2.msra.mxu0 %v857
  %2289 = vmatprep.subr.mxu0 %v852
  %2290 = vmatpush2.msra.mxu0 %v851
  %2291 = vmatprep.subr.mxu0 %v846
  %2292 = vmatpush2.msra.mxu0 %v845
  %2293 = vmatprep.subr.mxu0 %v840
  %2294 = vmatpush2.msra.mxu0 %v839
  %2295 = vmatprep.subr.mxu0 %v834
  %2296 = vmatpush2.msra.mxu0 %v833
  %2297 = vmatprep.subr.mxu0 %v828
  %2298 = vmatpush2.msra.mxu0 %v827
  %2299 = vmatprep.subr.mxu0 %v822
  %2300 = vmatpush2.msra.mxu0 %v821
  %2301 = vmatprep.subr.mxu0 %v816
  %2302 = vmatpush2.msra.mxu0 %v815
  %2303 = vmatprep.subr.mxu0 %v810
  %2304 = vmatpush2.msra.mxu0 %v809
  %2305 = vmatprep.subr.mxu0 %v804
  %2306 = vmatpush2.msra.mxu0 %v803
  %2307 = vmatprep.subr.mxu0 %v798
  %2308 = vmatpush2.msra.mxu0 %v797
  %2309 = vmatprep.subr.mxu0 %v792
  %2310 = vmatpush2.msra.mxu0 %v791
  %2311 = vmatprep.subr.mxu0 %v786
  %2312 = vmatpush2.msra.mxu0 %v785
  %2313 = vmatprep.subr.mxu0 %v780
  %2314 = vmatpush2.msra.mxu0 %v779
  %2315 = vmatprep.subr.mxu0 %v774
  %2316 = vmatpush2.msra.mxu0 %v773
  %2317 = vmatprep.mubr.f32.mxu0 %v2175
  %2318 = vmatmul.mubr.f32.gmra.mxu0 %v2153
  %v2319 = vpop.f32.mrf.mxu0
  %v2320 = vadd.f32 0.0, %v2319
  %v2321 = vpop.f32.mrf.mxu0
  %v2322 = vadd.f32 0.0, %v2321
  %2323 = vdwg.mxu0
  %2324 = vmatprep.subr.mxu0 %v770
  %2325 = vmatpush1.msra.mxu0 %v769
  %2326 = vmatprep.subr.mxu0 %v764
  %2327 = vmatpush1.msra.mxu0 %v763
  %2328 = vmatprep.subr.mxu0 %v758
  %2329 = vmatpush1.msra.mxu0 %v757
  %2330 = vmatprep.subr.mxu0 %v752
  %2331 = vmatpush1.msra.mxu0 %v751
  %2332 = vmatprep.subr.mxu0 %v746
  %2333 = vmatpush1.msra.mxu0 %v745
  %2334 = vmatprep.subr.mxu0 %v740
  %2335 = vmatpush1.msra.mxu0 %v739
  %2336 = vmatprep.subr.mxu0 %v734
  %2337 = vmatpush1.msra.mxu0 %v733
  %2338 = vmatprep.subr.mxu0 %v728
  %2339 = vmatpush1.msra.mxu0 %v727
  %2340 = vmatprep.subr.mxu0 %v722
  %2341 = vmatpush1.msra.mxu0 %v721
  %2342 = vmatprep.subr.mxu0 %v716
  %2343 = vmatpush1.msra.mxu0 %v715
  %2344 = vmatprep.subr.mxu0 %v710
  %2345 = vmatpush1.msra.mxu0 %v709
  %2346 = vmatprep.subr.mxu0 %v704
  %2347 = vmatpush1.msra.mxu0 %v703
  %2348 = vmatprep.subr.mxu0 %v698
  %2349 = vmatpush1.msra.mxu0 %v697
  %2350 = vmatprep.subr.mxu0 %v692
  %2351 = vmatpush1.msra.mxu0 %v691
  %2352 = vmatprep.subr.mxu0 %v686
  %2353 = vmatpush1.msra.mxu0 %v685
  %2354 = vmatprep.subr.mxu0 %v680
  %2355 = vmatpush1.msra.mxu0 %v679
  %2356 = vmatprep.subr.mxu0 %v866
  %2357 = vmatpush2.msra.mxu0 %v865
  %2358 = vmatprep.subr.mxu0 %v860
  %2359 = vmatpush2.msra.mxu0 %v859
  %2360 = vmatprep.subr.mxu0 %v854
  %2361 = vmatpush2.msra.mxu0 %v853
  %2362 = vmatprep.subr.mxu0 %v848
  %2363 = vmatpush2.msra.mxu0 %v847
  %2364 = vmatprep.subr.mxu0 %v842
  %2365 = vmatpush2.msra.mxu0 %v841
  %2366 = vmatprep.subr.mxu0 %v836
  %2367 = vmatpush2.msra.mxu0 %v835
  %2368 = vmatprep.subr.mxu0 %v830
  %2369 = vmatpush2.msra.mxu0 %v829
  %2370 = vmatprep.subr.mxu0 %v824
  %2371 = vmatpush2.msra.mxu0 %v823
  %2372 = vmatprep.subr.mxu0 %v818
  %2373 = vmatpush2.msra.mxu0 %v817
  %2374 = vmatprep.subr.mxu0 %v812
  %2375 = vmatpush2.msra.mxu0 %v811
  %2376 = vmatprep.subr.mxu0 %v806
  %2377 = vmatpush2.msra.mxu0 %v805
  %2378 = vmatprep.subr.mxu0 %v800
  %2379 = vmatpush2.msra.mxu0 %v799
  %2380 = vmatprep.subr.mxu0 %v794
  %2381 = vmatpush2.msra.mxu0 %v793
  %2382 = vmatprep.subr.mxu0 %v788
  %2383 = vmatpush2.msra.mxu0 %v787
  %2384 = vmatprep.subr.mxu0 %v782
  %2385 = vmatpush2.msra.mxu0 %v781
  %2386 = vmatprep.subr.mxu0 %v776
  %2387 = vmatpush2.msra.mxu0 %v775
  %2388 = vmatprep.mubr.f32.mxu0 %v2175
  %2389 = vmatmul.mubr.f32.gmra.mxu0 %v2153
  %v2390 = vpop.f32.mrf.mxu0
  %v2391 = vadd.f32 0.0, %v2390
  %v2392 = vpop.f32.mrf.mxu0
  %v2393 = vadd.f32 0.0, %v2392
  %2394 = vdwg.mxu0
  %v2395 = vadd.f32 %v2176, %v2249
  %v2396 = vadd.f32 %v2177, %v2251
  %v2397 = vxor.u32 %v2395, 2147483648
  %v2398 = vxor.u32 %v2396, 2147483648
  %v2399 = vmul.f32 %v2397, 1.442695
  %v2400 = vpow.pop %v2399
  %v2401 = vmul.f32 %v2398, 1.442695
  %v2402 = vpow.pop %v2401
  %v2403 = vadd.f32 %v2400, 1.0
  %v2404 = vadd.f32 %v2402, 1.0
  %v2405 = vrcp.pop %v2403
  %v2406 = vmul.f32 1.0, %v2405
  %v2407 = vrcp.pop %v2404
  %v2408 = vmul.f32 1.0, %v2407
  %v2409 = vadd.f32 %v2320, %v667
  %v2410 = vmul.f32 %v2406, %v2409
  %v2411 = vadd.f32 %v2178, %v2410
  %v2412 = vtanh.pop %v2411
  %v2413 = vsub.f32 1.0, %v2408
  %v2414 = vmul.f32 %v2413, %v2412
  %v2415 = vmul.f32 %v2408, %v2153
  %v2416 = vadd.f32 %v2414, %v2415
  %v2417 = vadd.f32 %v2179, %v2322
  %v2418 = vadd.f32 %v2180, %v2391
  %v2419 = vxor.u32 %v2417, 2147483648
  %v2420 = vxor.u32 %v2418, 2147483648
  %v2421 = vmul.f32 %v2419, 1.442695
  %v2422 = vpow.pop %v2421
  %v2423 = vmul.f32 %v2420, 1.442695
  %v2424 = vpow.pop %v2423
  %v2425 = vadd.f32 %v2422, 1.0
  %v2426 = vadd.f32 %v2424, 1.0
  %v2427 = vrcp.pop %v2425
  %v2428 = vmul.f32 1.0, %v2427
  %v2429 = vrcp.pop %v2426
  %v2430 = vmul.f32 1.0, %v2429
  %v2431 = vadd.f32 %v2393, %v668
  %v2432 = vmul.f32 %v2428, %v2431
  %v2433 = vadd.f32 %v2181, %v2432
  %v2434 = vtanh.pop %v2433
  %v2435 = vsub.f32 1.0, %v2430
  %v2436 = vmul.f32 %v2435, %v2434
  %v2437 = vmul.f32 %v2430, %v2175
  %v2438 = vadd.f32 %v2436, %v2437
  %v2439 = vld [vmem:[#allocation2 + $0x90] sm:$0xff]
  %v2440 = vld [vmem:[#allocation2 + $0x98] sm:$0xff]
  %v2441 = vld [vmem:[#allocation2 + $0xa0] sm:$0xff]
  %v2442 = vld [vmem:[#allocation3 + $0x18] sm:$0xff]
  %v2443 = vld [vmem:[#allocation3 + $0x20] sm:$0xff]
  %v2444 = vld [vmem:[#allocation3 + $0x28] sm:$0xff]
  %2445 = vmatprep.subr.mxu0 %v766
  %2446 = vmatpush1.msra.mxu0 %v765
  %2447 = vmatprep.subr.mxu0 %v760
  %2448 = vmatpush1.msra.mxu0 %v759
  %2449 = vmatprep.subr.mxu0 %v754
  %2450 = vmatpush1.msra.mxu0 %v753
  %2451 = vmatprep.subr.mxu0 %v748
  %2452 = vmatpush1.msra.mxu0 %v747
  %2453 = vmatprep.subr.mxu0 %v742
  %2454 = vmatpush1.msra.mxu0 %v741
  %2455 = vmatprep.subr.mxu0 %v736
  %2456 = vmatpush1.msra.mxu0 %v735
  %2457 = vmatprep.subr.mxu0 %v730
  %2458 = vmatpush1.msra.mxu0 %v729
  %2459 = vmatprep.subr.mxu0 %v724
  %2460 = vmatpush1.msra.mxu0 %v723
  %2461 = vmatprep.subr.mxu0 %v718
  %2462 = vmatpush1.msra.mxu0 %v717
  %2463 = vmatprep.subr.mxu0 %v712
  %2464 = vmatpush1.msra.mxu0 %v711
  %2465 = vmatprep.subr.mxu0 %v706
  %2466 = vmatpush1.msra.mxu0 %v705
  %2467 = vmatprep.subr.mxu0 %v700
  %2468 = vmatpush1.msra.mxu0 %v699
  %2469 = vmatprep.subr.mxu0 %v694
  %2470 = vmatpush1.msra.mxu0 %v693
  %2471 = vmatprep.subr.mxu0 %v688
  %2472 = vmatpush1.msra.mxu0 %v687
  %2473 = vmatprep.subr.mxu0 %v682
  %2474 = vmatpush1.msra.mxu0 %v681
  %2475 = vmatprep.subr.mxu0 %v676
  %2476 = vmatpush1.msra.mxu0 %v675
  %2477 = vmatprep.subr.mxu0 %v862
  %2478 = vmatpush2.msra.mxu0 %v861
  %2479 = vmatprep.subr.mxu0 %v856
  %2480 = vmatpush2.msra.mxu0 %v855
  %2481 = vmatprep.subr.mxu0 %v850
  %2482 = vmatpush2.msra.mxu0 %v849
  %2483 = vmatprep.subr.mxu0 %v844
  %2484 = vmatpush2.msra.mxu0 %v843
  %2485 = vmatprep.subr.mxu0 %v838
  %2486 = vmatpush2.msra.mxu0 %v837
  %2487 = vmatprep.subr.mxu0 %v832
  %2488 = vmatpush2.msra.mxu0 %v831
  %2489 = vmatprep.subr.mxu0 %v826
  %2490 = vmatpush2.msra.mxu0 %v825
  %2491 = vmatprep.subr.mxu0 %v820
  %2492 = vmatpush2.msra.mxu0 %v819
  %2493 = vmatprep.subr.mxu0 %v814
  %2494 = vmatpush2.msra.mxu0 %v813
  %2495 = vmatprep.subr.mxu0 %v808
  %2496 = vmatpush2.msra.mxu0 %v807
  %2497 = vmatprep.subr.mxu0 %v802
  %2498 = vmatpush2.msra.mxu0 %v801
  %2499 = vmatprep.subr.mxu0 %v796
  %2500 = vmatpush2.msra.mxu0 %v795
  %2501 = vmatprep.subr.mxu0 %v790
  %2502 = vmatpush2.msra.mxu0 %v789
  %2503 = vmatprep.subr.mxu0 %v784
  %2504 = vmatpush2.msra.mxu0 %v783
  %2505 = vmatprep.subr.mxu0 %v778
  %2506 = vmatpush2.msra.mxu0 %v777
  %2507 = vmatprep.subr.mxu0 %v772
  %2508 = vmatpush2.msra.mxu0 %v771
  %2509 = vmatprep.mubr.f32.mxu0 %v2438
  %2510 = vmatmul.mubr.f32.gmra.mxu0 %v2416
  %v2511 = vpop.f32.mrf.mxu0
  %v2512 = vadd.f32 0.0, %v2511
  %v2513 = vpop.f32.mrf.mxu0
  %v2514 = vadd.f32 0.0, %v2513
  %2515 = vdwg.mxu0
  %2516 = vmatprep.subr.mxu0 %v768
  %2517 = vmatpush1.msra.mxu0 %v767
  %2518 = vmatprep.subr.mxu0 %v762
  %2519 = vmatpush1.msra.mxu0 %v761
  %2520 = vmatprep.subr.mxu0 %v756
  %2521 = vmatpush1.msra.mxu0 %v755
  %2522 = vmatprep.subr.mxu0 %v750
  %2523 = vmatpush1.msra.mxu0 %v749
  %2524 = vmatprep.subr.mxu0 %v744
  %2525 = vmatpush1.msra.mxu0 %v743
  %2526 = vmatprep.subr.mxu0 %v738
  %2527 = vmatpush1.msra.mxu0 %v737
  %2528 = vmatprep.subr.mxu0 %v732
  %2529 = vmatpush1.msra.mxu0 %v731
  %2530 = vmatprep.subr.mxu0 %v726
  %2531 = vmatpush1.msra.mxu0 %v725
  %2532 = vmatprep.subr.mxu0 %v720
  %2533 = vmatpush1.msra.mxu0 %v719
  %2534 = vmatprep.subr.mxu0 %v714
  %2535 = vmatpush1.msra.mxu0 %v713
  %2536 = vmatprep.subr.mxu0 %v708
  %2537 = vmatpush1.msra.mxu0 %v707
  %2538 = vmatprep.subr.mxu0 %v702
  %2539 = vmatpush1.msra.mxu0 %v701
  %2540 = vmatprep.subr.mxu0 %v696
  %2541 = vmatpush1.msra.mxu0 %v695
  %2542 = vmatprep.subr.mxu0 %v690
  %2543 = vmatpush1.msra.mxu0 %v689
  %2544 = vmatprep.subr.mxu0 %v684
  %2545 = vmatpush1.msra.mxu0 %v683
  %2546 = vmatprep.subr.mxu0 %v678
  %2547 = vmatpush1.msra.mxu0 %v677
  %2548 = vmatprep.subr.mxu0 %v864
  %2549 = vmatpush2.msra.mxu0 %v863
  %2550 = vmatprep.subr.mxu0 %v858
  %2551 = vmatpush2.msra.mxu0 %v857
  %2552 = vmatprep.subr.mxu0 %v852
  %2553 = vmatpush2.msra.mxu0 %v851
  %2554 = vmatprep.subr.mxu0 %v846
  %2555 = vmatpush2.msra.mxu0 %v845
  %2556 = vmatprep.subr.mxu0 %v840
  %2557 = vmatpush2.msra.mxu0 %v839
  %2558 = vmatprep.subr.mxu0 %v834
  %2559 = vmatpush2.msra.mxu0 %v833
  %2560 = vmatprep.subr.mxu0 %v828
  %2561 = vmatpush2.msra.mxu0 %v827
  %2562 = vmatprep.subr.mxu0 %v822
  %2563 = vmatpush2.msra.mxu0 %v821
  %2564 = vmatprep.subr.mxu0 %v816
  %2565 = vmatpush2.msra.mxu0 %v815
  %2566 = vmatprep.subr.mxu0 %v810
  %2567 = vmatpush2.msra.mxu0 %v809
  %2568 = vmatprep.subr.mxu0 %v804
  %2569 = vmatpush2.msra.mxu0 %v803
  %2570 = vmatprep.subr.mxu0 %v798
  %2571 = vmatpush2.msra.mxu0 %v797
  %2572 = vmatprep.subr.mxu0 %v792
  %2573 = vmatpush2.msra.mxu0 %v791
  %2574 = vmatprep.subr.mxu0 %v786
  %2575 = vmatpush2.msra.mxu0 %v785
  %2576 = vmatprep.subr.mxu0 %v780
  %2577 = vmatpush2.msra.mxu0 %v779
  %2578 = vmatprep.subr.mxu0 %v774
  %2579 = vmatpush2.msra.mxu0 %v773
  %2580 = vmatprep.mubr.f32.mxu0 %v2438
  %2581 = vmatmul.mubr.f32.gmra.mxu0 %v2416
  %v2582 = vpop.f32.mrf.mxu0
  %v2583 = vadd.f32 0.0, %v2582
  %v2584 = vpop.f32.mrf.mxu0
  %v2585 = vadd.f32 0.0, %v2584
  %2586 = vdwg.mxu0
  %2587 = vmatprep.subr.mxu0 %v770
  %2588 = vmatpush1.msra.mxu0 %v769
  %2589 = vmatprep.subr.mxu0 %v764
  %2590 = vmatpush1.msra.mxu0 %v763
  %2591 = vmatprep.subr.mxu0 %v758
  %2592 = vmatpush1.msra.mxu0 %v757
  %2593 = vmatprep.subr.mxu0 %v752
  %2594 = vmatpush1.msra.mxu0 %v751
  %2595 = vmatprep.subr.mxu0 %v746
  %2596 = vmatpush1.msra.mxu0 %v745
  %2597 = vmatprep.subr.mxu0 %v740
  %2598 = vmatpush1.msra.mxu0 %v739
  %2599 = vmatprep.subr.mxu0 %v734
  %2600 = vmatpush1.msra.mxu0 %v733
  %2601 = vmatprep.subr.mxu0 %v728
  %2602 = vmatpush1.msra.mxu0 %v727
  %2603 = vmatprep.subr.mxu0 %v722
  %2604 = vmatpush1.msra.mxu0 %v721
  %2605 = vmatprep.subr.mxu0 %v716
  %2606 = vmatpush1.msra.mxu0 %v715
  %2607 = vmatprep.subr.mxu0 %v710
  %2608 = vmatpush1.msra.mxu0 %v709
  %2609 = vmatprep.subr.mxu0 %v704
  %2610 = vmatpush1.msra.mxu0 %v703
  %2611 = vmatprep.subr.mxu0 %v698
  %2612 = vmatpush1.msra.mxu0 %v697
  %2613 = vmatprep.subr.mxu0 %v692
  %2614 = vmatpush1.msra.mxu0 %v691
  %2615 = vmatprep.subr.mxu0 %v686
  %2616 = vmatpush1.msra.mxu0 %v685
  %2617 = vmatprep.subr.mxu0 %v680
  %2618 = vmatpush1.msra.mxu0 %v679
  %2619 = vmatprep.subr.mxu0 %v866
  %2620 = vmatpush2.msra.mxu0 %v865
  %2621 = vmatprep.subr.mxu0 %v860
  %2622 = vmatpush2.msra.mxu0 %v859
  %2623 = vmatprep.subr.mxu0 %v854
  %2624 = vmatpush2.msra.mxu0 %v853
  %2625 = vmatprep.subr.mxu0 %v848
  %2626 = vmatpush2.msra.mxu0 %v847
  %2627 = vmatprep.subr.mxu0 %v842
  %2628 = vmatpush2.msra.mxu0 %v841
  %2629 = vmatprep.subr.mxu0 %v836
  %2630 = vmatpush2.msra.mxu0 %v835
  %2631 = vmatprep.subr.mxu0 %v830
  %2632 = vmatpush2.msra.mxu0 %v829
  %2633 = vmatprep.subr.mxu0 %v824
  %2634 = vmatpush2.msra.mxu0 %v823
  %2635 = vmatprep.subr.mxu0 %v818
  %2636 = vmatpush2.msra.mxu0 %v817
  %2637 = vmatprep.subr.mxu0 %v812
  %2638 = vmatpush2.msra.mxu0 %v811
  %2639 = vmatprep.subr.mxu0 %v806
  %2640 = vmatpush2.msra.mxu0 %v805
  %2641 = vmatprep.subr.mxu0 %v800
  %2642 = vmatpush2.msra.mxu0 %v799
  %2643 = vmatprep.subr.mxu0 %v794
  %2644 = vmatpush2.msra.mxu0 %v793
  %2645 = vmatprep.subr.mxu0 %v788
  %2646 = vmatpush2.msra.mxu0 %v787
  %2647 = vmatprep.subr.mxu0 %v782
  %2648 = vmatpush2.msra.mxu0 %v781
  %2649 = vmatprep.subr.mxu0 %v776
  %2650 = vmatpush2.msra.mxu0 %v775
  %2651 = vmatprep.mubr.f32.mxu0 %v2438
  %2652 = vmatmul.mubr.f32.gmra.mxu0 %v2416
  %v2653 = vpop.f32.mrf.mxu0
  %v2654 = vadd.f32 0.0, %v2653
  %v2655 = vpop.f32.mrf.mxu0
  %v2656 = vadd.f32 0.0, %v2655
  %2657 = vdwg.mxu0
  %v2658 = vadd.f32 %v2439, %v2512
  %v2659 = vadd.f32 %v2440, %v2514
  %v2660 = vxor.u32 %v2658, 2147483648
  %v2661 = vxor.u32 %v2659, 2147483648
  %v2662 = vmul.f32 %v2660, 1.442695
  %v2663 = vpow.pop %v2662
  %v2664 = vmul.f32 %v2661, 1.442695
  %v2665 = vpow.pop %v2664
  %v2666 = vadd.f32 %v2663, 1.0
  %v2667 = vadd.f32 %v2665, 1.0
  %v2668 = vrcp.pop %v2666
  %v2669 = vmul.f32 1.0, %v2668
  %v2670 = vrcp.pop %v2667
  %v2671 = vmul.f32 1.0, %v2670
  %v2672 = vadd.f32 %v2583, %v667
  %v2673 = vmul.f32 %v2669, %v2672
  %v2674 = vadd.f32 %v2441, %v2673
  %v2675 = vtanh.pop %v2674
  %v2676 = vsub.f32 1.0, %v2671
  %v2677 = vmul.f32 %v2676, %v2675
  %v2678 = vmul.f32 %v2671, %v2416
  %v2679 = vadd.f32 %v2677, %v2678
  %v2680 = vadd.f32 %v2442, %v2585
  %v2681 = vadd.f32 %v2443, %v2654
  %v2682 = vxor.u32 %v2680, 2147483648
  %v2683 = vxor.u32 %v2681, 2147483648
  %v2684 = vmul.f32 %v2682, 1.442695
  %v2685 = vpow.pop %v2684
  %v2686 = vmul.f32 %v2683, 1.442695
  %v2687 = vpow.pop %v2686
  %v2688 = vadd.f32 %v2685, 1.0
  %v2689 = vadd.f32 %v2687, 1.0
  %v2690 = vrcp.pop %v2688
  %v2691 = vmul.f32 1.0, %v2690
  %v2692 = vrcp.pop %v2689
  %v2693 = vmul.f32 1.0, %v2692
  %v2694 = vadd.f32 %v2656, %v668
  %v2695 = vmul.f32 %v2691, %v2694
  %v2696 = vadd.f32 %v2444, %v2695
  %v2697 = vtanh.pop %v2696
  %v2698 = vsub.f32 1.0, %v2693
  %v2699 = vmul.f32 %v2698, %v2697
  %v2700 = vmul.f32 %v2693, %v2438
  %v2701 = vadd.f32 %v2699, %v2700
  %v2702 = vld [vmem:[#allocation2 + $0xa8] sm:$0xff]
  %v2703 = vld [vmem:[#allocation2 + $0xb0] sm:$0xff]
  %v2704 = vld [vmem:[#allocation2 + $0xb8] sm:$0xff]
  %v2705 = vld [vmem:[#allocation3] sm:$0xff]
  %v2706 = vld [vmem:[#allocation3 + $0x8] sm:$0xff]
  %v2707 = vld [vmem:[#allocation3 + $0x10] sm:$0xff]
  %2708 = vmatprep.subr.mxu0 %v766
  %2709 = vmatpush1.msra.mxu0 %v765
  %2710 = vmatprep.subr.mxu0 %v760
  %2711 = vmatpush1.msra.mxu0 %v759
  %2712 = vmatprep.subr.mxu0 %v754
  %2713 = vmatpush1.msra.mxu0 %v753
  %2714 = vmatprep.subr.mxu0 %v748
  %2715 = vmatpush1.msra.mxu0 %v747
  %2716 = vmatprep.subr.mxu0 %v742
  %2717 = vmatpush1.msra.mxu0 %v741
  %2718 = vmatprep.subr.mxu0 %v736
  %2719 = vmatpush1.msra.mxu0 %v735
  %2720 = vmatprep.subr.mxu0 %v730
  %2721 = vmatpush1.msra.mxu0 %v729
  %2722 = vmatprep.subr.mxu0 %v724
  %2723 = vmatpush1.msra.mxu0 %v723
  %2724 = vmatprep.subr.mxu0 %v718
  %2725 = vmatpush1.msra.mxu0 %v717
  %2726 = vmatprep.subr.mxu0 %v712
  %2727 = vmatpush1.msra.mxu0 %v711
  %2728 = vmatprep.subr.mxu0 %v706
  %2729 = vmatpush1.msra.mxu0 %v705
  %2730 = vmatprep.subr.mxu0 %v700
  %2731 = vmatpush1.msra.mxu0 %v699
  %2732 = vmatprep.subr.mxu0 %v694
  %2733 = vmatpush1.msra.mxu0 %v693
  %2734 = vmatprep.subr.mxu0 %v688
  %2735 = vmatpush1.msra.mxu0 %v687
  %2736 = vmatprep.subr.mxu0 %v682
  %2737 = vmatpush1.msra.mxu0 %v681
  %2738 = vmatprep.subr.mxu0 %v676
  %2739 = vmatpush1.msra.mxu0 %v675
  %2740 = vmatprep.subr.mxu0 %v862
  %2741 = vmatpush2.msra.mxu0 %v861
  %2742 = vmatprep.subr.mxu0 %v856
  %2743 = vmatpush2.msra.mxu0 %v855
  %2744 = vmatprep.subr.mxu0 %v850
  %2745 = vmatpush2.msra.mxu0 %v849
  %2746 = vmatprep.subr.mxu0 %v844
  %2747 = vmatpush2.msra.mxu0 %v843
  %2748 = vmatprep.subr.mxu0 %v838
  %2749 = vmatpush2.msra.mxu0 %v837
  %2750 = vmatprep.subr.mxu0 %v832
  %2751 = vmatpush2.msra.mxu0 %v831
  %2752 = vmatprep.subr.mxu0 %v826
  %2753 = vmatpush2.msra.mxu0 %v825
  %2754 = vmatprep.subr.mxu0 %v820
  %2755 = vmatpush2.msra.mxu0 %v819
  %2756 = vmatprep.subr.mxu0 %v814
  %2757 = vmatpush2.msra.mxu0 %v813
  %2758 = vmatprep.subr.mxu0 %v808
  %2759 = vmatpush2.msra.mxu0 %v807
  %2760 = vmatprep.subr.mxu0 %v802
  %2761 = vmatpush2.msra.mxu0 %v801
  %2762 = vmatprep.subr.mxu0 %v796
  %2763 = vmatpush2.msra.mxu0 %v795
  %2764 = vmatprep.subr.mxu0 %v790
  %2765 = vmatpush2.msra.mxu0 %v789
  %2766 = vmatprep.subr.mxu0 %v784
  %2767 = vmatpush2.msra.mxu0 %v783
  %2768 = vmatprep.subr.mxu0 %v778
  %2769 = vmatpush2.msra.mxu0 %v777
  %2770 = vmatprep.subr.mxu0 %v772
  %2771 = vmatpush2.msra.mxu0 %v771
  %2772 = vmatprep.mubr.f32.mxu0 %v2701
  %2773 = vmatmul.mubr.f32.gmra.mxu0 %v2679
  %v2774 = vpop.f32.mrf.mxu0
  %v2775 = vadd.f32 0.0, %v2774
  %v2776 = vpop.f32.mrf.mxu0
  %v2777 = vadd.f32 0.0, %v2776
  %2778 = vdwg.mxu0
  %2779 = vmatprep.subr.mxu0 %v768
  %2780 = vmatpush1.msra.mxu0 %v767
  %2781 = vmatprep.subr.mxu0 %v762
  %2782 = vmatpush1.msra.mxu0 %v761
  %2783 = vmatprep.subr.mxu0 %v756
  %2784 = vmatpush1.msra.mxu0 %v755
  %2785 = vmatprep.subr.mxu0 %v750
  %2786 = vmatpush1.msra.mxu0 %v749
  %2787 = vmatprep.subr.mxu0 %v744
  %2788 = vmatpush1.msra.mxu0 %v743
  %2789 = vmatprep.subr.mxu0 %v738
  %2790 = vmatpush1.msra.mxu0 %v737
  %2791 = vmatprep.subr.mxu0 %v732
  %2792 = vmatpush1.msra.mxu0 %v731
  %2793 = vmatprep.subr.mxu0 %v726
  %2794 = vmatpush1.msra.mxu0 %v725
  %2795 = vmatprep.subr.mxu0 %v720
  %2796 = vmatpush1.msra.mxu0 %v719
  %2797 = vmatprep.subr.mxu0 %v714
  %2798 = vmatpush1.msra.mxu0 %v713
  %2799 = vmatprep.subr.mxu0 %v708
  %2800 = vmatpush1.msra.mxu0 %v707
  %2801 = vmatprep.subr.mxu0 %v702
  %2802 = vmatpush1.msra.mxu0 %v701
  %2803 = vmatprep.subr.mxu0 %v696
  %2804 = vmatpush1.msra.mxu0 %v695
  %2805 = vmatprep.subr.mxu0 %v690
  %2806 = vmatpush1.msra.mxu0 %v689
  %2807 = vmatprep.subr.mxu0 %v684
  %2808 = vmatpush1.msra.mxu0 %v683
  %2809 = vmatprep.subr.mxu0 %v678
  %2810 = vmatpush1.msra.mxu0 %v677
  %2811 = vmatprep.subr.mxu0 %v864
  %2812 = vmatpush2.msra.mxu0 %v863
  %2813 = vmatprep.subr.mxu0 %v858
  %2814 = vmatpush2.msra.mxu0 %v857
  %2815 = vmatprep.subr.mxu0 %v852
  %2816 = vmatpush2.msra.mxu0 %v851
  %2817 = vmatprep.subr.mxu0 %v846
  %2818 = vmatpush2.msra.mxu0 %v845
  %2819 = vmatprep.subr.mxu0 %v840
  %2820 = vmatpush2.msra.mxu0 %v839
  %2821 = vmatprep.subr.mxu0 %v834
  %2822 = vmatpush2.msra.mxu0 %v833
  %2823 = vmatprep.subr.mxu0 %v828
  %2824 = vmatpush2.msra.mxu0 %v827
  %2825 = vmatprep.subr.mxu0 %v822
  %2826 = vmatpush2.msra.mxu0 %v821
  %2827 = vmatprep.subr.mxu0 %v816
  %2828 = vmatpush2.msra.mxu0 %v815
  %2829 = vmatprep.subr.mxu0 %v810
  %2830 = vmatpush2.msra.mxu0 %v809
  %2831 = vmatprep.subr.mxu0 %v804
  %2832 = vmatpush2.msra.mxu0 %v803
  %2833 = vmatprep.subr.mxu0 %v798
  %2834 = vmatpush2.msra.mxu0 %v797
  %2835 = vmatprep.subr.mxu0 %v792
  %2836 = vmatpush2.msra.mxu0 %v791
  %2837 = vmatprep.subr.mxu0 %v786
  %2838 = vmatpush2.msra.mxu0 %v785
  %2839 = vmatprep.subr.mxu0 %v780
  %2840 = vmatpush2.msra.mxu0 %v779
  %2841 = vmatprep.subr.mxu0 %v774
  %2842 = vmatpush2.msra.mxu0 %v773
  %2843 = vmatprep.mubr.f32.mxu0 %v2701
  %2844 = vmatmul.mubr.f32.gmra.mxu0 %v2679
  %v2845 = vpop.f32.mrf.mxu0
  %v2846 = vadd.f32 0.0, %v2845
  %v2847 = vpop.f32.mrf.mxu0
  %v2848 = vadd.f32 0.0, %v2847
  %2849 = vdwg.mxu0
  %2850 = vmatprep.subr.mxu0 %v770
  %2851 = vmatpush1.msra.mxu0 %v769
  %2852 = vmatprep.subr.mxu0 %v764
  %2853 = vmatpush1.msra.mxu0 %v763
  %2854 = vmatprep.subr.mxu0 %v758
  %2855 = vmatpush1.msra.mxu0 %v757
  %2856 = vmatprep.subr.mxu0 %v752
  %2857 = vmatpush1.msra.mxu0 %v751
  %2858 = vmatprep.subr.mxu0 %v746
  %2859 = vmatpush1.msra.mxu0 %v745
  %2860 = vmatprep.subr.mxu0 %v740
  %2861 = vmatpush1.msra.mxu0 %v739
  %2862 = vmatprep.subr.mxu0 %v734
  %2863 = vmatpush1.msra.mxu0 %v733
  %2864 = vmatprep.subr.mxu0 %v728
  %2865 = vmatpush1.msra.mxu0 %v727
  %2866 = vmatprep.subr.mxu0 %v722
  %2867 = vmatpush1.msra.mxu0 %v721
  %2868 = vmatprep.subr.mxu0 %v716
  %2869 = vmatpush1.msra.mxu0 %v715
  %2870 = vmatprep.subr.mxu0 %v710
  %2871 = vmatpush1.msra.mxu0 %v709
  %2872 = vmatprep.subr.mxu0 %v704
  %2873 = vmatpush1.msra.mxu0 %v703
  %2874 = vmatprep.subr.mxu0 %v698
  %2875 = vmatpush1.msra.mxu0 %v697
  %2876 = vmatprep.subr.mxu0 %v692
  %2877 = vmatpush1.msra.mxu0 %v691
  %2878 = vmatprep.subr.mxu0 %v686
  %2879 = vmatpush1.msra.mxu0 %v685
  %2880 = vmatprep.subr.mxu0 %v680
  %2881 = vmatpush1.msra.mxu0 %v679
  %2882 = vmatprep.subr.mxu0 %v866
  %2883 = vmatpush2.msra.mxu0 %v865
  %2884 = vmatprep.subr.mxu0 %v860
  %2885 = vmatpush2.msra.mxu0 %v859
  %2886 = vmatprep.subr.mxu0 %v854
  %2887 = vmatpush2.msra.mxu0 %v853
  %2888 = vmatprep.subr.mxu0 %v848
  %2889 = vmatpush2.msra.mxu0 %v847
  %2890 = vmatprep.subr.mxu0 %v842
  %2891 = vmatpush2.msra.mxu0 %v841
  %2892 = vmatprep.subr.mxu0 %v836
  %2893 = vmatpush2.msra.mxu0 %v835
  %2894 = vmatprep.subr.mxu0 %v830
  %2895 = vmatpush2.msra.mxu0 %v829
  %2896 = vmatprep.subr.mxu0 %v824
  %2897 = vmatpush2.msra.mxu0 %v823
  %2898 = vmatprep.subr.mxu0 %v818
  %2899 = vmatpush2.msra.mxu0 %v817
  %2900 = vmatprep.subr.mxu0 %v812
  %2901 = vmatpush2.msra.mxu0 %v811
  %2902 = vmatprep.subr.mxu0 %v806
  %2903 = vmatpush2.msra.mxu0 %v805
  %2904 = vmatprep.subr.mxu0 %v800
  %2905 = vmatpush2.msra.mxu0 %v799
  %2906 = vmatprep.subr.mxu0 %v794
  %2907 = vmatpush2.msra.mxu0 %v793
  %2908 = vmatprep.subr.mxu0 %v788
  %2909 = vmatpush2.msra.mxu0 %v787
  %2910 = vmatprep.subr.mxu0 %v782
  %2911 = vmatpush2.msra.mxu0 %v781
  %2912 = vmatprep.subr.mxu0 %v776
  %2913 = vmatpush2.msra.mxu0 %v775
  %2914 = vmatprep.mubr.f32.mxu0 %v2701
  %2915 = vmatmul.mubr.f32.gmra.mxu0 %v2679
  %v2916 = vpop.f32.mrf.mxu0
  %v2917 = vadd.f32 0.0, %v2916
  %v2918 = vpop.f32.mrf.mxu0
  %v2919 = vadd.f32 0.0, %v2918
  %2920 = vdwg.mxu0
  %v2921 = vadd.f32 %v2702, %v2775
  %v2922 = vadd.f32 %v2703, %v2777
  %v2923 = vxor.u32 %v2921, 2147483648
  %v2924 = vxor.u32 %v2922, 2147483648
  %v2925 = vmul.f32 %v2923, 1.442695
  %v2926 = vpow.pop %v2925
  %v2927 = vmul.f32 %v2924, 1.442695
  %v2928 = vpow.pop %v2927
  %v2929 = vadd.f32 %v2926, 1.0
  %v2930 = vadd.f32 %v2928, 1.0
  %v2931 = vrcp.pop %v2929
  %v2932 = vmul.f32 1.0, %v2931
  %v2933 = vrcp.pop %v2930
  %v2934 = vmul.f32 1.0, %v2933
  %v2935 = vadd.f32 %v2846, %v667
  %v2936 = vmul.f32 %v2932, %v2935
  %v2937 = vadd.f32 %v2704, %v2936
  %v2938 = vtanh.pop %v2937
  %v2939 = vsub.f32 1.0, %v2934
  %v2940 = vmul.f32 %v2939, %v2938
  %v2941 = vmul.f32 %v2934, %v2679
  %v2942 = vadd.f32 %v2940, %v2941
  %v2943 = vadd.f32 %v2705, %v2848
  %v2944 = vadd.f32 %v2706, %v2917
  %v2945 = vxor.u32 %v2943, 2147483648
  %v2946 = vxor.u32 %v2944, 2147483648
  %v2947 = vmul.f32 %v2945, 1.442695
  %v2948 = vpow.pop %v2947
  %v2949 = vmul.f32 %v2946, 1.442695
  %v2950 = vpow.pop %v2949
  %v2951 = vadd.f32 %v2948, 1.0
  %v2952 = vadd.f32 %v2950, 1.0
  %v2953 = vrcp.pop %v2951
  %v2954 = vmul.f32 1.0, %v2953
  %v2955 = vrcp.pop %v2952
  %v2956 = vmul.f32 1.0, %v2955
  %v2957 = vadd.f32 %v2919, %v668
  %v2958 = vmul.f32 %v2954, %v2957
  %v2959 = vadd.f32 %v2707, %v2958
  %v2960 = vtanh.pop %v2959
  %v2961 = vsub.f32 1.0, %v2956
  %v2962 = vmul.f32 %v2961, %v2960
  %v2963 = vmul.f32 %v2956, %v2701
  %v2964 = vadd.f32 %v2962, %v2963
  %v2965 = vld [vmem:[%s6] sm:$0xff]
  %v2966 = vld [vmem:[%s6 + $0x8] sm:$0xff]
  %v2967 = vld [vmem:[%s6 + $0x10] sm:$0xff]
  %v2968 = vld [vmem:[%s6 + $0x18] sm:$0xff]
  %v2969 = vld [vmem:[%s6 + $0x20] sm:$0xff]
  %v2970 = vld [vmem:[%s6 + $0x28] sm:$0xff]
  %v2971 = vld [vmem:[%s6 + $0x30] sm:$0xff]
  %v2972 = vld [vmem:[%s6 + $0x38] sm:$0xff]
  %v2973 = vld [vmem:[%s6 + $0x40] sm:$0xff]
  %v2974 = vld [vmem:[%s6 + $0x48] sm:$0xff]
  %v2975 = vld [vmem:[%s6 + $0x50] sm:$0xff]
  %v2976 = vld [vmem:[%s6 + $0x58] sm:$0xff]
  %v2977 = vld [vmem:[%s6 + $0x60] sm:$0xff]
  %v2978 = vld [vmem:[%s6 + $0x68] sm:$0xff]
  %v2979 = vld [vmem:[%s6 + $0x70] sm:$0xff]
  %v2980 = vld [vmem:[%s6 + $0x78] sm:$0xff]
  %v2981 = vld [vmem:[%s6 + $0x80] sm:$0xff]
  %v2982 = vld [vmem:[%s6 + $0x88] sm:$0xff]
  %v2983 = vld [vmem:[%s6 + $0x90] sm:$0xff]
  %v2984 = vld [vmem:[%s6 + $0x98] sm:$0xff]
  %v2985 = vld [vmem:[%s6 + $0xa0] sm:$0xff]
  %v2986 = vld [vmem:[%s6 + $0xa8] sm:$0xff]
  %v2987 = vld [vmem:[%s6 + $0xb0] sm:$0xff]
  %v2988 = vld [vmem:[%s6 + $0xb8] sm:$0xff]
  %v2989 = vld [vmem:[%s6 + $0xc0] sm:$0xff]
  %v2990 = vld [vmem:[%s6 + $0xc8] sm:$0xff]
  %v2991 = vld [vmem:[%s6 + $0xd0] sm:$0xff]
  %v2992 = vld [vmem:[%s6 + $0xd8] sm:$0xff]
  %v2993 = vld [vmem:[%s6 + $0xe0] sm:$0xff]
  %v2994 = vld [vmem:[%s6 + $0xe8] sm:$0xff]
  %v2995 = vld [vmem:[%s6 + $0xf0] sm:$0xff]
  %v2996 = vld [vmem:[%s6 + $0xf8] sm:$0xff]
  %v2997 = vld [vmem:[%s7] sm:$0xff]
  %2998 = vmatprep.subr.mxu0 0.0
  %2999 = vmatpush1.msra.mxu0 %v2980
  %3000 = vmatprep.subr.mxu0 0.0
  %3001 = vmatpush1.msra.mxu0 %v2979
  %3002 = vmatprep.subr.mxu0 0.0
  %3003 = vmatpush1.msra.mxu0 %v2978
  %3004 = vmatprep.subr.mxu0 0.0
  %3005 = vmatpush1.msra.mxu0 %v2977
  %3006 = vmatprep.subr.mxu0 0.0
  %3007 = vmatpush1.msra.mxu0 %v2976
  %3008 = vmatprep.subr.mxu0 0.0
  %3009 = vmatpush1.msra.mxu0 %v2975
  %3010 = vmatprep.subr.mxu0 0.0
  %3011 = vmatpush1.msra.mxu0 %v2974
  %3012 = vmatprep.subr.mxu0 0.0
  %3013 = vmatpush1.msra.mxu0 %v2973
  %3014 = vmatprep.subr.mxu0 0.0
  %3015 = vmatpush1.msra.mxu0 %v2972
  %3016 = vmatprep.subr.mxu0 0.0
  %3017 = vmatpush1.msra.mxu0 %v2971
  %3018 = vmatprep.subr.mxu0 0.0
  %3019 = vmatpush1.msra.mxu0 %v2970
  %3020 = vmatprep.subr.mxu0 0.0
  %3021 = vmatpush1.msra.mxu0 %v2969
  %3022 = vmatprep.subr.mxu0 0.0
  %3023 = vmatpush1.msra.mxu0 %v2968
  %3024 = vmatprep.subr.mxu0 0.0
  %3025 = vmatpush1.msra.mxu0 %v2967
  %3026 = vmatprep.subr.mxu0 0.0
  %3027 = vmatpush1.msra.mxu0 %v2966
  %3028 = vmatprep.subr.mxu0 0.0
  %3029 = vmatpush1.msra.mxu0 %v2965
  %3030 = vmatprep.subr.mxu0 0.0
  %3031 = vmatpush2.msra.mxu0 %v2996
  %3032 = vmatprep.subr.mxu0 0.0
  %3033 = vmatpush2.msra.mxu0 %v2995
  %3034 = vmatprep.subr.mxu0 0.0
  %3035 = vmatpush2.msra.mxu0 %v2994
  %3036 = vmatprep.subr.mxu0 0.0
  %3037 = vmatpush2.msra.mxu0 %v2993
  %3038 = vmatprep.subr.mxu0 0.0
  %3039 = vmatpush2.msra.mxu0 %v2992
  %3040 = vmatprep.subr.mxu0 0.0
  %3041 = vmatpush2.msra.mxu0 %v2991
  %3042 = vmatprep.subr.mxu0 0.0
  %3043 = vmatpush2.msra.mxu0 %v2990
  %3044 = vmatprep.subr.mxu0 0.0
  %3045 = vmatpush2.msra.mxu0 %v2989
  %3046 = vmatprep.subr.mxu0 0.0
  %3047 = vmatpush2.msra.mxu0 %v2988
  %3048 = vmatprep.subr.mxu0 0.0
  %3049 = vmatpush2.msra.mxu0 %v2987
  %3050 = vmatprep.subr.mxu0 0.0
  %3051 = vmatpush2.msra.mxu0 %v2986
  %3052 = vmatprep.subr.mxu0 0.0
  %3053 = vmatpush2.msra.mxu0 %v2985
  %3054 = vmatprep.subr.mxu0 0.0
  %3055 = vmatpush2.msra.mxu0 %v2984
  %3056 = vmatprep.subr.mxu0 0.0
  %3057 = vmatpush2.msra.mxu0 %v2983
  %3058 = vmatprep.subr.mxu0 0.0
  %3059 = vmatpush2.msra.mxu0 %v2982
  %3060 = vmatprep.subr.mxu0 0.0
  %3061 = vmatpush2.msra.mxu0 %v2981
  %3062 = vmatprep.mubr.f32.mxu0 %v2964
  %3063 = vmatmul.mubr.f32.gmra.mxu0 %v2942
  %v3064 = vpop.f32.mrf.mxu0
  %v3065 = vadd.f32 %v2997, %v3064
  %v3066 = vpop.f32.mrf.mxu0
  %3067 = vdwg.mxu0
  %3068 = vst [vmem:[%s8] sm:$0xff] %v3065
  // Predicated region
  $region34: #{baseline_rnn_forward.1} parent=0 // pred_check
    _
  $region35: #{baseline_rnn_forward.1} parent=0 // pred_check_branch
    %3070 = sbr.rel (0) target = $region37
  $region36: #{baseline_rnn_forward.1} parent=0 // pred_region
    _
  $region37: #{baseline_rnn_forward.1} parent=0 // pred_fallthru
    _
  // Predicated region
  $region38: #{baseline_rnn_forward.1} parent=0 // pred_check
    _
  $region39: #{baseline_rnn_forward.1} parent=0 // pred_check_branch
    %3072 = sbr.rel (0) target = $region41
  $region40: #{baseline_rnn_forward.1} parent=0 // pred_region
    _
  $region41: #{baseline_rnn_forward.1} parent=0 // pred_fallthru
    _

</llo_original>
